<compile_context>
chip_gen: v7x
topology: tpu7x:2x2x1
jax: 0.10.0
libtpu: 0.0.40
codegen_flags: <defaults>
</compile_context>

<pallas_src>
import math

import jax
import jax.numpy as jnp
from jax.experimental import pallas as pl
from jax.experimental.pallas import tpu as pltpu

KSZ = 3  # kernel_size=3, padding=1 ("same")


def conv_gru_pallas(h, cz, cr, cq, x_list, params):
    """Inputs/outputs are NCHW to match the PyTorch module."""
    B, Ch, H, W = h.shape
    x = jnp.concatenate(list(x_list), axis=1)
    Cx = x.shape[1]
    Cin = Ch + Cx
    Wp = W + 2                 # padded width (1 left + 1 right)
    M = H * Wp                 # rows of the junk-column-padded output
    R = (H + 3) * Wp           # rows of the flattened zero-padded conv input
    off_h = Wp + 1             # row offset of pixel (0, 0) inside the padded buffer

    to_nhwc = lambda a: jnp.transpose(a, (0, 2, 3, 1))

    def pad_flat(a):           # (B,H,W,C) -> (B,R,C): zero-pad H by (1,2), W by (1,1)
        return jnp.pad(a, ((0, 0), (1, 2), (1, 1), (0, 0))).reshape(B, R, a.shape[-1])

    def wpad_flat(a):          # (B,H,W,C) -> (B,M,C): zero-pad W by (0,2)
        return jnp.pad(a, ((0, 0), (0, 0), (0, 2), (0, 0))).reshape(B, M, a.shape[-1])

    # Activations.  hxp feeds only the MXU -> pre-cast to bf16 in the wrapper.
    h_n, x_n = to_nhwc(h), to_nhwc(x)
    hxp = pad_flat(jnp.concatenate([h_n, x_n], axis=-1)).astype(jnp.bfloat16)  # (B,R,Cin)
    hflat = wpad_flat(h_n)                                                     # (B,M,Ch) f32, zero junk cols
    czr = wpad_flat(jnp.concatenate(
        [to_nhwc(cz) + params["bz"], to_nhwc(cr) + params["br"]], axis=-1))    # (B,M,2*Ch)
    cqf = wpad_flat(to_nhwc(cq) + params["bq"])                                # (B,M,Ch)

    # Weights: PyTorch OIHW -> (dy, dx, Cin, Cout), then pack the 3 dx taps
    # along K (dx-major) so each dy is a single K=3*Cin matmul.
    def taps4(w):
        return jnp.transpose(w, (2, 3, 1, 0))                    # (3, 3, Cin, Cout)

    wz4, wr4, wq4 = taps4(params["wz"]), taps4(params["wr"]), taps4(params["wq"])
    # Pass-1 input is cat([h, x]); the q column block must only see x (its h
    # input is r*h, handled in pass 2), so its h-rows are zeroed.
    wq_x_only = jnp.concatenate(
        [jnp.zeros((KSZ, KSZ, Ch, Ch), wq4.dtype), wq4[:, :, Ch:, :]], axis=2)
    w1 = jnp.concatenate([wz4, wr4, wq_x_only], axis=-1)          # (3, 3, Cin, 3*Ch)
    w1 = w1.reshape(KSZ, KSZ * Cin, 3 * Ch).astype(jnp.bfloat16)  # per-dy, K-packed over dx
    w2 = wq4[:, :, :Ch, :].reshape(KSZ, KSZ * Ch, Ch).astype(jnp.bfloat16)     # (3, 3*Ch, Ch)

    halo_bot = R - off_h - M   # number of bottom halo rows (= 2*Wp - 1)

    def kernel(hxp_ref, hf_ref, czr_ref, cq_ref, w1_ref, w2_ref, o_ref, rhp_ref):
        # --- conv pass 1: per dy, lane-concat the 3 dx windows (im2col along K)
        # and do one K=3*Cin, N=3*Ch matmul with the fused [Wz|Wr|Wq_x] weight.
        acc = None
        for dy in range(KSZ):
            base = dy * Wp
            lhs = jnp.concatenate(
                [hxp_ref[pl.ds(base + dx, M), :] for dx in range(KSZ)], axis=-1)
            part = jnp.dot(lhs, w1_ref[dy], preferred_element_type=jnp.float32)
            acc = part if acc is None else acc + part

        zr = jax.nn.sigmoid(acc[:, :2 * Ch] + czr_ref[...])      # [z | r], f32
        z = zr[:, :Ch]
        r = zr[:, Ch:]
        # Fold the q-slice of acc into the pass-2 accumulator right away so the
        # (M, 3*Ch) f32 acc is dead before the pass-2 matmuls (vreg pressure).
        accq = acc[:, 2 * Ch:] + cq_ref[...]

        h_v = hf_ref[...]                        # f32; exactly zero on the 2 junk columns

        # Padded r*h buffer (bf16): zero only the halo rows; the interior M rows
        # are fully overwritten.  Junk columns stay zero because h_v is zero there.
        rhp_ref[pl.ds(0, off_h), :] = jnp.zeros((off_h, Ch), jnp.bfloat16)
        rhp_ref[pl.ds(off_h + M, halo_bot), :] = jnp.zeros((halo_bot, Ch), jnp.bfloat16)
        rhp_ref[pl.ds(off_h, M), :] = (r * h_v).astype(jnp.bfloat16)

        # --- conv pass 2: conv(r*h, Wq_h), same per-dy K packing (K=3*Ch, N=Ch).
        for dy in range(KSZ):
            base = dy * Wp
            lhs = jnp.concatenate(
                [rhp_ref[pl.ds(base + dx, M), :] for dx in range(KSZ)], axis=-1)
            accq = accq + jnp.dot(lhs, w2_ref[dy], preferred_element_type=jnp.float32)

        q = jnp.tanh(accq)
        o_ref[...] = (h_v + z * (q - h_v)).astype(o_ref.dtype)   # (1-z)*h + z*q

    out = pl.pallas_call(
        kernel,
        out_shape=jax.ShapeDtypeStruct((B, M, Ch), jnp.float32),
        grid_spec=pltpu.PrefetchScalarGridSpec(
            num_scalar_prefetch=0,
            grid=(B,),
            in_specs=[
                pl.BlockSpec((None, R, Cin), lambda b: (b, 0, 0)),            # padded cat([h,x]) bf16
                pl.BlockSpec((None, M, Ch), lambda b: (b, 0, 0)),             # h (gate math, f32)
                pl.BlockSpec((None, M, 2 * Ch), lambda b: (b, 0, 0)),         # cz|cr (+bias)
                pl.BlockSpec((None, M, Ch), lambda b: (b, 0, 0)),             # cq (+bias)
                pl.BlockSpec((KSZ, KSZ * Cin, 3 * Ch), lambda b: (0, 0, 0)),  # fused W1 (per-dy)
                pl.BlockSpec((KSZ, KSZ * Ch, Ch), lambda b: (0, 0, 0)),       # Wq_h (per-dy)
            ],
            out_specs=pl.BlockSpec((None, M, Ch), lambda b: (b, 0, 0)),
            scratch_shapes=[pltpu.VMEM((R, Ch), jnp.bfloat16)],               # padded r*h
        ),
        compiler_params=pltpu.CompilerParams(
            dimension_semantics=("parallel",)),
    )(hxp, hflat, czr, cqf, w1, w2)

    # Drop the 2 junk columns and restore NCHW.
    out = out.reshape(B, H, Wp, Ch)[:, :, :W, :]
    return jnp.transpose(out, (0, 3, 1, 2))


def conv_gru_ref(h, cz, cr, cq, x_list, params):
    """Pure-JAX f32 reference of the PyTorch forward (NCHW)."""
    x = jnp.concatenate(list(x_list), axis=1)
    hx = jnp.concatenate([h, x], axis=1)

    def conv(inp, w, b):
        y = jax.lax.conv_general_dilated(
            inp, w, (1, 1), "SAME",
            dimension_numbers=("NCHW", "OIHW", "NCHW"))
        return y + b[None, :, None, None]

    z = jax.nn.sigmoid(conv(hx, params["wz"], params["bz"]) + cz)
    r = jax.nn.sigmoid(conv(hx, params["wr"], params["br"]) + cr)
    q = jnp.tanh(conv(jnp.concatenate([r * h, x], axis=1),
                      params["wq"], params["bq"]) + cq)
    return (1.0 - z) * h + z * q


def make_params(key, hidden_dim, input_dim, ksz=KSZ):
    cin = hidden_dim + input_dim
    scale = 1.0 / math.sqrt(cin * ksz * ksz)
    ks = jax.random.split(key, 6)
    u = lambda k, shp: jax.random.uniform(k, shp, jnp.float32, -scale, scale)
    return {
        "wz": u(ks[0], (hidden_dim, cin, ksz, ksz)), "bz": u(ks[1], (hidden_dim,)),
        "wr": u(ks[2], (hidden_dim, cin, ksz, ksz)), "br": u(ks[3], (hidden_dim,)),
        "wq": u(ks[4], (hidden_dim, cin, ksz, ksz)), "bq": u(ks[5], (hidden_dim,)),
    }


if __name__ == "__main__":
    B, H, W = 2, 16, 16
    hidden_dim = 32
    x_channels = (8, 8)                 # x_list of two tensors; input_dim = 16
    input_dim = sum(x_channels)

    root = jax.random.PRNGKey(0)
    kp, kh, kz, kr, kq, kx1, kx2 = jax.random.split(root, 7)
    params = make_params(kp, hidden_dim, input_dim)

    h = jax.random.normal(kh, (B, hidden_dim, H, W), jnp.float32)
    cz = jax.random.normal(kz, (B, hidden_dim, H, W), jnp.float32)
    cr = jax.random.normal(kr, (B, hidden_dim, H, W), jnp.float32)
    cq = jax.random.normal(kq, (B, hidden_dim, H, W), jnp.float32)
    x1 = jax.random.normal(kx1, (B, x_channels[0], H, W), jnp.float32)
    x2 = jax.random.normal(kx2, (B, x_channels[1], H, W), jnp.float32)
    x_list = (x1, x2)

    out = conv_gru_pallas(h, cz, cr, cq, x_list, params)
    out = jax.block_until_ready(out)

    ref = jax.block_until_ready(conv_gru_ref(h, cz, cr, cq, x_list, params))
    max_err = float(jnp.max(jnp.abs(out - ref)))
    assert out.shape == (B, hidden_dim, H, W)
    # bf16 MXU operands with f32 accumulation: widened tolerance vs f32 reference.
    assert max_err < 5e-2, f"mismatch vs reference: {max_err}"

    print("KERNEL_OK")
</pallas_src>

<mosaic_0001>
module attributes {stable_mosaic.version = 11 : i64} {
  func.func @kernel(%arg0: i32, %arg1: memref<1x342x48xbf16, #tpu.memory_space<vmem>>, %arg2: memref<1x288x32xf32, #tpu.memory_space<vmem>>, %arg3: memref<1x288x64xf32, #tpu.memory_space<vmem>>, %arg4: memref<1x288x32xf32, #tpu.memory_space<vmem>>, %arg5: memref<3x144x96xbf16, #tpu.memory_space<vmem>>, %arg6: memref<3x96x32xbf16, #tpu.memory_space<vmem>>, %arg7: memref<1x288x32xf32, #tpu.memory_space<vmem>>, %arg8: memref<342x32xbf16, #tpu.memory_space<vmem>>) attributes {dimension_semantics = [#tpu.dimension_semantics<parallel>], iteration_bounds = array<i64: 2>, scalar_prefetch = 0 : i64, scratch_operands = 1 : i64, tpu.core_type = #tpu.core_type<tc>, window_params = [{transform_indices = @transform_0, window_bounds = array<i64: 1, 342, 48>}, {transform_indices = @transform_1, window_bounds = array<i64: 1, 288, 32>}, {transform_indices = @transform_2, window_bounds = array<i64: 1, 288, 64>}, {transform_indices = @transform_3, window_bounds = array<i64: 1, 288, 32>}, {pipeline_mode = #tpu.pipeline_mode<synchronous>, transform_indices = @transform_4, window_bounds = array<i64: 3, 144, 96>}, {pipeline_mode = #tpu.pipeline_mode<synchronous>, transform_indices = @transform_5, window_bounds = array<i64: 3, 96, 32>}, {transform_indices = @transform_6, window_bounds = array<i64: 1, 288, 32>}]} {
    %c0 = arith.constant 0 : index
    %c0_0 = arith.constant 0 : index
    %c0_1 = arith.constant 0 : index
    %0 = vector.load %arg1[%c0, %c0_0, %c0_1] : memref<1x342x48xbf16, #tpu.memory_space<vmem>>, vector<1x288x48xbf16>
    %1 = vector.shape_cast %0 : vector<1x288x48xbf16> to vector<288x48xbf16>
    %c0_2 = arith.constant 0 : index
    %c1 = arith.constant 1 : index
    %c0_3 = arith.constant 0 : index
    %2 = vector.load %arg1[%c0_2, %c1, %c0_3] : memref<1x342x48xbf16, #tpu.memory_space<vmem>>, vector<1x288x48xbf16>
    %3 = vector.shape_cast %2 : vector<1x288x48xbf16> to vector<288x48xbf16>
    %c0_4 = arith.constant 0 : index
    %c2 = arith.constant 2 : index
    %c0_5 = arith.constant 0 : index
    %4 = vector.load %arg1[%c0_4, %c2, %c0_5] : memref<1x342x48xbf16, #tpu.memory_space<vmem>>, vector<1x288x48xbf16>
    %5 = vector.shape_cast %4 : vector<1x288x48xbf16> to vector<288x48xbf16>
    %6 = tpu.concatenate %1, %3, %5 in 1 : vector<288x48xbf16>, vector<288x48xbf16>, vector<288x48xbf16> -> vector<288x144xbf16>
    %c0_6 = arith.constant 0 : index
    %c0_7 = arith.constant 0 : index
    %c0_8 = arith.constant 0 : index
    %7 = vector.load %arg5[%c0_6, %c0_7, %c0_8] : memref<3x144x96xbf16, #tpu.memory_space<vmem>>, vector<1x144x96xbf16>
    %8 = vector.shape_cast %7 : vector<1x144x96xbf16> to vector<144x96xbf16>
    %cst = arith.constant dense<0.000000e+00> : vector<288x96xf32>
    %9 = tpu.matmul %6, %8, %cst {dimension_numbers = #tpu.dot_dimension_numbers<[1], [0], [0], [1], [0, 0, 1, 1], [], []>} : vector<288x144xbf16>, vector<144x96xbf16>, vector<288x96xf32> -> vector<288x96xf32>
    %c0_9 = arith.constant 0 : index
    %c18 = arith.constant 18 : index
    %c0_10 = arith.constant 0 : index
    %10 = vector.load %arg1[%c0_9, %c18, %c0_10] : memref<1x342x48xbf16, #tpu.memory_space<vmem>>, vector<1x288x48xbf16>
    %11 = vector.shape_cast %10 : vector<1x288x48xbf16> to vector<288x48xbf16>
    %c0_11 = arith.constant 0 : index
    %c19 = arith.constant 19 : index
    %c0_12 = arith.constant 0 : index
    %12 = vector.load %arg1[%c0_11, %c19, %c0_12] : memref<1x342x48xbf16, #tpu.memory_space<vmem>>, vector<1x288x48xbf16>
    %13 = vector.shape_cast %12 : vector<1x288x48xbf16> to vector<288x48xbf16>
    %c0_13 = arith.constant 0 : index
    %c20 = arith.constant 20 : index
    %c0_14 = arith.constant 0 : index
    %14 = vector.load %arg1[%c0_13, %c20, %c0_14] : memref<1x342x48xbf16, #tpu.memory_space<vmem>>, vector<1x288x48xbf16>
    %15 = vector.shape_cast %14 : vector<1x288x48xbf16> to vector<288x48xbf16>
    %16 = tpu.concatenate %11, %13, %15 in 1 : vector<288x48xbf16>, vector<288x48xbf16>, vector<288x48xbf16> -> vector<288x144xbf16>
    %c1_15 = arith.constant 1 : index
    %c0_16 = arith.constant 0 : index
    %c0_17 = arith.constant 0 : index
    %17 = vector.load %arg5[%c1_15, %c0_16, %c0_17] : memref<3x144x96xbf16, #tpu.memory_space<vmem>>, vector<1x144x96xbf16>
    %18 = vector.shape_cast %17 : vector<1x144x96xbf16> to vector<144x96xbf16>
    %cst_18 = arith.constant dense<0.000000e+00> : vector<288x96xf32>
    %19 = tpu.matmul %16, %18, %cst_18 {dimension_numbers = #tpu.dot_dimension_numbers<[1], [0], [0], [1], [0, 0, 1, 1], [], []>} : vector<288x144xbf16>, vector<144x96xbf16>, vector<288x96xf32> -> vector<288x96xf32>
    %20 = arith.addf %9, %19 : vector<288x96xf32>
    %c0_19 = arith.constant 0 : index
    %c36 = arith.constant 36 : index
    %c0_20 = arith.constant 0 : index
    %21 = vector.load %arg1[%c0_19, %c36, %c0_20] : memref<1x342x48xbf16, #tpu.memory_space<vmem>>, vector<1x288x48xbf16>
    %22 = vector.shape_cast %21 : vector<1x288x48xbf16> to vector<288x48xbf16>
    %c0_21 = arith.constant 0 : index
    %c37 = arith.constant 37 : index
    %c0_22 = arith.constant 0 : index
    %23 = vector.load %arg1[%c0_21, %c37, %c0_22] : memref<1x342x48xbf16, #tpu.memory_space<vmem>>, vector<1x288x48xbf16>
    %24 = vector.shape_cast %23 : vector<1x288x48xbf16> to vector<288x48xbf16>
    %c0_23 = arith.constant 0 : index
    %c38 = arith.constant 38 : index
    %c0_24 = arith.constant 0 : index
    %25 = vector.load %arg1[%c0_23, %c38, %c0_24] : memref<1x342x48xbf16, #tpu.memory_space<vmem>>, vector<1x288x48xbf16>
    %26 = vector.shape_cast %25 : vector<1x288x48xbf16> to vector<288x48xbf16>
    %27 = tpu.concatenate %22, %24, %26 in 1 : vector<288x48xbf16>, vector<288x48xbf16>, vector<288x48xbf16> -> vector<288x144xbf16>
    %c2_25 = arith.constant 2 : index
    %c0_26 = arith.constant 0 : index
    %c0_27 = arith.constant 0 : index
    %28 = vector.load %arg5[%c2_25, %c0_26, %c0_27] : memref<3x144x96xbf16, #tpu.memory_space<vmem>>, vector<1x144x96xbf16>
    %29 = vector.shape_cast %28 : vector<1x144x96xbf16> to vector<144x96xbf16>
    %cst_28 = arith.constant dense<0.000000e+00> : vector<288x96xf32>
    %30 = tpu.matmul %27, %29, %cst_28 {dimension_numbers = #tpu.dot_dimension_numbers<[1], [0], [0], [1], [0, 0, 1, 1], [], []>} : vector<288x144xbf16>, vector<144x96xbf16>, vector<288x96xf32> -> vector<288x96xf32>
    %31 = arith.addf %20, %30 : vector<288x96xf32>
    %32 = vector.extract_strided_slice %31 {offsets = [0, 0], sizes = [288, 64], strides = [1, 1]} : vector<288x96xf32> to vector<288x64xf32>
    %c0_29 = arith.constant 0 : index
    %c0_30 = arith.constant 0 : index
    %c0_31 = arith.constant 0 : index
    %33 = vector.load %arg3[%c0_29, %c0_30, %c0_31] : memref<1x288x64xf32, #tpu.memory_space<vmem>>, vector<1x288x64xf32>
    %34 = vector.shape_cast %33 : vector<1x288x64xf32> to vector<288x64xf32>
    %35 = arith.addf %32, %34 : vector<288x64xf32>
    %36 = arith.negf %35 : vector<288x64xf32>
    %37 = math.exp %36 : vector<288x64xf32>
    %cst_32 = arith.constant 1.000000e+00 : f32
    %38 = vector.broadcast %cst_32 : f32 to vector<288x64xf32>
    %39 = arith.addf %38, %37 : vector<288x64xf32>
    %40 = arith.divf %38, %39 : vector<288x64xf32>
    %41 = vector.extract_strided_slice %40 {offsets = [0, 0], sizes = [288, 32], strides = [1, 1]} : vector<288x64xf32> to vector<288x32xf32>
    %42 = vector.extract_strided_slice %40 {offsets = [0, 32], sizes = [288, 32], strides = [1, 1]} : vector<288x64xf32> to vector<288x32xf32>
    %43 = vector.extract_strided_slice %31 {offsets = [0, 64], sizes = [288, 32], strides = [1, 1]} : vector<288x96xf32> to vector<288x32xf32>
    %c0_33 = arith.constant 0 : index
    %c0_34 = arith.constant 0 : index
    %c0_35 = arith.constant 0 : index
    %44 = vector.load %arg4[%c0_33, %c0_34, %c0_35] : memref<1x288x32xf32, #tpu.memory_space<vmem>>, vector<1x288x32xf32>
    %45 = vector.shape_cast %44 : vector<1x288x32xf32> to vector<288x32xf32>
    %46 = arith.addf %43, %45 : vector<288x32xf32>
    %c0_36 = arith.constant 0 : index
    %c0_37 = arith.constant 0 : index
    %c0_38 = arith.constant 0 : index
    %47 = vector.load %arg2[%c0_36, %c0_37, %c0_38] : memref<1x288x32xf32, #tpu.memory_space<vmem>>, vector<1x288x32xf32>
    %48 = vector.shape_cast %47 : vector<1x288x32xf32> to vector<288x32xf32>
    %cst_39 = arith.constant 0.000000e+00 : bf16
    %49 = vector.broadcast %cst_39 : bf16 to vector<19x32xbf16>
    %c0_40 = arith.constant 0 : index
    %c0_41 = arith.constant 0 : index
    %50 = vector.load %arg8[%c0_40, %c0_41] : memref<342x32xbf16, #tpu.memory_space<vmem>>, vector<19x32xbf16>
    tpu.vector_store %arg8[%c0_40, %c0_41], %49 {strides = array<i32>} : memref<342x32xbf16, #tpu.memory_space<vmem>>, vector<19x32xbf16>,
    %cst_42 = arith.constant 0.000000e+00 : bf16
    %51 = vector.broadcast %cst_42 : bf16 to vector<35x32xbf16>
    %c307 = arith.constant 307 : index
    %c0_43 = arith.constant 0 : index
    %52 = vector.load %arg8[%c307, %c0_43] : memref<342x32xbf16, #tpu.memory_space<vmem>>, vector<35x32xbf16>
    tpu.vector_store %arg8[%c307, %c0_43], %51 {strides = array<i32>} : memref<342x32xbf16, #tpu.memory_space<vmem>>, vector<35x32xbf16>,
    %53 = arith.mulf %42, %48 : vector<288x32xf32>
    %54 = arith.truncf %53 : vector<288x32xf32> to vector<288x32xbf16>
    %c19_44 = arith.constant 19 : index
    %c0_45 = arith.constant 0 : index
    %55 = vector.load %arg8[%c19_44, %c0_45] : memref<342x32xbf16, #tpu.memory_space<vmem>>, vector<288x32xbf16>
    tpu.vector_store %arg8[%c19_44, %c0_45], %54 {strides = array<i32>} : memref<342x32xbf16, #tpu.memory_space<vmem>>, vector<288x32xbf16>,
    %c0_46 = arith.constant 0 : index
    %c0_47 = arith.constant 0 : index
    %56 = vector.load %arg8[%c0_46, %c0_47] : memref<342x32xbf16, #tpu.memory_space<vmem>>, vector<288x32xbf16>
    %c1_48 = arith.constant 1 : index
    %c0_49 = arith.constant 0 : index
    %57 = vector.load %arg8[%c1_48, %c0_49] : memref<342x32xbf16, #tpu.memory_space<vmem>>, vector<288x32xbf16>
    %c2_50 = arith.constant 2 : index
    %c0_51 = arith.constant 0 : index
    %58 = vector.load %arg8[%c2_50, %c0_51] : memref<342x32xbf16, #tpu.memory_space<vmem>>, vector<288x32xbf16>
    %59 = tpu.concatenate %56, %57, %58 in 1 : vector<288x32xbf16>, vector<288x32xbf16>, vector<288x32xbf16> -> vector<288x96xbf16>
    %c0_52 = arith.constant 0 : index
    %c0_53 = arith.constant 0 : index
    %c0_54 = arith.constant 0 : index
    %60 = vector.load %arg6[%c0_52, %c0_53, %c0_54] : memref<3x96x32xbf16, #tpu.memory_space<vmem>>, vector<1x96x32xbf16>
    %61 = vector.shape_cast %60 : vector<1x96x32xbf16> to vector<96x32xbf16>
    %cst_55 = arith.constant dense<0.000000e+00> : vector<288x32xf32>
    %62 = tpu.matmul %59, %61, %cst_55 {dimension_numbers = #tpu.dot_dimension_numbers<[1], [0], [0], [1], [0, 0, 1, 1], [], []>} : vector<288x96xbf16>, vector<96x32xbf16>, vector<288x32xf32> -> vector<288x32xf32>
    %63 = arith.addf %46, %62 : vector<288x32xf32>
    %c18_56 = arith.constant 18 : index
    %c0_57 = arith.constant 0 : index
    %64 = vector.load %arg8[%c18_56, %c0_57] : memref<342x32xbf16, #tpu.memory_space<vmem>>, vector<288x32xbf16>
    %c19_58 = arith.constant 19 : index
    %c0_59 = arith.constant 0 : index
    %65 = vector.load %arg8[%c19_58, %c0_59] : memref<342x32xbf16, #tpu.memory_space<vmem>>, vector<288x32xbf16>
    %c20_60 = arith.constant 20 : index
    %c0_61 = arith.constant 0 : index
    %66 = vector.load %arg8[%c20_60, %c0_61] : memref<342x32xbf16, #tpu.memory_space<vmem>>, vector<288x32xbf16>
    %67 = tpu.concatenate %64, %65, %66 in 1 : vector<288x32xbf16>, vector<288x32xbf16>, vector<288x32xbf16> -> vector<288x96xbf16>
    %c1_62 = arith.constant 1 : index
    %c0_63 = arith.constant 0 : index
    %c0_64 = arith.constant 0 : index
    %68 = vector.load %arg6[%c1_62, %c0_63, %c0_64] : memref<3x96x32xbf16, #tpu.memory_space<vmem>>, vector<1x96x32xbf16>
    %69 = vector.shape_cast %68 : vector<1x96x32xbf16> to vector<96x32xbf16>
    %cst_65 = arith.constant dense<0.000000e+00> : vector<288x32xf32>
    %70 = tpu.matmul %67, %69, %cst_65 {dimension_numbers = #tpu.dot_dimension_numbers<[1], [0], [0], [1], [0, 0, 1, 1], [], []>} : vector<288x96xbf16>, vector<96x32xbf16>, vector<288x32xf32> -> vector<288x32xf32>
    %71 = arith.addf %63, %70 : vector<288x32xf32>
    %c36_66 = arith.constant 36 : index
    %c0_67 = arith.constant 0 : index
    %72 = vector.load %arg8[%c36_66, %c0_67] : memref<342x32xbf16, #tpu.memory_space<vmem>>, vector<288x32xbf16>
    %c37_68 = arith.constant 37 : index
    %c0_69 = arith.constant 0 : index
    %73 = vector.load %arg8[%c37_68, %c0_69] : memref<342x32xbf16, #tpu.memory_space<vmem>>, vector<288x32xbf16>
    %c38_70 = arith.constant 38 : index
    %c0_71 = arith.constant 0 : index
    %74 = vector.load %arg8[%c38_70, %c0_71] : memref<342x32xbf16, #tpu.memory_space<vmem>>, vector<288x32xbf16>
    %75 = tpu.concatenate %72, %73, %74 in 1 : vector<288x32xbf16>, vector<288x32xbf16>, vector<288x32xbf16> -> vector<288x96xbf16>
    %c2_72 = arith.constant 2 : index
    %c0_73 = arith.constant 0 : index
    %c0_74 = arith.constant 0 : index
    %76 = vector.load %arg6[%c2_72, %c0_73, %c0_74] : memref<3x96x32xbf16, #tpu.memory_space<vmem>>, vector<1x96x32xbf16>
    %77 = vector.shape_cast %76 : vector<1x96x32xbf16> to vector<96x32xbf16>
    %cst_75 = arith.constant dense<0.000000e+00> : vector<288x32xf32>
    %78 = tpu.matmul %75, %77, %cst_75 {dimension_numbers = #tpu.dot_dimension_numbers<[1], [0], [0], [1], [0, 0, 1, 1], [], []>} : vector<288x96xbf16>, vector<96x32xbf16>, vector<288x32xf32> -> vector<288x32xf32>
    %79 = arith.addf %71, %78 : vector<288x32xf32>
    %80 = math.tanh %79 : vector<288x32xf32>
    %81 = arith.subf %80, %48 : vector<288x32xf32>
    %82 = arith.mulf %41, %81 : vector<288x32xf32>
    %83 = arith.addf %48, %82 : vector<288x32xf32>
    %c0_76 = arith.constant 0 : index
    %c0_77 = arith.constant 0 : index
    %c0_78 = arith.constant 0 : index
    %84 = vector.load %arg7[%c0_76, %c0_77, %c0_78] : memref<1x288x32xf32, #tpu.memory_space<vmem>>, vector<1x288x32xf32>
    %85 = vector.shape_cast %84 : vector<1x288x32xf32> to vector<288x32xf32>
    %86 = vector.shape_cast %83 : vector<288x32xf32> to vector<1x288x32xf32>
    tpu.vector_store %arg7[%c0_76, %c0_77, %c0_78], %86 {strides = array<i32>} : memref<1x288x32xf32, #tpu.memory_space<vmem>>, vector<1x288x32xf32>,
    return
  }
  func.func @transform_0(%arg0: i32) -> (i32, i32, i32) {
    %c0_i32 = arith.constant 0 : i32
    %c0_i32_0 = arith.constant 0 : i32
    %c0_i32_1 = arith.constant 0 : i32
    return %arg0, %c0_i32, %c0_i32_0 : i32, i32, i32
  }
  func.func @transform_1(%arg0: i32) -> (i32, i32, i32) {
    %c0_i32 = arith.constant 0 : i32
    %c0_i32_0 = arith.constant 0 : i32
    %c0_i32_1 = arith.constant 0 : i32
    return %arg0, %c0_i32, %c0_i32_0 : i32, i32, i32
  }
  func.func @transform_2(%arg0: i32) -> (i32, i32, i32) {
    %c0_i32 = arith.constant 0 : i32
    %c0_i32_0 = arith.constant 0 : i32
    %c0_i32_1 = arith.constant 0 : i32
    return %arg0, %c0_i32, %c0_i32_0 : i32, i32, i32
  }
  func.func @transform_3(%arg0: i32) -> (i32, i32, i32) {
    %c0_i32 = arith.constant 0 : i32
    %c0_i32_0 = arith.constant 0 : i32
    %c0_i32_1 = arith.constant 0 : i32
    return %arg0, %c0_i32, %c0_i32_0 : i32, i32, i32
  }
  func.func @transform_4(%arg0: i32) -> (i32, i32, i32) {
    %c0_i32 = arith.constant 0 : i32
    %c0_i32_0 = arith.constant 0 : i32
    %c0_i32_1 = arith.constant 0 : i32
    %c0_i32_2 = arith.constant 0 : i32
    return %c0_i32, %c0_i32_0, %c0_i32_1 : i32, i32, i32
  }
  func.func @transform_5(%arg0: i32) -> (i32, i32, i32) {
    %c0_i32 = arith.constant 0 : i32
    %c0_i32_0 = arith.constant 0 : i32
    %c0_i32_1 = arith.constant 0 : i32
    %c0_i32_2 = arith.constant 0 : i32
    return %c0_i32, %c0_i32_0, %c0_i32_1 : i32, i32, i32
  }
  func.func @transform_6(%arg0: i32) -> (i32, i32, i32) {
    %c0_i32 = arith.constant 0 : i32
    %c0_i32_0 = arith.constant 0 : i32
    %c0_i32_1 = arith.constant 0 : i32
    return %arg0, %c0_i32, %c0_i32_0 : i32, i32, i32
  }
}

</mosaic_0001>

<llo_original>
// kernel: tpu_custom_call.1
$region0: #{tpu_custom_call.1}
  #allocation0 [shape = 'u32[]', space=smem, size = 0x4, offset = 0x4, fixed_abs, tag = 'smem constant byte address 0x4 - core index']
  #allocation1 [shape = 'u32[144,128]{1,0:T(1,128)}', space=vmem, size = 0x12000, scoped, tag = 'internal scratch']
  #allocation2 [shape = 'bf16[342,32]{1,0:T(8,128)(2,1)}', space=vmem, size = 0x15800, scoped, tag = 'scratch operand']
  %s0 = inlined_call_operand.vmem [shape: bf16[2,342,48], index: 0, kind: input, shape index: {}]
  %s1 = inlined_call_operand.vmem [shape: f32[2,288,32], index: 1, kind: input, shape index: {}]
  %s2 = inlined_call_operand.vmem [shape: f32[2,288,64], index: 2, kind: input, shape index: {}]
  %s3 = inlined_call_operand.vmem [shape: f32[2,288,32], index: 3, kind: input, shape index: {}]
  %s4 = inlined_call_operand.vmem [shape: bf16[3,144,96], index: 4, kind: input, shape index: {}]
  %s5 = inlined_call_operand.vmem [shape: bf16[3,96,32], index: 5, kind: input, shape index: {}]
  %s6 = inlined_call_operand.vmem [shape: f32[2,288,32], index: 6, kind: output, shape index: {}]
  %s7 = sld [smem:[#allocation0]]
  $region57: #{tpu_custom_call.1} parent=0
    _
  %s9 = ssub.s32 1, %s7
  %s10 = scalar_select 0, %s9, %s7
  loop: start=0, step=1, limit=4
  $region2: #{tpu_custom_call.1} parent=0 // loop_pre_header
    _
  $region3: #{tpu_custom_call.1} parent=0 // loop_header
    %s12 = sphi 0, %s16
    %p13 = scmp.ge.s32.totalorder %s12, 4
    %s22 = sphi 0, %s24
    %s25 = sphi 0, %s22
    %s26 = sphi 0, %s25
    %s42 = sphi 0, %s26
    %s48 = sphi 0, %s50
    %s51 = sphi 0, %s48
    %s52 = sphi 0, %s51
    %s68 = sphi 0, %s52
    %s74 = sphi 0, %s76
    %s77 = sphi 0, %s74
    %s78 = sphi 0, %s77
    %s94 = sphi 0, %s78
    %s100 = sphi 0, %s102
    %s103 = sphi 0, %s100
    %s104 = sphi 0, %s103
    %s120 = sphi 0, %s104
    %s124 = sphi 0, %s124
    %s126 = sphi 0, %s124
    %s127 = sphi 0, %s126
    %s141 = sphi 0, %s127
    %s145 = sphi 0, %s145
    %s147 = sphi 0, %s145
    %s148 = sphi 0, %s147
    %s162 = sphi 0, %s148
    %s168 = sphi 0, %s170
    %s171 = sphi 0, %s168
    %s172 = sphi 0, %s171
    %s188 = sphi 0, %s172
  $region4: #{tpu_custom_call.1} parent=0 // loop_header_branch
    %15 = sbr.rel (%p13) target = $region8
  $region5: #{tpu_custom_call.1} parent=0 // loop_body
    %s17 = ssub.s32 %s12, 1
    %s18 = ssub.s32 %s12, 2
    %s19 = sadd.s32 %s12, 1
    %s20 = ssub.s32 %s12, %s19
    %p21 = scmp.eq.s32.totalorder %s20, 0
    %s23 = sadd.s32 %s22, 1
    %s24 = scalar_select %p21, %s22, %s23
    %p27 = pneg %p21
    %p28 = scmp.eq.s32.totalorder %s12, 1
    %p29 = por %p27, %p28
    %p30 = scmp.ne.s32.totalorder %s22, %s25
    %p31 = scmp.eq.s32.totalorder %s12, 0
    %p32 = por %p30, %p31
    %p33 = scmp.ne.s32.totalorder %s22, %s25
    %p34 = scmp.eq.s32.totalorder %s17, 1
    %p35 = por %p33, %p34
    %p36 = scmp.ne.s32.totalorder %s25, %s26
    %p37 = scmp.eq.s32.totalorder %s17, 0
    %p38 = por %p36, %p37
    %p39 = scmp.ne.s32.totalorder %s25, %s26
    %p40 = scmp.eq.s32.totalorder %s18, 1
    %p41 = por %p39, %p40
    %p43 = scmp.ne.s32.totalorder %s26, %s42
    %p44 = scmp.eq.s32.totalorder %s18, 0
    %p45 = por %p43, %p44
    %s46 = ssub.s32 %s12, %s19
    %p47 = scmp.eq.s32.totalorder %s46, 0
    %s49 = sadd.s32 %s48, 1
    %s50 = scalar_select %p47, %s48, %s49
    %p53 = pneg %p47
    %p54 = scmp.eq.s32.totalorder %s12, 1
    %p55 = por %p53, %p54
    %p56 = scmp.ne.s32.totalorder %s48, %s51
    %p57 = scmp.eq.s32.totalorder %s12, 0
    %p58 = por %p56, %p57
    %p59 = scmp.ne.s32.totalorder %s48, %s51
    %p60 = scmp.eq.s32.totalorder %s17, 1
    %p61 = por %p59, %p60
    %p62 = scmp.ne.s32.totalorder %s51, %s52
    %p63 = scmp.eq.s32.totalorder %s17, 0
    %p64 = por %p62, %p63
    %p65 = scmp.ne.s32.totalorder %s51, %s52
    %p66 = scmp.eq.s32.totalorder %s18, 1
    %p67 = por %p65, %p66
    %p69 = scmp.ne.s32.totalorder %s52, %s68
    %p70 = scmp.eq.s32.totalorder %s18, 0
    %p71 = por %p69, %p70
    %s72 = ssub.s32 %s12, %s19
    %p73 = scmp.eq.s32.totalorder %s72, 0
    %s75 = sadd.s32 %s74, 1
    %s76 = scalar_select %p73, %s74, %s75
    %p79 = pneg %p73
    %p80 = scmp.eq.s32.totalorder %s12, 1
    %p81 = por %p79, %p80
    %p82 = scmp.ne.s32.totalorder %s74, %s77
    %p83 = scmp.eq.s32.totalorder %s12, 0
    %p84 = por %p82, %p83
    %p85 = scmp.ne.s32.totalorder %s74, %s77
    %p86 = scmp.eq.s32.totalorder %s17, 1
    %p87 = por %p85, %p86
    %p88 = scmp.ne.s32.totalorder %s77, %s78
    %p89 = scmp.eq.s32.totalorder %s17, 0
    %p90 = por %p88, %p89
    %p91 = scmp.ne.s32.totalorder %s77, %s78
    %p92 = scmp.eq.s32.totalorder %s18, 1
    %p93 = por %p91, %p92
    %p95 = scmp.ne.s32.totalorder %s78, %s94
    %p96 = scmp.eq.s32.totalorder %s18, 0
    %p97 = por %p95, %p96
    %s98 = ssub.s32 %s12, %s19
    %p99 = scmp.eq.s32.totalorder %s98, 0
    %s101 = sadd.s32 %s100, 1
    %s102 = scalar_select %p99, %s100, %s101
    %p105 = pneg %p99
    %p106 = scmp.eq.s32.totalorder %s12, 1
    %p107 = por %p105, %p106
    %p108 = scmp.ne.s32.totalorder %s100, %s103
    %p109 = scmp.eq.s32.totalorder %s12, 0
    %p110 = por %p108, %p109
    %p111 = scmp.ne.s32.totalorder %s100, %s103
    %p112 = scmp.eq.s32.totalorder %s17, 1
    %p113 = por %p111, %p112
    %p114 = scmp.ne.s32.totalorder %s103, %s104
    %p115 = scmp.eq.s32.totalorder %s17, 0
    %p116 = por %p114, %p115
    %p117 = scmp.ne.s32.totalorder %s103, %s104
    %p118 = scmp.eq.s32.totalorder %s18, 1
    %p119 = por %p117, %p118
    %p121 = scmp.ne.s32.totalorder %s104, %s120
    %p122 = scmp.eq.s32.totalorder %s18, 0
    %p123 = por %p121, %p122
    %s125 = sadd.s32 %s124, 1
    %p128 = scmp.eq.s32.totalorder %s12, 1
    %p129 = scmp.ne.s32.totalorder %s124, %s126
    %p130 = scmp.eq.s32.totalorder %s12, 0
    %p131 = por %p129, %p130
    %p132 = scmp.ne.s32.totalorder %s124, %s126
    %p133 = scmp.eq.s32.totalorder %s17, 1
    %p134 = por %p132, %p133
    %p135 = scmp.ne.s32.totalorder %s126, %s127
    %p136 = scmp.eq.s32.totalorder %s17, 0
    %p137 = por %p135, %p136
    %p138 = scmp.ne.s32.totalorder %s126, %s127
    %p139 = scmp.eq.s32.totalorder %s18, 1
    %p140 = por %p138, %p139
    %p142 = scmp.ne.s32.totalorder %s127, %s141
    %p143 = scmp.eq.s32.totalorder %s18, 0
    %p144 = por %p142, %p143
    %s146 = sadd.s32 %s145, 1
    %p149 = scmp.eq.s32.totalorder %s12, 1
    %p150 = scmp.ne.s32.totalorder %s145, %s147
    %p151 = scmp.eq.s32.totalorder %s12, 0
    %p152 = por %p150, %p151
    %p153 = scmp.ne.s32.totalorder %s145, %s147
    %p154 = scmp.eq.s32.totalorder %s17, 1
    %p155 = por %p153, %p154
    %p156 = scmp.ne.s32.totalorder %s147, %s148
    %p157 = scmp.eq.s32.totalorder %s17, 0
    %p158 = por %p156, %p157
    %p159 = scmp.ne.s32.totalorder %s147, %s148
    %p160 = scmp.eq.s32.totalorder %s18, 1
    %p161 = por %p159, %p160
    %p163 = scmp.ne.s32.totalorder %s148, %s162
    %p164 = scmp.eq.s32.totalorder %s18, 0
    %p165 = por %p163, %p164
    %s166 = ssub.s32 %s12, %s19
    %p167 = scmp.eq.s32.totalorder %s166, 0
    %s169 = sadd.s32 %s168, 1
    %s170 = scalar_select %p167, %s168, %s169
    %p173 = pneg %p167
    %p174 = scmp.eq.s32.totalorder %s12, 1
    %p175 = por %p173, %p174
    %p176 = scmp.ne.s32.totalorder %s168, %s171
    %p177 = scmp.eq.s32.totalorder %s12, 0
    %p178 = por %p176, %p177
    %p179 = scmp.ne.s32.totalorder %s168, %s171
    %p180 = scmp.eq.s32.totalorder %s17, 1
    %p181 = por %p179, %p180
    %p182 = scmp.ne.s32.totalorder %s171, %s172
    %p183 = scmp.eq.s32.totalorder %s17, 0
    %p184 = por %p182, %p183
    %p185 = scmp.ne.s32.totalorder %s171, %s172
    %p186 = scmp.eq.s32.totalorder %s18, 1
    %p187 = por %p185, %p186
    %p189 = scmp.ne.s32.totalorder %s172, %s188
    %p190 = scmp.eq.s32.totalorder %s18, 0
    %p191 = por %p189, %p190
    %p192 = scmp.le.s32.totalorder 1, %s12
    %p193 = scmp.lt.s32.totalorder %s12, 3
    %p194 = pnand %p192, %p193
    %p195 = pneg %p194
    // Predicated region
    $region9: #{tpu_custom_call.1} parent=5 // pred_check
      _
    $region10: #{tpu_custom_call.1} parent=5 // pred_check_branch
      %197 = sbr.rel (%p194) target = $region12
    $region11: #{tpu_custom_call.1} parent=5 // pred_region
      %s198 = ssub.s32 %s12, 1
      // Predicated region
      $region13: #{tpu_custom_call.1} parent=11 // pred_check
        %p199 = pneg %p137
      $region14: #{tpu_custom_call.1} parent=11 // pred_check_branch
        %201 = sbr.rel (%p199) target = $region16
      $region15: #{tpu_custom_call.1} parent=11 // pred_region
        _
      $region16: #{tpu_custom_call.1} parent=11 // pred_fallthru
        _
      // Predicated region
      $region17: #{tpu_custom_call.1} parent=11 // pred_check
        %p202 = pneg %p158
      $region18: #{tpu_custom_call.1} parent=11 // pred_check_branch
        %204 = sbr.rel (%p202) target = $region20
      $region19: #{tpu_custom_call.1} parent=11 // pred_region
        _
      $region20: #{tpu_custom_call.1} parent=11 // pred_fallthru
        _
    $region12: #{tpu_custom_call.1} parent=5 // pred_fallthru
      _
    %p205 = scmp.lt.s32.totalorder %s12, 2
    // Predicated region
    $region21: #{tpu_custom_call.1} parent=5 // pred_check
      %p206 = pneg %p205
    $region22: #{tpu_custom_call.1} parent=5 // pred_check_branch
      %208 = sbr.rel (%p206) target = $region24
    $region23: #{tpu_custom_call.1} parent=5 // pred_region
      // Predicated region
      $region25: #{tpu_custom_call.1} parent=23 // pred_check
        %p209 = pneg %p32
      $region26: #{tpu_custom_call.1} parent=23 // pred_check_branch
        %211 = sbr.rel (%p209) target = $region28
      $region27: #{tpu_custom_call.1} parent=23 // pred_region
        %p212 = scmp.lt.s32.totalorder %s12, 1
        %s213 = scalar_select %p212, %s12, 1
        %s214 = smul.addr %s213, 43
        %s215 = smul.addr %s214, 4
        %s216 = scalar_lea.vmem %s0, %s215
      $region28: #{tpu_custom_call.1} parent=23 // pred_fallthru
        _
      // Predicated region
      $region29: #{tpu_custom_call.1} parent=23 // pred_check
        %p217 = pneg %p58
      $region30: #{tpu_custom_call.1} parent=23 // pred_check_branch
        %219 = sbr.rel (%p217) target = $region32
      $region31: #{tpu_custom_call.1} parent=23 // pred_region
        %p220 = scmp.lt.s32.totalorder %s12, 1
        %s221 = scalar_select %p220, %s12, 1
        %s222 = smul.addr %s221, 36
        %s223 = smul.addr %s222, 8
        %s224 = scalar_lea.vmem %s1, %s223
      $region32: #{tpu_custom_call.1} parent=23 // pred_fallthru
        _
      // Predicated region
      $region33: #{tpu_custom_call.1} parent=23 // pred_check
        %p225 = pneg %p84
      $region34: #{tpu_custom_call.1} parent=23 // pred_check_branch
        %227 = sbr.rel (%p225) target = $region36
      $region35: #{tpu_custom_call.1} parent=23 // pred_region
        %p228 = scmp.lt.s32.totalorder %s12, 1
        %s229 = scalar_select %p228, %s12, 1
        %s230 = smul.addr %s229, 36
        %s231 = smul.addr %s230, 8
        %s232 = scalar_lea.vmem %s2, %s231
      $region36: #{tpu_custom_call.1} parent=23 // pred_fallthru
        _
      // Predicated region
      $region37: #{tpu_custom_call.1} parent=23 // pred_check
        %p233 = pneg %p110
      $region38: #{tpu_custom_call.1} parent=23 // pred_check_branch
        %235 = sbr.rel (%p233) target = $region40
      $region39: #{tpu_custom_call.1} parent=23 // pred_region
        %p236 = scmp.lt.s32.totalorder %s12, 1
        %s237 = scalar_select %p236, %s12, 1
        %s238 = smul.addr %s237, 36
        %s239 = smul.addr %s238, 8
        %s240 = scalar_lea.vmem %s3, %s239
      $region40: #{tpu_custom_call.1} parent=23 // pred_fallthru
        _
    $region24: #{tpu_custom_call.1} parent=5 // pred_fallthru
      _
    %p241 = scmp.le.s32.totalorder 1, %s12
    %p242 = scmp.lt.s32.totalorder %s12, 3
    %p243 = pnand %p241, %p242
    %p244 = pneg %p243
    // Predicated region
    $region41: #{tpu_custom_call.1} parent=5 // pred_check
      _
    $region42: #{tpu_custom_call.1} parent=5 // pred_check_branch
      %246 = sbr.rel (%p243) target = $region44
    $region43: #{tpu_custom_call.1} parent=5 // pred_region
      %s247 = ssub.s32 %s12, 1
      %p248 = scmp.lt.s32.totalorder %s17, 1
      %s249 = scalar_select %p248, %s17, 1
      %s250 = smul.addr %s249, 43
      %s251 = smul.addr %s250, 4
      %s252 = scalar_lea.vmem %s0, %s251
      %p253 = pneg %p38
      %p254 = pneg %p35
      %p255 = scmp.lt.s32.totalorder %s17, 1
      %s256 = scalar_select %p255, %s17, 1
      %s257 = smul.addr %s256, 36
      %s258 = smul.addr %s257, 8
      %s259 = scalar_lea.vmem %s1, %s258
      %p260 = pneg %p64
      %p261 = pneg %p61
      %p262 = scmp.lt.s32.totalorder %s17, 1
      %s263 = scalar_select %p262, %s17, 1
      %s264 = smul.addr %s263, 36
      %s265 = smul.addr %s264, 8
      %s266 = scalar_lea.vmem %s2, %s265
      %p267 = pneg %p90
      %p268 = pneg %p87
      %p269 = scmp.lt.s32.totalorder %s17, 1
      %s270 = scalar_select %p269, %s17, 1
      %s271 = smul.addr %s270, 36
      %s272 = smul.addr %s271, 8
      %s273 = scalar_lea.vmem %s3, %s272
      %p274 = pneg %p116
      %p275 = pneg %p113
      %p276 = pneg %p137
      %p277 = pneg %p134
      %p278 = pneg %p158
      %p279 = pneg %p155
      %p280 = pneg %p184
      %p281 = pneg %p181
      %p282 = scmp.lt.s32.totalorder %s17, 1
      %s283 = scalar_select %p282, %s17, 1
      %s284 = smul.addr %s283, 36
      %s285 = smul.addr %s284, 8
      %s286 = scalar_lea.vmem %s6, %s285
      %p287 = scmp.lt.s32.totalorder %s17, 1
      %s288 = scalar_select %p287, %s17, 1
      %s289 = smul.addr %s288, 43
      %s290 = smul.addr %s289, 4
      %s291 = scalar_lea.vmem %s0, %s290
      %p292 = scmp.lt.s32.totalorder %s17, 1
      %s293 = scalar_select %p292, %s17, 1
      %s294 = smul.addr %s293, 36
      %s295 = smul.addr %s294, 8
      %s296 = scalar_lea.vmem %s1, %s295
      %p297 = scmp.lt.s32.totalorder %s17, 1
      %s298 = scalar_select %p297, %s17, 1
      %s299 = smul.addr %s298, 36
      %s300 = smul.addr %s299, 8
      %s301 = scalar_lea.vmem %s2, %s300
      %p302 = scmp.lt.s32.totalorder %s17, 1
      %s303 = scalar_select %p302, %s17, 1
      %s304 = smul.addr %s303, 36
      %s305 = smul.addr %s304, 8
      %s306 = scalar_lea.vmem %s3, %s305
      %p307 = scmp.lt.s32.totalorder %s17, 1
      %s308 = scalar_select %p307, %s17, 1
      %s309 = smul.addr %s308, 36
      %s310 = smul.addr %s309, 8
      %s311 = scalar_lea.vmem %s6, %s310
      %v313 = vld [vmem:[%s291] sm:$0xf]
      %v314 = vld [vmem:[%s291 + $0x4] sm:$0xf]
      %v315 = vld [vmem:[%s291 + $0x8] sm:$0xf]
      %v316 = vld [vmem:[%s291 + $0xc] sm:$0xf]
      %v317 = vld [vmem:[%s291 + $0x10] sm:$0xf]
      %v318 = vld [vmem:[%s291 + $0x14] sm:$0xf]
      %v319 = vld [vmem:[%s291 + $0x18] sm:$0xf]
      %v320 = vld [vmem:[%s291 + $0x1c] sm:$0xf]
      %v321 = vld [vmem:[%s291 + $0x20] sm:$0xf]
      %v322 = vld [vmem:[%s291 + $0x24] sm:$0xf]
      %v323 = vld [vmem:[%s291 + $0x28] sm:$0xf]
      %v324 = vld [vmem:[%s291 + $0x2c] sm:$0xf]
      %v325 = vld [vmem:[%s291 + $0x30] sm:$0xf]
      %v326 = vld [vmem:[%s291 + $0x34] sm:$0xf]
      %v327 = vld [vmem:[%s291 + $0x38] sm:$0xf]
      %v328 = vld [vmem:[%s291 + $0x3c] sm:$0xf]
      %v329 = vld [vmem:[%s291 + $0x40] sm:$0xf]
      %v330 = vld [vmem:[%s291 + $0x44] sm:$0xf]
      %v331 = vld [vmem:[%s291 + $0x48] sm:$0xf]
      %v332 = vld [vmem:[%s291 + $0x4c] sm:$0xf]
      %v333 = vld [vmem:[%s291 + $0x50] sm:$0xf]
      %v334 = vld [vmem:[%s291 + $0x54] sm:$0xf]
      %v335 = vld [vmem:[%s291 + $0x58] sm:$0xf]
      %v336 = vld [vmem:[%s291 + $0x5c] sm:$0xf]
      %v337 = vld [vmem:[%s291 + $0x60] sm:$0xf]
      %v338 = vld [vmem:[%s291 + $0x64] sm:$0xf]
      %v339 = vld [vmem:[%s291 + $0x68] sm:$0xf]
      %v340 = vld [vmem:[%s291 + $0x6c] sm:$0xf]
      %v341 = vld [vmem:[%s291 + $0x70] sm:$0xf]
      %v342 = vld [vmem:[%s291 + $0x74] sm:$0xf]
      %v343 = vld [vmem:[%s291 + $0x78] sm:$0xf]
      %v344 = vld [vmem:[%s291 + $0x7c] sm:$0xf]
      %v345 = vld [vmem:[%s291 + $0x80] sm:$0xf]
      %v346 = vld [vmem:[%s291 + $0x84] sm:$0xf]
      %v347 = vld [vmem:[%s291 + $0x88] sm:$0xf]
      %v348 = vld [vmem:[%s291 + $0x8c] sm:$0xf]
      %v349 = vld [vmem:[%s291 + $0x90] sm:$0x1]
      %v350 = vld [vmem:[%s291] sm:$0xe]
      %v387 = vunpack.c.l.b16 %v313
      %v388 = vunpack.c.l.b16 %v314
      %v389 = vunpack.c.l.b16 %v315
      %v390 = vunpack.c.l.b16 %v316
      %v391 = vunpack.c.l.b16 %v317
      %v392 = vunpack.c.l.b16 %v318
      %v393 = vunpack.c.l.b16 %v319
      %v394 = vunpack.c.l.b16 %v320
      %v395 = vunpack.c.l.b16 %v321
      %v396 = vunpack.c.l.b16 %v322
      %v397 = vunpack.c.l.b16 %v323
      %v398 = vunpack.c.l.b16 %v324
      %v399 = vunpack.c.l.b16 %v325
      %v400 = vunpack.c.l.b16 %v326
      %v401 = vunpack.c.l.b16 %v327
      %v402 = vunpack.c.l.b16 %v328
      %v403 = vunpack.c.l.b16 %v329
      %v404 = vunpack.c.l.b16 %v330
      %v405 = vunpack.c.l.b16 %v331
      %v406 = vunpack.c.l.b16 %v332
      %v407 = vunpack.c.l.b16 %v333
      %v408 = vunpack.c.l.b16 %v334
      %v409 = vunpack.c.l.b16 %v335
      %v410 = vunpack.c.l.b16 %v336
      %v411 = vunpack.c.l.b16 %v337
      %v412 = vunpack.c.l.b16 %v338
      %v413 = vunpack.c.l.b16 %v339
      %v414 = vunpack.c.l.b16 %v340
      %v415 = vunpack.c.l.b16 %v341
      %v416 = vunpack.c.l.b16 %v342
      %v417 = vunpack.c.l.b16 %v343
      %v418 = vunpack.c.l.b16 %v344
      %v419 = vunpack.c.l.b16 %v345
      %v420 = vunpack.c.l.b16 %v346
      %v421 = vunpack.c.l.b16 %v347
      %v422 = vunpack.c.l.b16 %v348
      %v423 = vpack.c.b16 %v388, %v387
      %v424 = vpack.c.b16 %v390, %v389
      %v425 = vpack.c.b16 %v392, %v391
      %v426 = vpack.c.b16 %v394, %v393
      %v427 = vpack.c.b16 %v396, %v395
      %v428 = vpack.c.b16 %v398, %v397
      %v429 = vpack.c.b16 %v400, %v399
      %v430 = vpack.c.b16 %v402, %v401
      %v431 = vpack.c.b16 %v404, %v403
      %v432 = vpack.c.b16 %v406, %v405
      %v433 = vpack.c.b16 %v408, %v407
      %v434 = vpack.c.b16 %v410, %v409
      %v435 = vpack.c.b16 %v412, %v411
      %v436 = vpack.c.b16 %v414, %v413
      %v437 = vpack.c.b16 %v416, %v415
      %v438 = vpack.c.b16 %v418, %v417
      %v439 = vpack.c.b16 %v420, %v419
      %v440 = vpack.c.b16 %v422, %v421
      %v442 = vunpack.c.l.b16 %v349
      %v443 = vpack.c.b16 %v442, %v442
      %vm444 = vsmask.f32 7424
      %v446 = vshrl.u32 %v423, 16
      %v448 = vshll.u32 %v423, 16
      %v450 = vrot.slane %v448, 1
      %v451 = vor.u32 %v446, %v450
      %v453 = vshll.u32 %v424, 16
      %v455 = vrot.slane %v453, 1
      %v456 = vsel %vm444, %v451, %v455
      %v457 = vshrl.u32 %v424, 16
      %v459 = vor.u32 %v457, %v455
      %v461 = vshll.u32 %v425, 16
      %v463 = vrot.slane %v461, 1
      %v464 = vsel %vm444, %v459, %v463
      %v465 = vshrl.u32 %v425, 16
      %v467 = vor.u32 %v465, %v463
      %v469 = vshll.u32 %v426, 16
      %v471 = vrot.slane %v469, 1
      %v472 = vsel %vm444, %v467, %v471
      %v473 = vshrl.u32 %v426, 16
      %v475 = vor.u32 %v473, %v471
      %v477 = vshll.u32 %v427, 16
      %v479 = vrot.slane %v477, 1
      %v480 = vsel %vm444, %v475, %v479
      %v481 = vshrl.u32 %v427, 16
      %v483 = vor.u32 %v481, %v479
      %v485 = vshll.u32 %v428, 16
      %v487 = vrot.slane %v485, 1
      %v488 = vsel %vm444, %v483, %v487
      %v489 = vshrl.u32 %v428, 16
      %v491 = vor.u32 %v489, %v487
      %v493 = vshll.u32 %v429, 16
      %v495 = vrot.slane %v493, 1
      %v496 = vsel %vm444, %v491, %v495
      %v497 = vshrl.u32 %v429, 16
      %v499 = vor.u32 %v497, %v495
      %v501 = vshll.u32 %v430, 16
      %v503 = vrot.slane %v501, 1
      %v504 = vsel %vm444, %v499, %v503
      %v505 = vshrl.u32 %v430, 16
      %v507 = vor.u32 %v505, %v503
      %v509 = vshll.u32 %v431, 16
      %v511 = vrot.slane %v509, 1
      %v512 = vsel %vm444, %v507, %v511
      %v513 = vshrl.u32 %v431, 16
      %v515 = vor.u32 %v513, %v511
      %v517 = vshll.u32 %v432, 16
      %v519 = vrot.slane %v517, 1
      %v520 = vsel %vm444, %v515, %v519
      %v521 = vshrl.u32 %v432, 16
      %v523 = vor.u32 %v521, %v519
      %v525 = vshll.u32 %v433, 16
      %v527 = vrot.slane %v525, 1
      %v528 = vsel %vm444, %v523, %v527
      %v529 = vshrl.u32 %v433, 16
      %v531 = vor.u32 %v529, %v527
      %v533 = vshll.u32 %v434, 16
      %v535 = vrot.slane %v533, 1
      %v536 = vsel %vm444, %v531, %v535
      %v537 = vshrl.u32 %v434, 16
      %v539 = vor.u32 %v537, %v535
      %v541 = vshll.u32 %v435, 16
      %v543 = vrot.slane %v541, 1
      %v544 = vsel %vm444, %v539, %v543
      %v545 = vshrl.u32 %v435, 16
      %v547 = vor.u32 %v545, %v543
      %v549 = vshll.u32 %v436, 16
      %v551 = vrot.slane %v549, 1
      %v552 = vsel %vm444, %v547, %v551
      %v553 = vshrl.u32 %v436, 16
      %v555 = vor.u32 %v553, %v551
      %v557 = vshll.u32 %v437, 16
      %v559 = vrot.slane %v557, 1
      %v560 = vsel %vm444, %v555, %v559
      %v561 = vshrl.u32 %v437, 16
      %v563 = vor.u32 %v561, %v559
      %v565 = vshll.u32 %v438, 16
      %v567 = vrot.slane %v565, 1
      %v568 = vsel %vm444, %v563, %v567
      %v569 = vshrl.u32 %v438, 16
      %v571 = vor.u32 %v569, %v567
      %v573 = vshll.u32 %v439, 16
      %v575 = vrot.slane %v573, 1
      %v576 = vsel %vm444, %v571, %v575
      %v577 = vshrl.u32 %v439, 16
      %v579 = vor.u32 %v577, %v575
      %v581 = vshll.u32 %v440, 16
      %v583 = vrot.slane %v581, 1
      %v584 = vsel %vm444, %v579, %v583
      %v585 = vshrl.u32 %v440, 16
      %v587 = vor.u32 %v585, %v583
      %v589 = vshll.u32 %v443, 16
      %v591 = vrot.slane %v589, 1
      %v592 = vsel %vm444, %v587, %v591
      %593 = vrot.lane.b32.xlu0 %v456, 48
      %v594 = vpop.permute.xlu0 %593
      %595 = vrot.lane.b32.xlu0 %v464, 48
      %v596 = vpop.permute.xlu0 %595
      %597 = vrot.lane.b32.xlu0 %v472, 48
      %v598 = vpop.permute.xlu0 %597
      %599 = vrot.lane.b32.xlu0 %v480, 48
      %v600 = vpop.permute.xlu0 %599
      %601 = vrot.lane.b32.xlu0 %v488, 48
      %v602 = vpop.permute.xlu0 %601
      %603 = vrot.lane.b32.xlu0 %v496, 48
      %v604 = vpop.permute.xlu0 %603
      %605 = vrot.lane.b32.xlu0 %v504, 48
      %v606 = vpop.permute.xlu0 %605
      %607 = vrot.lane.b32.xlu0 %v512, 48
      %v608 = vpop.permute.xlu0 %607
      %609 = vrot.lane.b32.xlu0 %v520, 48
      %v610 = vpop.permute.xlu0 %609
      %611 = vrot.lane.b32.xlu0 %v528, 48
      %v612 = vpop.permute.xlu0 %611
      %613 = vrot.lane.b32.xlu0 %v536, 48
      %v614 = vpop.permute.xlu0 %613
      %615 = vrot.lane.b32.xlu0 %v544, 48
      %v616 = vpop.permute.xlu0 %615
      %617 = vrot.lane.b32.xlu0 %v552, 48
      %v618 = vpop.permute.xlu0 %617
      %619 = vrot.lane.b32.xlu0 %v560, 48
      %v620 = vpop.permute.xlu0 %619
      %621 = vrot.lane.b32.xlu0 %v568, 48
      %v622 = vpop.permute.xlu0 %621
      %623 = vrot.lane.b32.xlu0 %v576, 48
      %v624 = vpop.permute.xlu0 %623
      %625 = vrot.lane.b32.xlu0 %v584, 48
      %v626 = vpop.permute.xlu0 %625
      %627 = vrot.lane.b32.xlu0 %v592, 48
      %v628 = vpop.permute.xlu0 %627
      %v630 = vunpack.c.l.b16 %v350
      %v631 = vpack.c.b16 %v388, %v630
      %vm632 = vcmask 1046528
      %v633 = vrot.slane %v631, 1
      %v634 = vrot.slane %v424, 1
      %v635 = vsel %vm632, %v633, %v634
      %v636 = vrot.slane %v425, 1
      %v637 = vsel %vm632, %v634, %v636
      %v638 = vrot.slane %v426, 1
      %v639 = vsel %vm632, %v636, %v638
      %v640 = vrot.slane %v427, 1
      %v641 = vsel %vm632, %v638, %v640
      %v642 = vrot.slane %v428, 1
      %v643 = vsel %vm632, %v640, %v642
      %v644 = vrot.slane %v429, 1
      %v645 = vsel %vm632, %v642, %v644
      %v646 = vrot.slane %v430, 1
      %v647 = vsel %vm632, %v644, %v646
      %v648 = vrot.slane %v431, 1
      %v649 = vsel %vm632, %v646, %v648
      %v650 = vrot.slane %v432, 1
      %v651 = vsel %vm632, %v648, %v650
      %v652 = vrot.slane %v433, 1
      %v653 = vsel %vm632, %v650, %v652
      %v654 = vrot.slane %v434, 1
      %v655 = vsel %vm632, %v652, %v654
      %v656 = vrot.slane %v435, 1
      %v657 = vsel %vm632, %v654, %v656
      %v658 = vrot.slane %v436, 1
      %v659 = vsel %vm632, %v656, %v658
      %v660 = vrot.slane %v437, 1
      %v661 = vsel %vm632, %v658, %v660
      %v662 = vrot.slane %v438, 1
      %v663 = vsel %vm632, %v660, %v662
      %v664 = vrot.slane %v439, 1
      %v665 = vsel %vm632, %v662, %v664
      %v666 = vrot.slane %v440, 1
      %v667 = vsel %vm632, %v664, %v666
      %v668 = vrot.slane %v443, 1
      %v669 = vsel %vm632, %v666, %v668
      %670 = vrot.lane.b32.xlu0 %v635, 96
      %v671 = vpop.permute.xlu0 %670
      %672 = vrot.lane.b32.xlu0 %v637, 96
      %v673 = vpop.permute.xlu0 %672
      %674 = vrot.lane.b32.xlu0 %v639, 96
      %v675 = vpop.permute.xlu0 %674
      %676 = vrot.lane.b32.xlu0 %v641, 96
      %v677 = vpop.permute.xlu0 %676
      %678 = vrot.lane.b32.xlu0 %v643, 96
      %v679 = vpop.permute.xlu0 %678
      %680 = vrot.lane.b32.xlu0 %v645, 96
      %v681 = vpop.permute.xlu0 %680
      %682 = vrot.lane.b32.xlu0 %v647, 96
      %v683 = vpop.permute.xlu0 %682
      %684 = vrot.lane.b32.xlu0 %v649, 96
      %v685 = vpop.permute.xlu0 %684
      %686 = vrot.lane.b32.xlu0 %v651, 96
      %v687 = vpop.permute.xlu0 %686
      %688 = vrot.lane.b32.xlu0 %v653, 96
      %v689 = vpop.permute.xlu0 %688
      %690 = vrot.lane.b32.xlu0 %v655, 96
      %v691 = vpop.permute.xlu0 %690
      %692 = vrot.lane.b32.xlu0 %v657, 96
      %v693 = vpop.permute.xlu0 %692
      %694 = vrot.lane.b32.xlu0 %v659, 96
      %v695 = vpop.permute.xlu0 %694
      %696 = vrot.lane.b32.xlu0 %v661, 96
      %v697 = vpop.permute.xlu0 %696
      %698 = vrot.lane.b32.xlu0 %v663, 96
      %v699 = vpop.permute.xlu0 %698
      %700 = vrot.lane.b32.xlu0 %v665, 96
      %v701 = vpop.permute.xlu0 %700
      %702 = vrot.lane.b32.xlu0 %v667, 96
      %v703 = vpop.permute.xlu0 %702
      %704 = vrot.lane.b32.xlu0 %v669, 96
      %v705 = vpop.permute.xlu0 %704
      %vm706 = vcmask 392192
      %v708 = vsel %vm706, %v423, %v594
      %v710 = vsel %vm706, %v424, %v596
      %v712 = vsel %vm706, %v425, %v598
      %v714 = vsel %vm706, %v426, %v600
      %v716 = vsel %vm706, %v427, %v602
      %v718 = vsel %vm706, %v428, %v604
      %v720 = vsel %vm706, %v429, %v606
      %v722 = vsel %vm706, %v430, %v608
      %v724 = vsel %vm706, %v431, %v610
      %v726 = vsel %vm706, %v432, %v612
      %v728 = vsel %vm706, %v433, %v614
      %v730 = vsel %vm706, %v434, %v616
      %v732 = vsel %vm706, %v435, %v618
      %v734 = vsel %vm706, %v436, %v620
      %v736 = vsel %vm706, %v437, %v622
      %v738 = vsel %vm706, %v438, %v624
      %v740 = vsel %vm706, %v439, %v626
      %v742 = vsel %vm706, %v440, %v628
      %vm743 = vcmask 785408
      %v745 = vsel %vm743, %v708, %v671
      %v748 = vsel %vm743, %v710, %v673
      %v751 = vsel %vm743, %v712, %v675
      %v754 = vsel %vm743, %v714, %v677
      %v757 = vsel %vm743, %v716, %v679
      %v760 = vsel %vm743, %v718, %v681
      %v763 = vsel %vm743, %v720, %v683
      %v766 = vsel %vm743, %v722, %v685
      %v769 = vsel %vm743, %v724, %v687
      %v772 = vsel %vm743, %v726, %v689
      %v775 = vsel %vm743, %v728, %v691
      %v778 = vsel %vm743, %v730, %v693
      %v781 = vsel %vm743, %v732, %v695
      %v784 = vsel %vm743, %v734, %v697
      %v787 = vsel %vm743, %v736, %v699
      %v790 = vsel %vm743, %v738, %v701
      %v793 = vsel %vm743, %v740, %v703
      %v796 = vsel %vm743, %v742, %v705
      %v798 = vld [vmem:[%s4] sm:$0xf]
      %v799 = vld [vmem:[%s4 + $0x4] sm:$0xf]
      %v800 = vld [vmem:[%s4 + $0x8] sm:$0xf]
      %v801 = vld [vmem:[%s4 + $0xc] sm:$0xf]
      %v802 = vld [vmem:[%s4 + $0x10] sm:$0xf]
      %v803 = vld [vmem:[%s4 + $0x14] sm:$0xf]
      %v804 = vld [vmem:[%s4 + $0x18] sm:$0xf]
      %v805 = vld [vmem:[%s4 + $0x1c] sm:$0xf]
      %v806 = vld [vmem:[%s4 + $0x20] sm:$0xf]
      %v807 = vld [vmem:[%s4 + $0x24] sm:$0xf]
      %v808 = vld [vmem:[%s4 + $0x28] sm:$0xf]
      %v809 = vld [vmem:[%s4 + $0x2c] sm:$0xf]
      %v810 = vld [vmem:[%s4 + $0x30] sm:$0xf]
      %v811 = vld [vmem:[%s4 + $0x34] sm:$0xf]
      %v812 = vld [vmem:[%s4 + $0x38] sm:$0xf]
      %v813 = vld [vmem:[%s4 + $0x3c] sm:$0xf]
      %v814 = vld [vmem:[%s4 + $0x40] sm:$0xf]
      %v815 = vld [vmem:[%s4 + $0x44] sm:$0xf]
      %v816 = vld [vmem:[%s291 + $0x8] sm:$0xe]
      %v817 = vld [vmem:[%s291 + $0x90] sm:$0xf]
      %v818 = vld [vmem:[%s291 + $0x94] sm:$0xf]
      %v819 = vld [vmem:[%s291 + $0x98] sm:$0x1]
      %v820 = vld [vmem:[%s291 + $0x98] sm:$0x3]
      %v821 = vld [vmem:[%s291 + $0x8] sm:$0xc]
      %v826 = vunpack.c.l.b16 %v816
      %v827 = vunpack.c.l.b16 %v817
      %v828 = vunpack.c.l.b16 %v818
      %v829 = vunpack.c.l.b16 %v819
      %v830 = vpack.c.b16 %v390, %v826
      %v831 = vpack.c.b16 %v828, %v827
      %v832 = vpack.c.b16 %v829, %v829
      %v834 = vunpack.c.l.b16 %v820
      %v835 = vpack.c.b16 %v834, %v834
      %v837 = vshrl.u32 %v830, 16
      %v839 = vshll.u32 %v830, 16
      %v841 = vrot.slane %v839, 1
      %v842 = vor.u32 %v837, %v841
      %v843 = vsel %vm444, %v842, %v463
      %v845 = vshll.u32 %v831, 16
      %v847 = vrot.slane %v845, 1
      %v848 = vsel %vm444, %v587, %v847
      %v849 = vshrl.u32 %v831, 16
      %v851 = vor.u32 %v849, %v847
      %v853 = vshll.u32 %v835, 16
      %v855 = vrot.slane %v853, 1
      %v856 = vsel %vm444, %v851, %v855
      %v857 = vshrl.u32 %v835, 16
      %v859 = vor.u32 %v857, %v855
      %860 = vrot.lane.b32.xlu0 %v843, 48
      %v861 = vpop.permute.xlu0 %860
      %862 = vrot.lane.b32.xlu0 %v848, 48
      %v863 = vpop.permute.xlu0 %862
      %864 = vrot.lane.b32.xlu0 %v856, 48
      %v865 = vpop.permute.xlu0 %864
      %866 = vrot.lane.b32.xlu0 %v859, 48
      %v867 = vpop.permute.xlu0 %866
      %v869 = vunpack.c.l.b16 %v821
      %v870 = vpack.c.b16 %v390, %v869
      %v871 = vrot.slane %v870, 1
      %v872 = vsel %vm632, %v871, %v636
      %v873 = vrot.slane %v831, 1
      %v874 = vsel %vm632, %v666, %v873
      %v875 = vrot.slane %v835, 1
      %v876 = vsel %vm632, %v873, %v875
      %877 = vrot.lane.b32.xlu0 %v872, 96
      %v878 = vpop.permute.xlu0 %877
      %879 = vrot.lane.b32.xlu0 %v874, 96
      %v880 = vpop.permute.xlu0 %879
      %881 = vrot.lane.b32.xlu0 %v876, 96
      %v882 = vpop.permute.xlu0 %881
      %883 = vrot.lane.b32.xlu0 %v875, 96
      %v884 = vpop.permute.xlu0 %883
      %v886 = vsel %vm706, %v830, %v861
      %v888 = vsel %vm706, %v440, %v863
      %v890 = vsel %vm706, %v831, %v865
      %v893 = vsel %vm706, %v832, %v867
      %v895 = vsel %vm743, %v886, %v878
      %v897 = vsel %vm743, %v888, %v880
      %v899 = vsel %vm743, %v890, %v882
      %v901 = vsel %vm743, %v893, %v884
      %s902 = scalar_lea.vmem %s4, 72
      %v903 = vld [vmem:[%s902] sm:$0xf]
      %v904 = vld [vmem:[%s902 + $0x4] sm:$0xf]
      %v905 = vld [vmem:[%s902 + $0x8] sm:$0xf]
      %v906 = vld [vmem:[%s902 + $0xc] sm:$0xf]
      %v907 = vld [vmem:[%s902 + $0x10] sm:$0xf]
      %v908 = vld [vmem:[%s902 + $0x14] sm:$0xf]
      %v909 = vld [vmem:[%s902 + $0x18] sm:$0xf]
      %v910 = vld [vmem:[%s902 + $0x1c] sm:$0xf]
      %v911 = vld [vmem:[%s902 + $0x20] sm:$0xf]
      %v912 = vld [vmem:[%s902 + $0x24] sm:$0xf]
      %v913 = vld [vmem:[%s902 + $0x28] sm:$0xf]
      %v914 = vld [vmem:[%s902 + $0x2c] sm:$0xf]
      %v915 = vld [vmem:[%s902 + $0x30] sm:$0xf]
      %v916 = vld [vmem:[%s902 + $0x34] sm:$0xf]
      %v917 = vld [vmem:[%s902 + $0x38] sm:$0xf]
      %v918 = vld [vmem:[%s902 + $0x3c] sm:$0xf]
      %v919 = vld [vmem:[%s902 + $0x40] sm:$0xf]
      %v920 = vld [vmem:[%s902 + $0x44] sm:$0xf]
      %v940 = vrot.slane %v895, 1
      %v941 = vrot.slane %v751, 1
      %v942 = vsel %vm632, %v940, %v941
      %v943 = vrot.slane %v878, 1
      %v944 = vrot.slane %v675, 1
      %v945 = vsel %vm632, %v943, %v944
      %v946 = vrot.slane %v754, 1
      %v947 = vsel %vm632, %v941, %v946
      %v948 = vrot.slane %v677, 1
      %v949 = vsel %vm632, %v944, %v948
      %v950 = vrot.slane %v757, 1
      %v951 = vsel %vm632, %v946, %v950
      %v952 = vrot.slane %v679, 1
      %v953 = vsel %vm632, %v948, %v952
      %v954 = vrot.slane %v760, 1
      %v955 = vsel %vm632, %v950, %v954
      %v956 = vrot.slane %v681, 1
      %v957 = vsel %vm632, %v952, %v956
      %v958 = vrot.slane %v763, 1
      %v959 = vsel %vm632, %v954, %v958
      %v960 = vrot.slane %v683, 1
      %v961 = vsel %vm632, %v956, %v960
      %v962 = vrot.slane %v766, 1
      %v963 = vsel %vm632, %v958, %v962
      %v964 = vrot.slane %v685, 1
      %v965 = vsel %vm632, %v960, %v964
      %v966 = vrot.slane %v769, 1
      %v967 = vsel %vm632, %v962, %v966
      %v968 = vrot.slane %v687, 1
      %v969 = vsel %vm632, %v964, %v968
      %v970 = vrot.slane %v772, 1
      %v971 = vsel %vm632, %v966, %v970
      %v972 = vrot.slane %v689, 1
      %v973 = vsel %vm632, %v968, %v972
      %v974 = vrot.slane %v775, 1
      %v975 = vsel %vm632, %v970, %v974
      %v976 = vrot.slane %v691, 1
      %v977 = vsel %vm632, %v972, %v976
      %v978 = vrot.slane %v778, 1
      %v979 = vsel %vm632, %v974, %v978
      %v980 = vrot.slane %v693, 1
      %v981 = vsel %vm632, %v976, %v980
      %v982 = vrot.slane %v781, 1
      %v983 = vsel %vm632, %v978, %v982
      %v984 = vrot.slane %v695, 1
      %v985 = vsel %vm632, %v980, %v984
      %v986 = vrot.slane %v784, 1
      %v987 = vsel %vm632, %v982, %v986
      %v988 = vrot.slane %v697, 1
      %v989 = vsel %vm632, %v984, %v988
      %v990 = vrot.slane %v787, 1
      %v991 = vsel %vm632, %v986, %v990
      %v992 = vrot.slane %v699, 1
      %v993 = vsel %vm632, %v988, %v992
      %v994 = vrot.slane %v790, 1
      %v995 = vsel %vm632, %v990, %v994
      %v996 = vrot.slane %v701, 1
      %v997 = vsel %vm632, %v992, %v996
      %v998 = vrot.slane %v793, 1
      %v999 = vsel %vm632, %v994, %v998
      %v1000 = vrot.slane %v703, 1
      %v1001 = vsel %vm632, %v996, %v1000
      %v1002 = vrot.slane %v897, 1
      %v1003 = vsel %vm632, %v998, %v1002
      %v1004 = vrot.slane %v880, 1
      %v1005 = vsel %vm632, %v1000, %v1004
      %v1006 = vrot.slane %v899, 1
      %v1007 = vsel %vm632, %v1002, %v1006
      %v1008 = vrot.slane %v882, 1
      %v1009 = vsel %vm632, %v1004, %v1008
      %v1010 = vrot.slane %v901, 1
      %v1011 = vsel %vm632, %v1006, %v1010
      %v1012 = vrot.slane %v884, 1
      %v1013 = vsel %vm632, %v1008, %v1012
      %v1050 = vunpack.c.l.b16 %v903
      %v1051 = vunpack.c.l.b16 %v904
      %v1052 = vunpack.c.l.b16 %v905
      %v1053 = vunpack.c.l.b16 %v906
      %v1054 = vunpack.c.l.b16 %v907
      %v1055 = vunpack.c.l.b16 %v908
      %v1056 = vunpack.c.l.b16 %v909
      %v1057 = vunpack.c.l.b16 %v910
      %v1058 = vunpack.c.l.b16 %v911
      %v1059 = vunpack.c.l.b16 %v912
      %v1060 = vunpack.c.l.b16 %v913
      %v1061 = vunpack.c.l.b16 %v914
      %v1062 = vunpack.c.l.b16 %v915
      %v1063 = vunpack.c.l.b16 %v916
      %v1064 = vunpack.c.l.b16 %v917
      %v1065 = vunpack.c.l.b16 %v918
      %v1066 = vunpack.c.l.b16 %v919
      %v1067 = vunpack.c.l.b16 %v920
      %v1068 = vpack.c.b16 %v1051, %v1050
      %v1069 = vpack.c.b16 %v1053, %v1052
      %v1070 = vpack.c.b16 %v1055, %v1054
      %v1071 = vpack.c.b16 %v1057, %v1056
      %v1072 = vpack.c.b16 %v1059, %v1058
      %v1073 = vpack.c.b16 %v1061, %v1060
      %v1074 = vpack.c.b16 %v1063, %v1062
      %v1075 = vpack.c.b16 %v1065, %v1064
      %v1076 = vpack.c.b16 %v1067, %v1066
      %vm1086 = vcmask 130048
      %v1088 = vsel %vm1086, %v945, 0
      %v1091 = vsel %vm1086, %v949, 0
      %v1094 = vsel %vm1086, %v953, 0
      %v1097 = vsel %vm1086, %v957, 0
      %v1100 = vsel %vm1086, %v961, 0
      %v1103 = vsel %vm1086, %v965, 0
      %v1106 = vsel %vm1086, %v969, 0
      %v1109 = vsel %vm1086, %v973, 0
      %v1112 = vsel %vm1086, %v977, 0
      %v1115 = vsel %vm1086, %v981, 0
      %v1118 = vsel %vm1086, %v985, 0
      %v1121 = vsel %vm1086, %v989, 0
      %v1124 = vsel %vm1086, %v993, 0
      %v1127 = vsel %vm1086, %v997, 0
      %v1130 = vsel %vm1086, %v1001, 0
      %v1133 = vsel %vm1086, %v1005, 0
      %v1136 = vsel %vm1086, %v1009, 0
      %v1139 = vsel %vm1086, %v1013, 0
      %1141 = vmatprep.subr.bf16.mxu0 0
      %1142 = vmatpush1.bf16.msra.mxu0 %v1068
      %1143 = vmatprep.subr.bf16.mxu0 0
      %1144 = vmatpush1.bf16.msra.mxu0 %v1069
      %1145 = vmatprep.subr.bf16.mxu0 0
      %1146 = vmatpush1.bf16.msra.mxu0 %v1070
      %1147 = vmatprep.subr.bf16.mxu0 0
      %1148 = vmatpush1.bf16.msra.mxu0 %v1071
      %1149 = vmatprep.subr.bf16.mxu0 0
      %1150 = vmatpush1.bf16.msra.mxu0 %v1072
      %1151 = vmatprep.subr.bf16.mxu0 0
      %1152 = vmatpush1.bf16.msra.mxu0 %v1073
      %1153 = vmatprep.subr.bf16.mxu0 0
      %1154 = vmatpush1.bf16.msra.mxu0 %v1074
      %1155 = vmatprep.subr.bf16.mxu0 0
      %1156 = vmatpush1.bf16.msra.mxu0 %v1075
      %1157 = vmatprep.subr.bf16.mxu0 0
      %1158 = vmatpush1.bf16.msra.mxu0 %v1076
      %1159 = vmatprep.subr.bf16.mxu0 0
      %1160 = vmatpush1.bf16.msra.mxu0 0
      %1161 = vmatprep.subr.bf16.mxu0 0
      %1162 = vmatpush1.bf16.msra.mxu0 0
      %1163 = vmatprep.subr.bf16.mxu0 0
      %1164 = vmatpush1.bf16.msra.mxu0 0
      %1165 = vmatprep.subr.bf16.mxu0 0
      %1166 = vmatpush1.bf16.msra.mxu0 0
      %1167 = vmatprep.subr.bf16.mxu0 0
      %1168 = vmatpush1.bf16.msra.mxu0 0
      %1169 = vmatprep.subr.bf16.mxu0 0
      %1170 = vmatpush1.bf16.msra.mxu0 0
      %1171 = vmatprep.subr.bf16.mxu0 0
      %1172 = vmatpush1.bf16.msra.mxu0 0
      %1173 = vmatprep.mubr.bf16.mxu0 %v1088
      %1174 = vmatmul.mubr.bf16.gmra.mrb[0].mxu0 %v942
      %v1175 = vpop.f32.mrb[0].mxu0
      %v1176 = vadd.f32 0.0, %v1175
      %v1177 = vpop.f32.mrb[0].mxu0
      %v1178 = vpop.f32.mrb[0].mxu0
      %v1179 = vadd.f32 0.0, %v1178
      %v1180 = vpop.f32.mrb[0].mxu0
      %1181 = vmatprep.mubr.bf16.mxu0 %v1091
      %1182 = vmatmul.mubr.bf16.gmra.mrb[0].mxu0 %v947
      %v1183 = vpop.f32.mrb[0].mxu0
      %v1184 = vadd.f32 0.0, %v1183
      %v1185 = vpop.f32.mrb[0].mxu0
      %v1186 = vpop.f32.mrb[0].mxu0
      %v1187 = vadd.f32 0.0, %v1186
      %v1188 = vpop.f32.mrb[0].mxu0
      %1189 = vmatprep.mubr.bf16.mxu0 %v1094
      %1190 = vmatmul.mubr.bf16.gmra.mrb[0].mxu0 %v951
      %v1191 = vpop.f32.mrb[0].mxu0
      %v1192 = vadd.f32 0.0, %v1191
      %v1193 = vpop.f32.mrb[0].mxu0
      %v1194 = vpop.f32.mrb[0].mxu0
      %v1195 = vadd.f32 0.0, %v1194
      %v1196 = vpop.f32.mrb[0].mxu0
      %1197 = vmatprep.mubr.bf16.mxu0 %v1097
      %1198 = vmatmul.mubr.bf16.gmra.mrb[0].mxu0 %v955
      %v1199 = vpop.f32.mrb[0].mxu0
      %v1200 = vadd.f32 0.0, %v1199
      %v1201 = vpop.f32.mrb[0].mxu0
      %v1202 = vpop.f32.mrb[0].mxu0
      %v1203 = vadd.f32 0.0, %v1202
      %v1204 = vpop.f32.mrb[0].mxu0
      %1205 = vmatprep.mubr.bf16.mxu0 %v1100
      %1206 = vmatmul.mubr.bf16.gmra.mrb[0].mxu0 %v959
      %v1207 = vpop.f32.mrb[0].mxu0
      %v1208 = vadd.f32 0.0, %v1207
      %v1209 = vpop.f32.mrb[0].mxu0
      %v1210 = vpop.f32.mrb[0].mxu0
      %v1211 = vadd.f32 0.0, %v1210
      %v1212 = vpop.f32.mrb[0].mxu0
      %1213 = vmatprep.mubr.bf16.mxu0 %v1103
      %1214 = vmatmul.mubr.bf16.gmra.mrb[0].mxu0 %v963
      %v1215 = vpop.f32.mrb[0].mxu0
      %v1216 = vadd.f32 0.0, %v1215
      %v1217 = vpop.f32.mrb[0].mxu0
      %v1218 = vpop.f32.mrb[0].mxu0
      %v1219 = vadd.f32 0.0, %v1218
      %v1220 = vpop.f32.mrb[0].mxu0
      %1221 = vmatprep.mubr.bf16.mxu0 %v1106
      %1222 = vmatmul.mubr.bf16.gmra.mrb[0].mxu0 %v967
      %v1223 = vpop.f32.mrb[0].mxu0
      %v1224 = vadd.f32 0.0, %v1223
      %v1225 = vpop.f32.mrb[0].mxu0
      %v1226 = vpop.f32.mrb[0].mxu0
      %v1227 = vadd.f32 0.0, %v1226
      %v1228 = vpop.f32.mrb[0].mxu0
      %1229 = vmatprep.mubr.bf16.mxu0 %v1109
      %1230 = vmatmul.mubr.bf16.gmra.mrb[0].mxu0 %v971
      %v1231 = vpop.f32.mrb[0].mxu0
      %v1232 = vadd.f32 0.0, %v1231
      %v1233 = vpop.f32.mrb[0].mxu0
      %v1234 = vpop.f32.mrb[0].mxu0
      %v1235 = vadd.f32 0.0, %v1234
      %v1236 = vpop.f32.mrb[0].mxu0
      %1237 = vmatprep.mubr.bf16.mxu0 %v1112
      %1238 = vmatmul.mubr.bf16.gmra.mrb[0].mxu0 %v975
      %v1239 = vpop.f32.mrb[0].mxu0
      %v1240 = vadd.f32 0.0, %v1239
      %v1241 = vpop.f32.mrb[0].mxu0
      %v1242 = vpop.f32.mrb[0].mxu0
      %v1243 = vadd.f32 0.0, %v1242
      %v1244 = vpop.f32.mrb[0].mxu0
      %1245 = vmatprep.mubr.bf16.mxu0 %v1115
      %1246 = vmatmul.mubr.bf16.gmra.mrb[0].mxu0 %v979
      %v1247 = vpop.f32.mrb[0].mxu0
      %v1248 = vadd.f32 0.0, %v1247
      %v1249 = vpop.f32.mrb[0].mxu0
      %v1250 = vpop.f32.mrb[0].mxu0
      %v1251 = vadd.f32 0.0, %v1250
      %v1252 = vpop.f32.mrb[0].mxu0
      %1253 = vmatprep.mubr.bf16.mxu0 %v1118
      %1254 = vmatmul.mubr.bf16.gmra.mrb[0].mxu0 %v983
      %v1255 = vpop.f32.mrb[0].mxu0
      %v1256 = vadd.f32 0.0, %v1255
      %v1257 = vpop.f32.mrb[0].mxu0
      %v1258 = vpop.f32.mrb[0].mxu0
      %v1259 = vadd.f32 0.0, %v1258
      %v1260 = vpop.f32.mrb[0].mxu0
      %1261 = vmatprep.mubr.bf16.mxu0 %v1121
      %1262 = vmatmul.mubr.bf16.gmra.mrb[0].mxu0 %v987
      %v1263 = vpop.f32.mrb[0].mxu0
      %v1264 = vadd.f32 0.0, %v1263
      %v1265 = vpop.f32.mrb[0].mxu0
      %v1266 = vpop.f32.mrb[0].mxu0
      %v1267 = vadd.f32 0.0, %v1266
      %v1268 = vpop.f32.mrb[0].mxu0
      %1269 = vmatprep.mubr.bf16.mxu0 %v1124
      %1270 = vmatmul.mubr.bf16.gmra.mrb[0].mxu0 %v991
      %v1271 = vpop.f32.mrb[0].mxu0
      %v1272 = vadd.f32 0.0, %v1271
      %v1273 = vpop.f32.mrb[0].mxu0
      %v1274 = vpop.f32.mrb[0].mxu0
      %v1275 = vadd.f32 0.0, %v1274
      %v1276 = vpop.f32.mrb[0].mxu0
      %1277 = vmatprep.mubr.bf16.mxu0 %v1127
      %1278 = vmatmul.mubr.bf16.gmra.mrb[0].mxu0 %v995
      %v1279 = vpop.f32.mrb[0].mxu0
      %v1280 = vadd.f32 0.0, %v1279
      %v1281 = vpop.f32.mrb[0].mxu0
      %v1282 = vpop.f32.mrb[0].mxu0
      %v1283 = vadd.f32 0.0, %v1282
      %v1284 = vpop.f32.mrb[0].mxu0
      %1285 = vmatprep.mubr.bf16.mxu0 %v1130
      %1286 = vmatmul.mubr.bf16.gmra.mrb[0].mxu0 %v999
      %v1287 = vpop.f32.mrb[0].mxu0
      %v1288 = vadd.f32 0.0, %v1287
      %v1289 = vpop.f32.mrb[0].mxu0
      %v1290 = vpop.f32.mrb[0].mxu0
      %v1291 = vadd.f32 0.0, %v1290
      %v1292 = vpop.f32.mrb[0].mxu0
      %1293 = vmatprep.mubr.bf16.mxu0 %v1133
      %1294 = vmatmul.mubr.bf16.gmra.mrb[0].mxu0 %v1003
      %v1295 = vpop.f32.mrb[0].mxu0
      %v1296 = vadd.f32 0.0, %v1295
      %v1297 = vpop.f32.mrb[0].mxu0
      %v1298 = vpop.f32.mrb[0].mxu0
      %v1299 = vadd.f32 0.0, %v1298
      %v1300 = vpop.f32.mrb[0].mxu0
      %1301 = vmatprep.mubr.bf16.mxu0 %v1136
      %1302 = vmatmul.mubr.bf16.gmra.mrb[0].mxu0 %v1007
      %v1303 = vpop.f32.mrb[0].mxu0
      %v1304 = vadd.f32 0.0, %v1303
      %v1305 = vpop.f32.mrb[0].mxu0
      %v1306 = vpop.f32.mrb[0].mxu0
      %v1307 = vadd.f32 0.0, %v1306
      %v1308 = vpop.f32.mrb[0].mxu0
      %1309 = vmatprep.mubr.bf16.mxu0 %v1139
      %1310 = vmatmul.mubr.bf16.gmra.mrb[0].mxu0 %v1011
      %v1311 = vpop.f32.mrb[0].mxu0
      %v1312 = vadd.f32 0.0, %v1311
      %v1313 = vpop.f32.mrb[0].mxu0
      %v1314 = vpop.f32.mrb[0].mxu0
      %v1315 = vadd.f32 0.0, %v1314
      %v1316 = vpop.f32.mrb[0].mxu0
      %1317 = vdwg.mxu0
      %v1336 = vunpack.c.l.b16 %v798
      %v1337 = vunpack.c.l.b16 %v799
      %v1338 = vunpack.c.l.b16 %v800
      %v1339 = vunpack.c.l.b16 %v801
      %v1340 = vunpack.c.l.b16 %v802
      %v1341 = vunpack.c.l.b16 %v803
      %v1342 = vunpack.c.l.b16 %v804
      %v1343 = vunpack.c.l.b16 %v805
      %v1344 = vunpack.c.l.b16 %v806
      %v1345 = vunpack.c.l.b16 %v807
      %v1346 = vunpack.c.l.b16 %v808
      %v1347 = vunpack.c.l.b16 %v809
      %v1348 = vunpack.c.l.b16 %v810
      %v1349 = vunpack.c.l.b16 %v811
      %v1350 = vunpack.c.l.b16 %v812
      %v1351 = vunpack.c.l.b16 %v813
      %v1352 = vunpack.c.l.b16 %v814
      %v1353 = vunpack.c.l.b16 %v815
      %v1354 = vpack.c.b16 %v1337, %v1336
      %v1355 = vpack.c.b16 %v1339, %v1338
      %v1356 = vpack.c.b16 %v1341, %v1340
      %v1357 = vpack.c.b16 %v1343, %v1342
      %v1358 = vpack.c.b16 %v1345, %v1344
      %v1359 = vpack.c.b16 %v1347, %v1346
      %v1360 = vpack.c.b16 %v1349, %v1348
      %v1361 = vpack.c.b16 %v1351, %v1350
      %v1362 = vpack.c.b16 %v1353, %v1352
      %v1372 = vsel %vm1086, %v671, 0
      %v1374 = vsel %vm1086, %v673, 0
      %v1376 = vsel %vm1086, %v675, 0
      %v1378 = vsel %vm1086, %v677, 0
      %v1380 = vsel %vm1086, %v679, 0
      %v1382 = vsel %vm1086, %v681, 0
      %v1384 = vsel %vm1086, %v683, 0
      %v1386 = vsel %vm1086, %v685, 0
      %v1388 = vsel %vm1086, %v687, 0
      %v1390 = vsel %vm1086, %v689, 0
      %v1392 = vsel %vm1086, %v691, 0
      %v1394 = vsel %vm1086, %v693, 0
      %v1396 = vsel %vm1086, %v695, 0
      %v1398 = vsel %vm1086, %v697, 0
      %v1400 = vsel %vm1086, %v699, 0
      %v1402 = vsel %vm1086, %v701, 0
      %v1404 = vsel %vm1086, %v703, 0
      %v1406 = vsel %vm1086, %v705, 0
      %1408 = vmatprep.subr.bf16.mxu0 0
      %1409 = vmatpush1.bf16.msra.mxu0 %v1354
      %1410 = vmatprep.subr.bf16.mxu0 0
      %1411 = vmatpush1.bf16.msra.mxu0 %v1355
      %1412 = vmatprep.subr.bf16.mxu0 0
      %1413 = vmatpush1.bf16.msra.mxu0 %v1356
      %1414 = vmatprep.subr.bf16.mxu0 0
      %1415 = vmatpush1.bf16.msra.mxu0 %v1357
      %1416 = vmatprep.subr.bf16.mxu0 0
      %1417 = vmatpush1.bf16.msra.mxu0 %v1358
      %1418 = vmatprep.subr.bf16.mxu0 0
      %1419 = vmatpush1.bf16.msra.mxu0 %v1359
      %1420 = vmatprep.subr.bf16.mxu0 0
      %1421 = vmatpush1.bf16.msra.mxu0 %v1360
      %1422 = vmatprep.subr.bf16.mxu0 0
      %1423 = vmatpush1.bf16.msra.mxu0 %v1361
      %1424 = vmatprep.subr.bf16.mxu0 0
      %1425 = vmatpush1.bf16.msra.mxu0 %v1362
      %1426 = vmatprep.subr.bf16.mxu0 0
      %1427 = vmatpush1.bf16.msra.mxu0 0
      %1428 = vmatprep.subr.bf16.mxu0 0
      %1429 = vmatpush1.bf16.msra.mxu0 0
      %1430 = vmatprep.subr.bf16.mxu0 0
      %1431 = vmatpush1.bf16.msra.mxu0 0
      %1432 = vmatprep.subr.bf16.mxu0 0
      %1433 = vmatpush1.bf16.msra.mxu0 0
      %1434 = vmatprep.subr.bf16.mxu0 0
      %1435 = vmatpush1.bf16.msra.mxu0 0
      %1436 = vmatprep.subr.bf16.mxu0 0
      %1437 = vmatpush1.bf16.msra.mxu0 0
      %1438 = vmatprep.subr.bf16.mxu0 0
      %1439 = vmatpush1.bf16.msra.mxu0 0
      %1440 = vmatprep.mubr.bf16.mxu0 %v1372
      %1441 = vmatmul.mubr.bf16.gmra.mrb[0].mxu0 %v745
      %v1442 = vpop.f32.mrb[0].mxu0
      %v1443 = vadd.f32 %v1176, %v1442
      %v1444 = vpop.f32.mrb[0].mxu0
      %v1445 = vpop.f32.mrb[0].mxu0
      %v1446 = vadd.f32 %v1179, %v1445
      %v1447 = vpop.f32.mrb[0].mxu0
      %1448 = vmatprep.mubr.bf16.mxu0 %v1374
      %1449 = vmatmul.mubr.bf16.gmra.mrb[0].mxu0 %v748
      %v1450 = vpop.f32.mrb[0].mxu0
      %v1451 = vadd.f32 %v1184, %v1450
      %v1452 = vpop.f32.mrb[0].mxu0
      %v1453 = vpop.f32.mrb[0].mxu0
      %v1454 = vadd.f32 %v1187, %v1453
      %v1455 = vpop.f32.mrb[0].mxu0
      %1456 = vmatprep.mubr.bf16.mxu0 %v1376
      %1457 = vmatmul.mubr.bf16.gmra.mrb[0].mxu0 %v751
      %v1458 = vpop.f32.mrb[0].mxu0
      %v1459 = vadd.f32 %v1192, %v1458
      %v1460 = vpop.f32.mrb[0].mxu0
      %v1461 = vpop.f32.mrb[0].mxu0
      %v1462 = vadd.f32 %v1195, %v1461
      %v1463 = vpop.f32.mrb[0].mxu0
      %1464 = vmatprep.mubr.bf16.mxu0 %v1378
      %1465 = vmatmul.mubr.bf16.gmra.mrb[0].mxu0 %v754
      %v1466 = vpop.f32.mrb[0].mxu0
      %v1467 = vadd.f32 %v1200, %v1466
      %v1468 = vpop.f32.mrb[0].mxu0
      %v1469 = vpop.f32.mrb[0].mxu0
      %v1470 = vadd.f32 %v1203, %v1469
      %v1471 = vpop.f32.mrb[0].mxu0
      %1472 = vmatprep.mubr.bf16.mxu0 %v1380
      %1473 = vmatmul.mubr.bf16.gmra.mrb[0].mxu0 %v757
      %v1474 = vpop.f32.mrb[0].mxu0
      %v1475 = vadd.f32 %v1208, %v1474
      %v1476 = vpop.f32.mrb[0].mxu0
      %v1477 = vpop.f32.mrb[0].mxu0
      %v1478 = vadd.f32 %v1211, %v1477
      %v1479 = vpop.f32.mrb[0].mxu0
      %1480 = vmatprep.mubr.bf16.mxu0 %v1382
      %1481 = vmatmul.mubr.bf16.gmra.mrb[0].mxu0 %v760
      %v1482 = vpop.f32.mrb[0].mxu0
      %v1483 = vadd.f32 %v1216, %v1482
      %v1484 = vpop.f32.mrb[0].mxu0
      %v1485 = vpop.f32.mrb[0].mxu0
      %v1486 = vadd.f32 %v1219, %v1485
      %v1487 = vpop.f32.mrb[0].mxu0
      %1488 = vmatprep.mubr.bf16.mxu0 %v1384
      %1489 = vmatmul.mubr.bf16.gmra.mrb[0].mxu0 %v763
      %v1490 = vpop.f32.mrb[0].mxu0
      %v1491 = vadd.f32 %v1224, %v1490
      %v1492 = vpop.f32.mrb[0].mxu0
      %v1493 = vpop.f32.mrb[0].mxu0
      %v1494 = vadd.f32 %v1227, %v1493
      %v1495 = vpop.f32.mrb[0].mxu0
      %1496 = vmatprep.mubr.bf16.mxu0 %v1386
      %1497 = vmatmul.mubr.bf16.gmra.mrb[0].mxu0 %v766
      %v1498 = vpop.f32.mrb[0].mxu0
      %v1499 = vadd.f32 %v1232, %v1498
      %v1500 = vpop.f32.mrb[0].mxu0
      %v1501 = vpop.f32.mrb[0].mxu0
      %v1502 = vadd.f32 %v1235, %v1501
      %v1503 = vpop.f32.mrb[0].mxu0
      %1504 = vmatprep.mubr.bf16.mxu0 %v1388
      %1505 = vmatmul.mubr.bf16.gmra.mrb[0].mxu0 %v769
      %v1506 = vpop.f32.mrb[0].mxu0
      %v1507 = vadd.f32 %v1240, %v1506
      %v1508 = vpop.f32.mrb[0].mxu0
      %v1509 = vpop.f32.mrb[0].mxu0
      %v1510 = vadd.f32 %v1243, %v1509
      %v1511 = vpop.f32.mrb[0].mxu0
      %1512 = vmatprep.mubr.bf16.mxu0 %v1390
      %1513 = vmatmul.mubr.bf16.gmra.mrb[0].mxu0 %v772
      %v1514 = vpop.f32.mrb[0].mxu0
      %v1515 = vadd.f32 %v1248, %v1514
      %v1516 = vpop.f32.mrb[0].mxu0
      %v1517 = vpop.f32.mrb[0].mxu0
      %v1518 = vadd.f32 %v1251, %v1517
      %v1519 = vpop.f32.mrb[0].mxu0
      %1520 = vmatprep.mubr.bf16.mxu0 %v1392
      %1521 = vmatmul.mubr.bf16.gmra.mrb[0].mxu0 %v775
      %v1522 = vpop.f32.mrb[0].mxu0
      %v1523 = vadd.f32 %v1256, %v1522
      %v1524 = vpop.f32.mrb[0].mxu0
      %v1525 = vpop.f32.mrb[0].mxu0
      %v1526 = vadd.f32 %v1259, %v1525
      %v1527 = vpop.f32.mrb[0].mxu0
      %1528 = vmatprep.mubr.bf16.mxu0 %v1394
      %1529 = vmatmul.mubr.bf16.gmra.mrb[0].mxu0 %v778
      %v1530 = vpop.f32.mrb[0].mxu0
      %v1531 = vadd.f32 %v1264, %v1530
      %v1532 = vpop.f32.mrb[0].mxu0
      %v1533 = vpop.f32.mrb[0].mxu0
      %v1534 = vadd.f32 %v1267, %v1533
      %v1535 = vpop.f32.mrb[0].mxu0
      %1536 = vmatprep.mubr.bf16.mxu0 %v1396
      %1537 = vmatmul.mubr.bf16.gmra.mrb[0].mxu0 %v781
      %v1538 = vpop.f32.mrb[0].mxu0
      %v1539 = vadd.f32 %v1272, %v1538
      %v1540 = vpop.f32.mrb[0].mxu0
      %v1541 = vpop.f32.mrb[0].mxu0
      %v1542 = vadd.f32 %v1275, %v1541
      %v1543 = vpop.f32.mrb[0].mxu0
      %1544 = vmatprep.mubr.bf16.mxu0 %v1398
      %1545 = vmatmul.mubr.bf16.gmra.mrb[0].mxu0 %v784
      %v1546 = vpop.f32.mrb[0].mxu0
      %v1547 = vadd.f32 %v1280, %v1546
      %v1548 = vpop.f32.mrb[0].mxu0
      %v1549 = vpop.f32.mrb[0].mxu0
      %v1550 = vadd.f32 %v1283, %v1549
      %v1551 = vpop.f32.mrb[0].mxu0
      %1552 = vmatprep.mubr.bf16.mxu0 %v1400
      %1553 = vmatmul.mubr.bf16.gmra.mrb[0].mxu0 %v787
      %v1554 = vpop.f32.mrb[0].mxu0
      %v1555 = vadd.f32 %v1288, %v1554
      %v1556 = vpop.f32.mrb[0].mxu0
      %v1557 = vpop.f32.mrb[0].mxu0
      %v1558 = vadd.f32 %v1291, %v1557
      %v1559 = vpop.f32.mrb[0].mxu0
      %1560 = vmatprep.mubr.bf16.mxu0 %v1402
      %1561 = vmatmul.mubr.bf16.gmra.mrb[0].mxu0 %v790
      %v1562 = vpop.f32.mrb[0].mxu0
      %v1563 = vadd.f32 %v1296, %v1562
      %v1564 = vpop.f32.mrb[0].mxu0
      %v1565 = vpop.f32.mrb[0].mxu0
      %v1566 = vadd.f32 %v1299, %v1565
      %v1567 = vpop.f32.mrb[0].mxu0
      %1568 = vmatprep.mubr.bf16.mxu0 %v1404
      %1569 = vmatmul.mubr.bf16.gmra.mrb[0].mxu0 %v793
      %v1570 = vpop.f32.mrb[0].mxu0
      %v1571 = vadd.f32 %v1304, %v1570
      %v1572 = vpop.f32.mrb[0].mxu0
      %v1573 = vpop.f32.mrb[0].mxu0
      %v1574 = vadd.f32 %v1307, %v1573
      %v1575 = vpop.f32.mrb[0].mxu0
      %1576 = vmatprep.mubr.bf16.mxu0 %v1406
      %1577 = vmatmul.mubr.bf16.gmra.mrb[0].mxu0 %v796
      %v1578 = vpop.f32.mrb[0].mxu0
      %v1579 = vadd.f32 %v1312, %v1578
      %v1580 = vpop.f32.mrb[0].mxu0
      %v1581 = vpop.f32.mrb[0].mxu0
      %v1582 = vadd.f32 %v1315, %v1581
      %v1583 = vpop.f32.mrb[0].mxu0
      %1584 = vdwg.mxu0
      %v1585 = vld [vmem:[%s291 + $0x10] sm:$0xc]
      %v1586 = vld [vmem:[%s291 + $0x14] sm:$0xf]
      %v1587 = vld [vmem:[%s291 + $0x18] sm:$0xf]
      %v1588 = vld [vmem:[%s291 + $0x1c] sm:$0xf]
      %v1589 = vld [vmem:[%s291 + $0x20] sm:$0xf]
      %v1590 = vld [vmem:[%s291 + $0x24] sm:$0xf]
      %v1591 = vld [vmem:[%s291 + $0x28] sm:$0xf]
      %v1592 = vld [vmem:[%s291 + $0x2c] sm:$0xf]
      %v1593 = vld [vmem:[%s291 + $0x30] sm:$0xf]
      %v1594 = vld [vmem:[%s291 + $0x34] sm:$0xf]
      %v1595 = vld [vmem:[%s291 + $0x38] sm:$0xf]
      %v1596 = vld [vmem:[%s291 + $0x3c] sm:$0xf]
      %v1597 = vld [vmem:[%s291 + $0x40] sm:$0xf]
      %v1598 = vld [vmem:[%s291 + $0x44] sm:$0xf]
      %v1599 = vld [vmem:[%s291 + $0x48] sm:$0xf]
      %v1600 = vld [vmem:[%s291 + $0x4c] sm:$0xf]
      %v1601 = vld [vmem:[%s291 + $0x50] sm:$0xf]
      %v1602 = vld [vmem:[%s291 + $0x54] sm:$0xf]
      %v1603 = vld [vmem:[%s291 + $0x58] sm:$0xf]
      %v1604 = vld [vmem:[%s291 + $0x5c] sm:$0xf]
      %v1605 = vld [vmem:[%s291 + $0x60] sm:$0xf]
      %v1606 = vld [vmem:[%s291 + $0x64] sm:$0xf]
      %v1607 = vld [vmem:[%s291 + $0x68] sm:$0xf]
      %v1608 = vld [vmem:[%s291 + $0x6c] sm:$0xf]
      %v1609 = vld [vmem:[%s291 + $0x70] sm:$0xf]
      %v1610 = vld [vmem:[%s291 + $0x74] sm:$0xf]
      %v1611 = vld [vmem:[%s291 + $0x78] sm:$0xf]
      %v1612 = vld [vmem:[%s291 + $0x7c] sm:$0xf]
      %v1613 = vld [vmem:[%s291 + $0x80] sm:$0xf]
      %v1614 = vld [vmem:[%s291 + $0x84] sm:$0xf]
      %v1615 = vld [vmem:[%s291 + $0x88] sm:$0xf]
      %v1616 = vld [vmem:[%s291 + $0x8c] sm:$0xf]
      %v1617 = vld [vmem:[%s291 + $0x90] sm:$0xf]
      %v1618 = vld [vmem:[%s291 + $0x94] sm:$0xf]
      %v1619 = vld [vmem:[%s291 + $0x98] sm:$0xf]
      %v1620 = vld [vmem:[%s291 + $0x9c] sm:$0xf]
      %v1621 = vld [vmem:[%s291 + $0xa0] sm:$0x3]
      %v1622 = vld [vmem:[%s291 + $0xa0] sm:$0x7]
      %v1623 = vld [vmem:[%s291 + $0x10] sm:$0x8]
      %v1661 = vunpack.c.l.b16 %v1585
      %v1662 = vunpack.c.l.b16 %v1586
      %v1663 = vunpack.c.l.b16 %v1587
      %v1664 = vunpack.c.l.b16 %v1588
      %v1665 = vunpack.c.l.b16 %v1589
      %v1666 = vunpack.c.l.b16 %v1590
      %v1667 = vunpack.c.l.b16 %v1591
      %v1668 = vunpack.c.l.b16 %v1592
      %v1669 = vunpack.c.l.b16 %v1593
      %v1670 = vunpack.c.l.b16 %v1594
      %v1671 = vunpack.c.l.b16 %v1595
      %v1672 = vunpack.c.l.b16 %v1596
      %v1673 = vunpack.c.l.b16 %v1597
      %v1674 = vunpack.c.l.b16 %v1598
      %v1675 = vunpack.c.l.b16 %v1599
      %v1676 = vunpack.c.l.b16 %v1600
      %v1677 = vunpack.c.l.b16 %v1601
      %v1678 = vunpack.c.l.b16 %v1602
      %v1679 = vunpack.c.l.b16 %v1603
      %v1680 = vunpack.c.l.b16 %v1604
      %v1681 = vunpack.c.l.b16 %v1605
      %v1682 = vunpack.c.l.b16 %v1606
      %v1683 = vunpack.c.l.b16 %v1607
      %v1684 = vunpack.c.l.b16 %v1608
      %v1685 = vunpack.c.l.b16 %v1609
      %v1686 = vunpack.c.l.b16 %v1610
      %v1687 = vunpack.c.l.b16 %v1611
      %v1688 = vunpack.c.l.b16 %v1612
      %v1689 = vunpack.c.l.b16 %v1613
      %v1690 = vunpack.c.l.b16 %v1614
      %v1691 = vunpack.c.l.b16 %v1615
      %v1692 = vunpack.c.l.b16 %v1616
      %v1693 = vunpack.c.l.b16 %v1617
      %v1694 = vunpack.c.l.b16 %v1618
      %v1695 = vunpack.c.l.b16 %v1619
      %v1696 = vunpack.c.l.b16 %v1620
      %v1697 = vunpack.c.l.b16 %v1621
      %v1698 = vpack.c.b16 %v1662, %v1661
      %v1699 = vpack.c.b16 %v1664, %v1663
      %v1700 = vpack.c.b16 %v1666, %v1665
      %v1701 = vpack.c.b16 %v1668, %v1667
      %v1702 = vpack.c.b16 %v1670, %v1669
      %v1703 = vpack.c.b16 %v1672, %v1671
      %v1704 = vpack.c.b16 %v1674, %v1673
      %v1705 = vpack.c.b16 %v1676, %v1675
      %v1706 = vpack.c.b16 %v1678, %v1677
      %v1707 = vpack.c.b16 %v1680, %v1679
      %v1708 = vpack.c.b16 %v1682, %v1681
      %v1709 = vpack.c.b16 %v1684, %v1683
      %v1710 = vpack.c.b16 %v1686, %v1685
      %v1711 = vpack.c.b16 %v1688, %v1687
      %v1712 = vpack.c.b16 %v1690, %v1689
      %v1713 = vpack.c.b16 %v1692, %v1691
      %v1714 = vpack.c.b16 %v1694, %v1693
      %v1715 = vpack.c.b16 %v1696, %v1695
      %v1716 = vpack.c.b16 %v1697, %v1697
      %v1718 = vunpack.c.l.b16 %v1622
      %v1719 = vpack.c.b16 %v1718, %v1718
      %v1721 = vshrl.u32 %v1698, 16
      %v1723 = vshll.u32 %v1698, 16
      %v1725 = vrot.slane %v1723, 1
      %v1726 = vor.u32 %v1721, %v1725
      %v1728 = vshll.u32 %v1699, 16
      %v1730 = vrot.slane %v1728, 1
      %v1731 = vsel %vm444, %v1726, %v1730
      %v1732 = vshrl.u32 %v1699, 16
      %v1734 = vor.u32 %v1732, %v1730
      %v1736 = vshll.u32 %v1700, 16
      %v1738 = vrot.slane %v1736, 1
      %v1739 = vsel %vm444, %v1734, %v1738
      %v1740 = vshrl.u32 %v1700, 16
      %v1742 = vor.u32 %v1740, %v1738
      %v1744 = vshll.u32 %v1701, 16
      %v1746 = vrot.slane %v1744, 1
      %v1747 = vsel %vm444, %v1742, %v1746
      %v1748 = vshrl.u32 %v1701, 16
      %v1750 = vor.u32 %v1748, %v1746
      %v1752 = vshll.u32 %v1702, 16
      %v1754 = vrot.slane %v1752, 1
      %v1755 = vsel %vm444, %v1750, %v1754
      %v1756 = vshrl.u32 %v1702, 16
      %v1758 = vor.u32 %v1756, %v1754
      %v1760 = vshll.u32 %v1703, 16
      %v1762 = vrot.slane %v1760, 1
      %v1763 = vsel %vm444, %v1758, %v1762
      %v1764 = vshrl.u32 %v1703, 16
      %v1766 = vor.u32 %v1764, %v1762
      %v1768 = vshll.u32 %v1704, 16
      %v1770 = vrot.slane %v1768, 1
      %v1771 = vsel %vm444, %v1766, %v1770
      %v1772 = vshrl.u32 %v1704, 16
      %v1774 = vor.u32 %v1772, %v1770
      %v1776 = vshll.u32 %v1705, 16
      %v1778 = vrot.slane %v1776, 1
      %v1779 = vsel %vm444, %v1774, %v1778
      %v1780 = vshrl.u32 %v1705, 16
      %v1782 = vor.u32 %v1780, %v1778
      %v1784 = vshll.u32 %v1706, 16
      %v1786 = vrot.slane %v1784, 1
      %v1787 = vsel %vm444, %v1782, %v1786
      %v1788 = vshrl.u32 %v1706, 16
      %v1790 = vor.u32 %v1788, %v1786
      %v1792 = vshll.u32 %v1707, 16
      %v1794 = vrot.slane %v1792, 1
      %v1795 = vsel %vm444, %v1790, %v1794
      %v1796 = vshrl.u32 %v1707, 16
      %v1798 = vor.u32 %v1796, %v1794
      %v1800 = vshll.u32 %v1708, 16
      %v1802 = vrot.slane %v1800, 1
      %v1803 = vsel %vm444, %v1798, %v1802
      %v1804 = vshrl.u32 %v1708, 16
      %v1806 = vor.u32 %v1804, %v1802
      %v1808 = vshll.u32 %v1709, 16
      %v1810 = vrot.slane %v1808, 1
      %v1811 = vsel %vm444, %v1806, %v1810
      %v1812 = vshrl.u32 %v1709, 16
      %v1814 = vor.u32 %v1812, %v1810
      %v1816 = vshll.u32 %v1710, 16
      %v1818 = vrot.slane %v1816, 1
      %v1819 = vsel %vm444, %v1814, %v1818
      %v1820 = vshrl.u32 %v1710, 16
      %v1822 = vor.u32 %v1820, %v1818
      %v1824 = vshll.u32 %v1711, 16
      %v1826 = vrot.slane %v1824, 1
      %v1827 = vsel %vm444, %v1822, %v1826
      %v1828 = vshrl.u32 %v1711, 16
      %v1830 = vor.u32 %v1828, %v1826
      %v1832 = vshll.u32 %v1712, 16
      %v1834 = vrot.slane %v1832, 1
      %v1835 = vsel %vm444, %v1830, %v1834
      %v1836 = vshrl.u32 %v1712, 16
      %v1838 = vor.u32 %v1836, %v1834
      %v1840 = vshll.u32 %v1713, 16
      %v1842 = vrot.slane %v1840, 1
      %v1843 = vsel %vm444, %v1838, %v1842
      %v1844 = vshrl.u32 %v1713, 16
      %v1846 = vor.u32 %v1844, %v1842
      %v1848 = vshll.u32 %v1714, 16
      %v1850 = vrot.slane %v1848, 1
      %v1851 = vsel %vm444, %v1846, %v1850
      %v1852 = vshrl.u32 %v1714, 16
      %v1854 = vor.u32 %v1852, %v1850
      %v1856 = vshll.u32 %v1715, 16
      %v1858 = vrot.slane %v1856, 1
      %v1859 = vsel %vm444, %v1854, %v1858
      %v1860 = vshrl.u32 %v1715, 16
      %v1862 = vor.u32 %v1860, %v1858
      %v1864 = vshll.u32 %v1719, 16
      %v1866 = vrot.slane %v1864, 1
      %v1867 = vsel %vm444, %v1862, %v1866
      %v1868 = vshrl.u32 %v1719, 16
      %v1870 = vor.u32 %v1868, %v1866
      %1871 = vrot.lane.b32.xlu0 %v1731, 48
      %v1872 = vpop.permute.xlu0 %1871
      %1873 = vrot.lane.b32.xlu0 %v1739, 48
      %v1874 = vpop.permute.xlu0 %1873
      %1875 = vrot.lane.b32.xlu0 %v1747, 48
      %v1876 = vpop.permute.xlu0 %1875
      %1877 = vrot.lane.b32.xlu0 %v1755, 48
      %v1878 = vpop.permute.xlu0 %1877
      %1879 = vrot.lane.b32.xlu0 %v1763, 48
      %v1880 = vpop.permute.xlu0 %1879
      %1881 = vrot.lane.b32.xlu0 %v1771, 48
      %v1882 = vpop.permute.xlu0 %1881
      %1883 = vrot.lane.b32.xlu0 %v1779, 48
      %v1884 = vpop.permute.xlu0 %1883
      %1885 = vrot.lane.b32.xlu0 %v1787, 48
      %v1886 = vpop.permute.xlu0 %1885
      %1887 = vrot.lane.b32.xlu0 %v1795, 48
      %v1888 = vpop.permute.xlu0 %1887
      %1889 = vrot.lane.b32.xlu0 %v1803, 48
      %v1890 = vpop.permute.xlu0 %1889
      %1891 = vrot.lane.b32.xlu0 %v1811, 48
      %v1892 = vpop.permute.xlu0 %1891
      %1893 = vrot.lane.b32.xlu0 %v1819, 48
      %v1894 = vpop.permute.xlu0 %1893
      %1895 = vrot.lane.b32.xlu0 %v1827, 48
      %v1896 = vpop.permute.xlu0 %1895
      %1897 = vrot.lane.b32.xlu0 %v1835, 48
      %v1898 = vpop.permute.xlu0 %1897
      %1899 = vrot.lane.b32.xlu0 %v1843, 48
      %v1900 = vpop.permute.xlu0 %1899
      %1901 = vrot.lane.b32.xlu0 %v1851, 48
      %v1902 = vpop.permute.xlu0 %1901
      %1903 = vrot.lane.b32.xlu0 %v1859, 48
      %v1904 = vpop.permute.xlu0 %1903
      %1905 = vrot.lane.b32.xlu0 %v1867, 48
      %v1906 = vpop.permute.xlu0 %1905
      %1907 = vrot.lane.b32.xlu0 %v1870, 48
      %v1908 = vpop.permute.xlu0 %1907
      %v1910 = vunpack.c.l.b16 %v1623
      %v1911 = vpack.c.b16 %v1662, %v1910
      %v1912 = vrot.slane %v1911, 1
      %v1913 = vrot.slane %v1699, 1
      %v1914 = vsel %vm632, %v1912, %v1913
      %v1915 = vrot.slane %v1700, 1
      %v1916 = vsel %vm632, %v1913, %v1915
      %v1917 = vrot.slane %v1701, 1
      %v1918 = vsel %vm632, %v1915, %v1917
      %v1919 = vrot.slane %v1702, 1
      %v1920 = vsel %vm632, %v1917, %v1919
      %v1921 = vrot.slane %v1703, 1
      %v1922 = vsel %vm632, %v1919, %v1921
      %v1923 = vrot.slane %v1704, 1
      %v1924 = vsel %vm632, %v1921, %v1923
      %v1925 = vrot.slane %v1705, 1
      %v1926 = vsel %vm632, %v1923, %v1925
      %v1927 = vrot.slane %v1706, 1
      %v1928 = vsel %vm632, %v1925, %v1927
      %v1929 = vrot.slane %v1707, 1
      %v1930 = vsel %vm632, %v1927, %v1929
      %v1931 = vrot.slane %v1708, 1
      %v1932 = vsel %vm632, %v1929, %v1931
      %v1933 = vrot.slane %v1709, 1
      %v1934 = vsel %vm632, %v1931, %v1933
      %v1935 = vrot.slane %v1710, 1
      %v1936 = vsel %vm632, %v1933, %v1935
      %v1937 = vrot.slane %v1711, 1
      %v1938 = vsel %vm632, %v1935, %v1937
      %v1939 = vrot.slane %v1712, 1
      %v1940 = vsel %vm632, %v1937, %v1939
      %v1941 = vrot.slane %v1713, 1
      %v1942 = vsel %vm632, %v1939, %v1941
      %v1943 = vrot.slane %v1714, 1
      %v1944 = vsel %vm632, %v1941, %v1943
      %v1945 = vrot.slane %v1715, 1
      %v1946 = vsel %vm632, %v1943, %v1945
      %v1947 = vrot.slane %v1719, 1
      %v1948 = vsel %vm632, %v1945, %v1947
      %1949 = vrot.lane.b32.xlu0 %v1914, 96
      %v1950 = vpop.permute.xlu0 %1949
      %1951 = vrot.lane.b32.xlu0 %v1916, 96
      %v1952 = vpop.permute.xlu0 %1951
      %1953 = vrot.lane.b32.xlu0 %v1918, 96
      %v1954 = vpop.permute.xlu0 %1953
      %1955 = vrot.lane.b32.xlu0 %v1920, 96
      %v1956 = vpop.permute.xlu0 %1955
      %1957 = vrot.lane.b32.xlu0 %v1922, 96
      %v1958 = vpop.permute.xlu0 %1957
      %1959 = vrot.lane.b32.xlu0 %v1924, 96
      %v1960 = vpop.permute.xlu0 %1959
      %1961 = vrot.lane.b32.xlu0 %v1926, 96
      %v1962 = vpop.permute.xlu0 %1961
      %1963 = vrot.lane.b32.xlu0 %v1928, 96
      %v1964 = vpop.permute.xlu0 %1963
      %1965 = vrot.lane.b32.xlu0 %v1930, 96
      %v1966 = vpop.permute.xlu0 %1965
      %1967 = vrot.lane.b32.xlu0 %v1932, 96
      %v1968 = vpop.permute.xlu0 %1967
      %1969 = vrot.lane.b32.xlu0 %v1934, 96
      %v1970 = vpop.permute.xlu0 %1969
      %1971 = vrot.lane.b32.xlu0 %v1936, 96
      %v1972 = vpop.permute.xlu0 %1971
      %1973 = vrot.lane.b32.xlu0 %v1938, 96
      %v1974 = vpop.permute.xlu0 %1973
      %1975 = vrot.lane.b32.xlu0 %v1940, 96
      %v1976 = vpop.permute.xlu0 %1975
      %1977 = vrot.lane.b32.xlu0 %v1942, 96
      %v1978 = vpop.permute.xlu0 %1977
      %1979 = vrot.lane.b32.xlu0 %v1944, 96
      %v1980 = vpop.permute.xlu0 %1979
      %1981 = vrot.lane.b32.xlu0 %v1946, 96
      %v1982 = vpop.permute.xlu0 %1981
      %1983 = vrot.lane.b32.xlu0 %v1948, 96
      %v1984 = vpop.permute.xlu0 %1983
      %1985 = vrot.lane.b32.xlu0 %v1947, 96
      %v1986 = vpop.permute.xlu0 %1985
      %v1988 = vsel %vm706, %v1698, %v1872
      %v1990 = vsel %vm706, %v1699, %v1874
      %v1992 = vsel %vm706, %v1700, %v1876
      %v1994 = vsel %vm706, %v1701, %v1878
      %v1996 = vsel %vm706, %v1702, %v1880
      %v1998 = vsel %vm706, %v1703, %v1882
      %v2000 = vsel %vm706, %v1704, %v1884
      %v2002 = vsel %vm706, %v1705, %v1886
      %v2004 = vsel %vm706, %v1706, %v1888
      %v2006 = vsel %vm706, %v1707, %v1890
      %v2008 = vsel %vm706, %v1708, %v1892
      %v2010 = vsel %vm706, %v1709, %v1894
      %v2012 = vsel %vm706, %v1710, %v1896
      %v2014 = vsel %vm706, %v1711, %v1898
      %v2016 = vsel %vm706, %v1712, %v1900
      %v2018 = vsel %vm706, %v1713, %v1902
      %v2020 = vsel %vm706, %v1714, %v1904
      %v2022 = vsel %vm706, %v1715, %v1906
      %v2025 = vsel %vm706, %v1716, %v1908
      %v2027 = vsel %vm743, %v1988, %v1950
      %v2029 = vsel %vm743, %v1990, %v1952
      %v2031 = vsel %vm743, %v1992, %v1954
      %v2033 = vsel %vm743, %v1994, %v1956
      %v2035 = vsel %vm743, %v1996, %v1958
      %v2037 = vsel %vm743, %v1998, %v1960
      %v2039 = vsel %vm743, %v2000, %v1962
      %v2041 = vsel %vm743, %v2002, %v1964
      %v2043 = vsel %vm743, %v2004, %v1966
      %v2045 = vsel %vm743, %v2006, %v1968
      %v2047 = vsel %vm743, %v2008, %v1970
      %v2049 = vsel %vm743, %v2010, %v1972
      %v2051 = vsel %vm743, %v2012, %v1974
      %v2053 = vsel %vm743, %v2014, %v1976
      %v2055 = vsel %vm743, %v2016, %v1978
      %v2057 = vsel %vm743, %v2018, %v1980
      %v2059 = vsel %vm743, %v2020, %v1982
      %v2061 = vsel %vm743, %v2022, %v1984
      %v2063 = vsel %vm743, %v2025, %v1986
      %s2064 = scalar_lea.vmem %s4, 144
      %v2065 = vld [vmem:[%s2064] sm:$0xf]
      %v2066 = vld [vmem:[%s2064 + $0x4] sm:$0xf]
      %v2067 = vld [vmem:[%s2064 + $0x8] sm:$0xf]
      %v2068 = vld [vmem:[%s2064 + $0xc] sm:$0xf]
      %v2069 = vld [vmem:[%s2064 + $0x10] sm:$0xf]
      %v2070 = vld [vmem:[%s2064 + $0x14] sm:$0xf]
      %v2071 = vld [vmem:[%s2064 + $0x18] sm:$0xf]
      %v2072 = vld [vmem:[%s2064 + $0x1c] sm:$0xf]
      %v2073 = vld [vmem:[%s2064 + $0x20] sm:$0xf]
      %v2074 = vld [vmem:[%s2064 + $0x24] sm:$0xf]
      %v2075 = vld [vmem:[%s2064 + $0x28] sm:$0xf]
      %v2076 = vld [vmem:[%s2064 + $0x2c] sm:$0xf]
      %v2077 = vld [vmem:[%s2064 + $0x30] sm:$0xf]
      %v2078 = vld [vmem:[%s2064 + $0x34] sm:$0xf]
      %v2079 = vld [vmem:[%s2064 + $0x38] sm:$0xf]
      %v2080 = vld [vmem:[%s2064 + $0x3c] sm:$0xf]
      %v2081 = vld [vmem:[%s2064 + $0x40] sm:$0xf]
      %v2082 = vld [vmem:[%s2064 + $0x44] sm:$0xf]
      %vm2102 = vcmask 1045504
      %v2103 = vrot.slane %v2027, 2
      %v2104 = vrot.slane %v2029, 2
      %v2105 = vsel %vm2102, %v2103, %v2104
      %v2106 = vrot.slane %v1950, 2
      %v2107 = vrot.slane %v1952, 2
      %v2108 = vsel %vm2102, %v2106, %v2107
      %v2109 = vrot.slane %v2031, 2
      %v2110 = vsel %vm2102, %v2104, %v2109
      %v2111 = vrot.slane %v1954, 2
      %v2112 = vsel %vm2102, %v2107, %v2111
      %v2113 = vrot.slane %v2033, 2
      %v2114 = vsel %vm2102, %v2109, %v2113
      %v2115 = vrot.slane %v1956, 2
      %v2116 = vsel %vm2102, %v2111, %v2115
      %v2117 = vrot.slane %v2035, 2
      %v2118 = vsel %vm2102, %v2113, %v2117
      %v2119 = vrot.slane %v1958, 2
      %v2120 = vsel %vm2102, %v2115, %v2119
      %v2121 = vrot.slane %v2037, 2
      %v2122 = vsel %vm2102, %v2117, %v2121
      %v2123 = vrot.slane %v1960, 2
      %v2124 = vsel %vm2102, %v2119, %v2123
      %v2125 = vrot.slane %v2039, 2
      %v2126 = vsel %vm2102, %v2121, %v2125
      %v2127 = vrot.slane %v1962, 2
      %v2128 = vsel %vm2102, %v2123, %v2127
      %v2129 = vrot.slane %v2041, 2
      %v2130 = vsel %vm2102, %v2125, %v2129
      %v2131 = vrot.slane %v1964, 2
      %v2132 = vsel %vm2102, %v2127, %v2131
      %v2133 = vrot.slane %v2043, 2
      %v2134 = vsel %vm2102, %v2129, %v2133
      %v2135 = vrot.slane %v1966, 2
      %v2136 = vsel %vm2102, %v2131, %v2135
      %v2137 = vrot.slane %v2045, 2
      %v2138 = vsel %vm2102, %v2133, %v2137
      %v2139 = vrot.slane %v1968, 2
      %v2140 = vsel %vm2102, %v2135, %v2139
      %v2141 = vrot.slane %v2047, 2
      %v2142 = vsel %vm2102, %v2137, %v2141
      %v2143 = vrot.slane %v1970, 2
      %v2144 = vsel %vm2102, %v2139, %v2143
      %v2145 = vrot.slane %v2049, 2
      %v2146 = vsel %vm2102, %v2141, %v2145
      %v2147 = vrot.slane %v1972, 2
      %v2148 = vsel %vm2102, %v2143, %v2147
      %v2149 = vrot.slane %v2051, 2
      %v2150 = vsel %vm2102, %v2145, %v2149
      %v2151 = vrot.slane %v1974, 2
      %v2152 = vsel %vm2102, %v2147, %v2151
      %v2153 = vrot.slane %v2053, 2
      %v2154 = vsel %vm2102, %v2149, %v2153
      %v2155 = vrot.slane %v1976, 2
      %v2156 = vsel %vm2102, %v2151, %v2155
      %v2157 = vrot.slane %v2055, 2
      %v2158 = vsel %vm2102, %v2153, %v2157
      %v2159 = vrot.slane %v1978, 2
      %v2160 = vsel %vm2102, %v2155, %v2159
      %v2161 = vrot.slane %v2057, 2
      %v2162 = vsel %vm2102, %v2157, %v2161
      %v2163 = vrot.slane %v1980, 2
      %v2164 = vsel %vm2102, %v2159, %v2163
      %v2165 = vrot.slane %v2059, 2
      %v2166 = vsel %vm2102, %v2161, %v2165
      %v2167 = vrot.slane %v1982, 2
      %v2168 = vsel %vm2102, %v2163, %v2167
      %v2169 = vrot.slane %v2061, 2
      %v2170 = vsel %vm2102, %v2165, %v2169
      %v2171 = vrot.slane %v1984, 2
      %v2172 = vsel %vm2102, %v2167, %v2171
      %v2173 = vrot.slane %v2063, 2
      %v2174 = vsel %vm2102, %v2169, %v2173
      %v2175 = vrot.slane %v1986, 2
      %v2176 = vsel %vm2102, %v2171, %v2175
      %v2213 = vunpack.c.l.b16 %v2065
      %v2214 = vunpack.c.l.b16 %v2066
      %v2215 = vunpack.c.l.b16 %v2067
      %v2216 = vunpack.c.l.b16 %v2068
      %v2217 = vunpack.c.l.b16 %v2069
      %v2218 = vunpack.c.l.b16 %v2070
      %v2219 = vunpack.c.l.b16 %v2071
      %v2220 = vunpack.c.l.b16 %v2072
      %v2221 = vunpack.c.l.b16 %v2073
      %v2222 = vunpack.c.l.b16 %v2074
      %v2223 = vunpack.c.l.b16 %v2075
      %v2224 = vunpack.c.l.b16 %v2076
      %v2225 = vunpack.c.l.b16 %v2077
      %v2226 = vunpack.c.l.b16 %v2078
      %v2227 = vunpack.c.l.b16 %v2079
      %v2228 = vunpack.c.l.b16 %v2080
      %v2229 = vunpack.c.l.b16 %v2081
      %v2230 = vunpack.c.l.b16 %v2082
      %v2231 = vpack.c.b16 %v2214, %v2213
      %v2232 = vpack.c.b16 %v2216, %v2215
      %v2233 = vpack.c.b16 %v2218, %v2217
      %v2234 = vpack.c.b16 %v2220, %v2219
      %v2235 = vpack.c.b16 %v2222, %v2221
      %v2236 = vpack.c.b16 %v2224, %v2223
      %v2237 = vpack.c.b16 %v2226, %v2225
      %v2238 = vpack.c.b16 %v2228, %v2227
      %v2239 = vpack.c.b16 %v2230, %v2229
      %v2250 = vsel %vm1086, %v2108, 0
      %v2253 = vsel %vm1086, %v2112, 0
      %v2256 = vsel %vm1086, %v2116, 0
      %v2259 = vsel %vm1086, %v2120, 0
      %v2262 = vsel %vm1086, %v2124, 0
      %v2265 = vsel %vm1086, %v2128, 0
      %v2268 = vsel %vm1086, %v2132, 0
      %v2271 = vsel %vm1086, %v2136, 0
      %v2274 = vsel %vm1086, %v2140, 0
      %v2277 = vsel %vm1086, %v2144, 0
      %v2280 = vsel %vm1086, %v2148, 0
      %v2283 = vsel %vm1086, %v2152, 0
      %v2286 = vsel %vm1086, %v2156, 0
      %v2289 = vsel %vm1086, %v2160, 0
      %v2292 = vsel %vm1086, %v2164, 0
      %v2295 = vsel %vm1086, %v2168, 0
      %v2298 = vsel %vm1086, %v2172, 0
      %v2301 = vsel %vm1086, %v2176, 0
      %2303 = vmatprep.subr.bf16.mxu0 0
      %2304 = vmatpush1.bf16.msra.mxu0 %v2231
      %2305 = vmatprep.subr.bf16.mxu0 0
      %2306 = vmatpush1.bf16.msra.mxu0 %v2232
      %2307 = vmatprep.subr.bf16.mxu0 0
      %2308 = vmatpush1.bf16.msra.mxu0 %v2233
      %2309 = vmatprep.subr.bf16.mxu0 0
      %2310 = vmatpush1.bf16.msra.mxu0 %v2234
      %2311 = vmatprep.subr.bf16.mxu0 0
      %2312 = vmatpush1.bf16.msra.mxu0 %v2235
      %2313 = vmatprep.subr.bf16.mxu0 0
      %2314 = vmatpush1.bf16.msra.mxu0 %v2236
      %2315 = vmatprep.subr.bf16.mxu0 0
      %2316 = vmatpush1.bf16.msra.mxu0 %v2237
      %2317 = vmatprep.subr.bf16.mxu0 0
      %2318 = vmatpush1.bf16.msra.mxu0 %v2238
      %2319 = vmatprep.subr.bf16.mxu0 0
      %2320 = vmatpush1.bf16.msra.mxu0 %v2239
      %2321 = vmatprep.subr.bf16.mxu0 0
      %2322 = vmatpush1.bf16.msra.mxu0 0
      %2323 = vmatprep.subr.bf16.mxu0 0
      %2324 = vmatpush1.bf16.msra.mxu0 0
      %2325 = vmatprep.subr.bf16.mxu0 0
      %2326 = vmatpush1.bf16.msra.mxu0 0
      %2327 = vmatprep.subr.bf16.mxu0 0
      %2328 = vmatpush1.bf16.msra.mxu0 0
      %2329 = vmatprep.subr.bf16.mxu0 0
      %2330 = vmatpush1.bf16.msra.mxu0 0
      %2331 = vmatprep.subr.bf16.mxu0 0
      %2332 = vmatpush1.bf16.msra.mxu0 0
      %2333 = vmatprep.subr.bf16.mxu0 0
      %2334 = vmatpush1.bf16.msra.mxu0 0
      %2335 = vmatprep.mubr.bf16.mxu0 %v2250
      %2336 = vmatmul.mubr.bf16.gmra.mrb[0].mxu0 %v2105
      %v2337 = vpop.f32.mrb[0].mxu0
      %v2338 = vadd.f32 0.0, %v2337
      %v2339 = vpop.f32.mrb[0].mxu0
      %v2340 = vpop.f32.mrb[0].mxu0
      %v2341 = vadd.f32 0.0, %v2340
      %v2342 = vpop.f32.mrb[0].mxu0
      %2343 = vmatprep.mubr.bf16.mxu0 %v2253
      %2344 = vmatmul.mubr.bf16.gmra.mrb[0].mxu0 %v2110
      %v2345 = vpop.f32.mrb[0].mxu0
      %v2346 = vadd.f32 0.0, %v2345
      %v2347 = vpop.f32.mrb[0].mxu0
      %v2348 = vpop.f32.mrb[0].mxu0
      %v2349 = vadd.f32 0.0, %v2348
      %v2350 = vpop.f32.mrb[0].mxu0
      %2351 = vmatprep.mubr.bf16.mxu0 %v2256
      %2352 = vmatmul.mubr.bf16.gmra.mrb[0].mxu0 %v2114
      %v2353 = vpop.f32.mrb[0].mxu0
      %v2354 = vadd.f32 0.0, %v2353
      %v2355 = vpop.f32.mrb[0].mxu0
      %v2356 = vpop.f32.mrb[0].mxu0
      %v2357 = vadd.f32 0.0, %v2356
      %v2358 = vpop.f32.mrb[0].mxu0
      %2359 = vmatprep.mubr.bf16.mxu0 %v2259
      %2360 = vmatmul.mubr.bf16.gmra.mrb[0].mxu0 %v2118
      %v2361 = vpop.f32.mrb[0].mxu0
      %v2362 = vadd.f32 0.0, %v2361
      %v2363 = vpop.f32.mrb[0].mxu0
      %v2364 = vpop.f32.mrb[0].mxu0
      %v2365 = vadd.f32 0.0, %v2364
      %v2366 = vpop.f32.mrb[0].mxu0
      %2367 = vmatprep.mubr.bf16.mxu0 %v2262
      %2368 = vmatmul.mubr.bf16.gmra.mrb[0].mxu0 %v2122
      %v2369 = vpop.f32.mrb[0].mxu0
      %v2370 = vadd.f32 0.0, %v2369
      %v2371 = vpop.f32.mrb[0].mxu0
      %v2372 = vpop.f32.mrb[0].mxu0
      %v2373 = vadd.f32 0.0, %v2372
      %v2374 = vpop.f32.mrb[0].mxu0
      %2375 = vmatprep.mubr.bf16.mxu0 %v2265
      %2376 = vmatmul.mubr.bf16.gmra.mrb[0].mxu0 %v2126
      %v2377 = vpop.f32.mrb[0].mxu0
      %v2378 = vadd.f32 0.0, %v2377
      %v2379 = vpop.f32.mrb[0].mxu0
      %v2380 = vpop.f32.mrb[0].mxu0
      %v2381 = vadd.f32 0.0, %v2380
      %v2382 = vpop.f32.mrb[0].mxu0
      %2383 = vmatprep.mubr.bf16.mxu0 %v2268
      %2384 = vmatmul.mubr.bf16.gmra.mrb[0].mxu0 %v2130
      %v2385 = vpop.f32.mrb[0].mxu0
      %v2386 = vadd.f32 0.0, %v2385
      %v2387 = vpop.f32.mrb[0].mxu0
      %v2388 = vpop.f32.mrb[0].mxu0
      %v2389 = vadd.f32 0.0, %v2388
      %v2390 = vpop.f32.mrb[0].mxu0
      %2391 = vmatprep.mubr.bf16.mxu0 %v2271
      %2392 = vmatmul.mubr.bf16.gmra.mrb[0].mxu0 %v2134
      %v2393 = vpop.f32.mrb[0].mxu0
      %v2394 = vadd.f32 0.0, %v2393
      %v2395 = vpop.f32.mrb[0].mxu0
      %v2396 = vpop.f32.mrb[0].mxu0
      %v2397 = vadd.f32 0.0, %v2396
      %v2398 = vpop.f32.mrb[0].mxu0
      %2399 = vmatprep.mubr.bf16.mxu0 %v2274
      %2400 = vmatmul.mubr.bf16.gmra.mrb[0].mxu0 %v2138
      %v2401 = vpop.f32.mrb[0].mxu0
      %v2402 = vadd.f32 0.0, %v2401
      %v2403 = vpop.f32.mrb[0].mxu0
      %v2404 = vpop.f32.mrb[0].mxu0
      %v2405 = vadd.f32 0.0, %v2404
      %v2406 = vpop.f32.mrb[0].mxu0
      %2407 = vmatprep.mubr.bf16.mxu0 %v2277
      %2408 = vmatmul.mubr.bf16.gmra.mrb[0].mxu0 %v2142
      %v2409 = vpop.f32.mrb[0].mxu0
      %v2410 = vadd.f32 0.0, %v2409
      %v2411 = vpop.f32.mrb[0].mxu0
      %v2412 = vpop.f32.mrb[0].mxu0
      %v2413 = vadd.f32 0.0, %v2412
      %v2414 = vpop.f32.mrb[0].mxu0
      %2415 = vmatprep.mubr.bf16.mxu0 %v2280
      %2416 = vmatmul.mubr.bf16.gmra.mrb[0].mxu0 %v2146
      %v2417 = vpop.f32.mrb[0].mxu0
      %v2418 = vadd.f32 0.0, %v2417
      %v2419 = vpop.f32.mrb[0].mxu0
      %v2420 = vpop.f32.mrb[0].mxu0
      %v2421 = vadd.f32 0.0, %v2420
      %v2422 = vpop.f32.mrb[0].mxu0
      %2423 = vmatprep.mubr.bf16.mxu0 %v2283
      %2424 = vmatmul.mubr.bf16.gmra.mrb[0].mxu0 %v2150
      %v2425 = vpop.f32.mrb[0].mxu0
      %v2426 = vadd.f32 0.0, %v2425
      %v2427 = vpop.f32.mrb[0].mxu0
      %v2428 = vpop.f32.mrb[0].mxu0
      %v2429 = vadd.f32 0.0, %v2428
      %v2430 = vpop.f32.mrb[0].mxu0
      %2431 = vmatprep.mubr.bf16.mxu0 %v2286
      %2432 = vmatmul.mubr.bf16.gmra.mrb[0].mxu0 %v2154
      %v2433 = vpop.f32.mrb[0].mxu0
      %v2434 = vadd.f32 0.0, %v2433
      %v2435 = vpop.f32.mrb[0].mxu0
      %v2436 = vpop.f32.mrb[0].mxu0
      %v2437 = vadd.f32 0.0, %v2436
      %v2438 = vpop.f32.mrb[0].mxu0
      %2439 = vmatprep.mubr.bf16.mxu0 %v2289
      %2440 = vmatmul.mubr.bf16.gmra.mrb[0].mxu0 %v2158
      %v2441 = vpop.f32.mrb[0].mxu0
      %v2442 = vadd.f32 0.0, %v2441
      %v2443 = vpop.f32.mrb[0].mxu0
      %v2444 = vpop.f32.mrb[0].mxu0
      %v2445 = vadd.f32 0.0, %v2444
      %v2446 = vpop.f32.mrb[0].mxu0
      %2447 = vmatprep.mubr.bf16.mxu0 %v2292
      %2448 = vmatmul.mubr.bf16.gmra.mrb[0].mxu0 %v2162
      %v2449 = vpop.f32.mrb[0].mxu0
      %v2450 = vadd.f32 0.0, %v2449
      %v2451 = vpop.f32.mrb[0].mxu0
      %v2452 = vpop.f32.mrb[0].mxu0
      %v2453 = vadd.f32 0.0, %v2452
      %v2454 = vpop.f32.mrb[0].mxu0
      %2455 = vmatprep.mubr.bf16.mxu0 %v2295
      %2456 = vmatmul.mubr.bf16.gmra.mrb[0].mxu0 %v2166
      %v2457 = vpop.f32.mrb[0].mxu0
      %v2458 = vadd.f32 0.0, %v2457
      %v2459 = vpop.f32.mrb[0].mxu0
      %v2460 = vpop.f32.mrb[0].mxu0
      %v2461 = vadd.f32 0.0, %v2460
      %v2462 = vpop.f32.mrb[0].mxu0
      %2463 = vmatprep.mubr.bf16.mxu0 %v2298
      %2464 = vmatmul.mubr.bf16.gmra.mrb[0].mxu0 %v2170
      %v2465 = vpop.f32.mrb[0].mxu0
      %v2466 = vadd.f32 0.0, %v2465
      %v2467 = vpop.f32.mrb[0].mxu0
      %v2468 = vpop.f32.mrb[0].mxu0
      %v2469 = vadd.f32 0.0, %v2468
      %v2470 = vpop.f32.mrb[0].mxu0
      %2471 = vmatprep.mubr.bf16.mxu0 %v2301
      %2472 = vmatmul.mubr.bf16.gmra.mrb[0].mxu0 %v2174
      %v2473 = vpop.f32.mrb[0].mxu0
      %v2474 = vadd.f32 0.0, %v2473
      %v2475 = vpop.f32.mrb[0].mxu0
      %v2476 = vpop.f32.mrb[0].mxu0
      %v2477 = vadd.f32 0.0, %v2476
      %v2478 = vpop.f32.mrb[0].mxu0
      %2479 = vdwg.mxu0
      %v2480 = vadd.f32 %v1443, %v2338
      %v2481 = vadd.f32 %v1446, %v2341
      %v2482 = vadd.f32 %v1451, %v2346
      %v2483 = vadd.f32 %v1454, %v2349
      %v2484 = vadd.f32 %v1459, %v2354
      %v2485 = vadd.f32 %v1462, %v2357
      %v2486 = vadd.f32 %v1467, %v2362
      %v2487 = vadd.f32 %v1470, %v2365
      %v2488 = vadd.f32 %v1475, %v2370
      %v2489 = vadd.f32 %v1478, %v2373
      %v2490 = vadd.f32 %v1483, %v2378
      %v2491 = vadd.f32 %v1486, %v2381
      %v2492 = vadd.f32 %v1491, %v2386
      %v2493 = vadd.f32 %v1494, %v2389
      %v2494 = vadd.f32 %v1499, %v2394
      %v2495 = vadd.f32 %v1502, %v2397
      %v2496 = vadd.f32 %v1507, %v2402
      %v2497 = vadd.f32 %v1510, %v2405
      %v2498 = vadd.f32 %v1515, %v2410
      %v2499 = vadd.f32 %v1518, %v2413
      %v2500 = vadd.f32 %v1523, %v2418
      %v2501 = vadd.f32 %v1526, %v2421
      %v2502 = vadd.f32 %v1531, %v2426
      %v2503 = vadd.f32 %v1534, %v2429
      %v2504 = vadd.f32 %v1539, %v2434
      %v2505 = vadd.f32 %v1542, %v2437
      %v2506 = vadd.f32 %v1547, %v2442
      %v2507 = vadd.f32 %v1550, %v2445
      %v2508 = vadd.f32 %v1555, %v2450
      %v2509 = vadd.f32 %v1558, %v2453
      %v2510 = vadd.f32 %v1563, %v2458
      %v2511 = vadd.f32 %v1566, %v2461
      %v2512 = vadd.f32 %v1571, %v2466
      %v2513 = vadd.f32 %v1574, %v2469
      %v2514 = vadd.f32 %v1579, %v2474
      %v2515 = vadd.f32 %v1582, %v2477
      %v2516 = vld [vmem:[%s301] sm:$0xff]
      %v2517 = vld [vmem:[%s301 + $0x8] sm:$0xff]
      %v2518 = vld [vmem:[%s301 + $0x10] sm:$0xff]
      %v2519 = vld [vmem:[%s301 + $0x18] sm:$0xff]
      %v2520 = vld [vmem:[%s301 + $0x20] sm:$0xff]
      %v2521 = vld [vmem:[%s301 + $0x28] sm:$0xff]
      %v2522 = vld [vmem:[%s301 + $0x30] sm:$0xff]
      %v2523 = vld [vmem:[%s301 + $0x38] sm:$0xff]
      %v2524 = vld [vmem:[%s301 + $0x40] sm:$0xff]
      %v2525 = vld [vmem:[%s301 + $0x48] sm:$0xff]
      %v2526 = vld [vmem:[%s301 + $0x50] sm:$0xff]
      %v2527 = vld [vmem:[%s301 + $0x58] sm:$0xff]
      %v2528 = vld [vmem:[%s301 + $0x60] sm:$0xff]
      %v2529 = vld [vmem:[%s301 + $0x68] sm:$0xff]
      %v2530 = vld [vmem:[%s301 + $0x70] sm:$0xff]
      %v2531 = vld [vmem:[%s301 + $0x78] sm:$0xff]
      %v2532 = vld [vmem:[%s301 + $0x80] sm:$0xff]
      %v2533 = vld [vmem:[%s301 + $0x88] sm:$0xff]
      %v2534 = vld [vmem:[%s301 + $0x90] sm:$0xff]
      %v2535 = vld [vmem:[%s301 + $0x98] sm:$0xff]
      %v2536 = vld [vmem:[%s301 + $0xa0] sm:$0xff]
      %v2537 = vld [vmem:[%s301 + $0xa8] sm:$0xff]
      %v2538 = vld [vmem:[%s301 + $0xb0] sm:$0xff]
      %v2539 = vld [vmem:[%s301 + $0xb8] sm:$0xff]
      %v2540 = vld [vmem:[%s301 + $0xc0] sm:$0xff]
      %v2541 = vld [vmem:[%s301 + $0xc8] sm:$0xff]
      %v2542 = vld [vmem:[%s301 + $0xd0] sm:$0xff]
      %v2543 = vld [vmem:[%s301 + $0xd8] sm:$0xff]
      %v2544 = vld [vmem:[%s301 + $0xe0] sm:$0xff]
      %v2545 = vld [vmem:[%s301 + $0xe8] sm:$0xff]
      %v2546 = vld [vmem:[%s301 + $0xf0] sm:$0xff]
      %v2547 = vld [vmem:[%s301 + $0xf8] sm:$0xff]
      %v2548 = vld [vmem:[%s301 + $0x100] sm:$0xff]
      %v2549 = vld [vmem:[%s301 + $0x108] sm:$0xff]
      %v2550 = vld [vmem:[%s301 + $0x110] sm:$0xff]
      %v2551 = vld [vmem:[%s301 + $0x118] sm:$0xff]
      %v2552 = vadd.f32 %v2480, %v2516
      %v2553 = vadd.f32 %v2481, %v2517
      %v2554 = vadd.f32 %v2482, %v2518
      %v2555 = vadd.f32 %v2483, %v2519
      %v2556 = vadd.f32 %v2484, %v2520
      %v2557 = vadd.f32 %v2485, %v2521
      %v2558 = vadd.f32 %v2486, %v2522
      %v2559 = vadd.f32 %v2487, %v2523
      %v2560 = vadd.f32 %v2488, %v2524
      %v2561 = vadd.f32 %v2489, %v2525
      %v2562 = vadd.f32 %v2490, %v2526
      %v2563 = vadd.f32 %v2491, %v2527
      %v2564 = vadd.f32 %v2492, %v2528
      %v2565 = vadd.f32 %v2493, %v2529
      %v2566 = vadd.f32 %v2494, %v2530
      %v2567 = vadd.f32 %v2495, %v2531
      %v2568 = vadd.f32 %v2496, %v2532
      %v2569 = vadd.f32 %v2497, %v2533
      %v2570 = vadd.f32 %v2498, %v2534
      %v2571 = vadd.f32 %v2499, %v2535
      %v2572 = vadd.f32 %v2500, %v2536
      %v2573 = vadd.f32 %v2501, %v2537
      %v2574 = vadd.f32 %v2502, %v2538
      %v2575 = vadd.f32 %v2503, %v2539
      %v2576 = vadd.f32 %v2504, %v2540
      %v2577 = vadd.f32 %v2505, %v2541
      %v2578 = vadd.f32 %v2506, %v2542
      %v2579 = vadd.f32 %v2507, %v2543
      %v2580 = vadd.f32 %v2508, %v2544
      %v2581 = vadd.f32 %v2509, %v2545
      %v2582 = vadd.f32 %v2510, %v2546
      %v2583 = vadd.f32 %v2511, %v2547
      %v2584 = vadd.f32 %v2512, %v2548
      %v2585 = vadd.f32 %v2513, %v2549
      %v2586 = vadd.f32 %v2514, %v2550
      %v2587 = vadd.f32 %v2515, %v2551
      %v2588 = vxor.u32 %v2552, 2147483648
      %v2589 = vxor.u32 %v2553, 2147483648
      %v2590 = vxor.u32 %v2554, 2147483648
      %v2591 = vxor.u32 %v2555, 2147483648
      %v2592 = vxor.u32 %v2556, 2147483648
      %v2593 = vxor.u32 %v2557, 2147483648
      %v2594 = vxor.u32 %v2558, 2147483648
      %v2595 = vxor.u32 %v2559, 2147483648
      %v2596 = vxor.u32 %v2560, 2147483648
      %v2597 = vxor.u32 %v2561, 2147483648
      %v2598 = vxor.u32 %v2562, 2147483648
      %v2599 = vxor.u32 %v2563, 2147483648
      %v2600 = vxor.u32 %v2564, 2147483648
      %v2601 = vxor.u32 %v2565, 2147483648
      %v2602 = vxor.u32 %v2566, 2147483648
      %v2603 = vxor.u32 %v2567, 2147483648
      %v2604 = vxor.u32 %v2568, 2147483648
      %v2605 = vxor.u32 %v2569, 2147483648
      %v2606 = vxor.u32 %v2570, 2147483648
      %v2607 = vxor.u32 %v2571, 2147483648
      %v2608 = vxor.u32 %v2572, 2147483648
      %v2609 = vxor.u32 %v2573, 2147483648
      %v2610 = vxor.u32 %v2574, 2147483648
      %v2611 = vxor.u32 %v2575, 2147483648
      %v2612 = vxor.u32 %v2576, 2147483648
      %v2613 = vxor.u32 %v2577, 2147483648
      %v2614 = vxor.u32 %v2578, 2147483648
      %v2615 = vxor.u32 %v2579, 2147483648
      %v2616 = vxor.u32 %v2580, 2147483648
      %v2617 = vxor.u32 %v2581, 2147483648
      %v2618 = vxor.u32 %v2582, 2147483648
      %v2619 = vxor.u32 %v2583, 2147483648
      %v2620 = vxor.u32 %v2584, 2147483648
      %v2621 = vxor.u32 %v2585, 2147483648
      %v2622 = vxor.u32 %v2586, 2147483648
      %v2623 = vxor.u32 %v2587, 2147483648
      %v2624 = vmul.f32 %v2588, 1.442695
      %v2625 = vpow.pop %v2624
      %v2626 = vmul.f32 %v2589, 1.442695
      %v2627 = vpow.pop %v2626
      %v2628 = vmul.f32 %v2590, 1.442695
      %v2629 = vpow.pop %v2628
      %v2630 = vmul.f32 %v2591, 1.442695
      %v2631 = vpow.pop %v2630
      %v2632 = vmul.f32 %v2592, 1.442695
      %v2633 = vpow.pop %v2632
      %v2634 = vmul.f32 %v2593, 1.442695
      %v2635 = vpow.pop %v2634
      %v2636 = vmul.f32 %v2594, 1.442695
      %v2637 = vpow.pop %v2636
      %v2638 = vmul.f32 %v2595, 1.442695
      %v2639 = vpow.pop %v2638
      %v2640 = vmul.f32 %v2596, 1.442695
      %v2641 = vpow.pop %v2640
      %v2642 = vmul.f32 %v2597, 1.442695
      %v2643 = vpow.pop %v2642
      %v2644 = vmul.f32 %v2598, 1.442695
      %v2645 = vpow.pop %v2644
      %v2646 = vmul.f32 %v2599, 1.442695
      %v2647 = vpow.pop %v2646
      %v2648 = vmul.f32 %v2600, 1.442695
      %v2649 = vpow.pop %v2648
      %v2650 = vmul.f32 %v2601, 1.442695
      %v2651 = vpow.pop %v2650
      %v2652 = vmul.f32 %v2602, 1.442695
      %v2653 = vpow.pop %v2652
      %v2654 = vmul.f32 %v2603, 1.442695
      %v2655 = vpow.pop %v2654
      %v2656 = vmul.f32 %v2604, 1.442695
      %v2657 = vpow.pop %v2656
      %v2658 = vmul.f32 %v2605, 1.442695
      %v2659 = vpow.pop %v2658
      %v2660 = vmul.f32 %v2606, 1.442695
      %v2661 = vpow.pop %v2660
      %v2662 = vmul.f32 %v2607, 1.442695
      %v2663 = vpow.pop %v2662
      %v2664 = vmul.f32 %v2608, 1.442695
      %v2665 = vpow.pop %v2664
      %v2666 = vmul.f32 %v2609, 1.442695
      %v2667 = vpow.pop %v2666
      %v2668 = vmul.f32 %v2610, 1.442695
      %v2669 = vpow.pop %v2668
      %v2670 = vmul.f32 %v2611, 1.442695
      %v2671 = vpow.pop %v2670
      %v2672 = vmul.f32 %v2612, 1.442695
      %v2673 = vpow.pop %v2672
      %v2674 = vmul.f32 %v2613, 1.442695
      %v2675 = vpow.pop %v2674
      %v2676 = vmul.f32 %v2614, 1.442695
      %v2677 = vpow.pop %v2676
      %v2678 = vmul.f32 %v2615, 1.442695
      %v2679 = vpow.pop %v2678
      %v2680 = vmul.f32 %v2616, 1.442695
      %v2681 = vpow.pop %v2680
      %v2682 = vmul.f32 %v2617, 1.442695
      %v2683 = vpow.pop %v2682
      %v2684 = vmul.f32 %v2618, 1.442695
      %v2685 = vpow.pop %v2684
      %v2686 = vmul.f32 %v2619, 1.442695
      %v2687 = vpow.pop %v2686
      %v2688 = vmul.f32 %v2620, 1.442695
      %v2689 = vpow.pop %v2688
      %v2690 = vmul.f32 %v2621, 1.442695
      %v2691 = vpow.pop %v2690
      %v2692 = vmul.f32 %v2622, 1.442695
      %v2693 = vpow.pop %v2692
      %v2694 = vmul.f32 %v2623, 1.442695
      %v2695 = vpow.pop %v2694
      %v2696 = vadd.f32 %v2625, 1.0
      %v2697 = vadd.f32 %v2627, 1.0
      %v2698 = vadd.f32 %v2629, 1.0
      %v2699 = vadd.f32 %v2631, 1.0
      %v2700 = vadd.f32 %v2633, 1.0
      %v2701 = vadd.f32 %v2635, 1.0
      %v2702 = vadd.f32 %v2637, 1.0
      %v2703 = vadd.f32 %v2639, 1.0
      %v2704 = vadd.f32 %v2641, 1.0
      %v2705 = vadd.f32 %v2643, 1.0
      %v2706 = vadd.f32 %v2645, 1.0
      %v2707 = vadd.f32 %v2647, 1.0
      %v2708 = vadd.f32 %v2649, 1.0
      %v2709 = vadd.f32 %v2651, 1.0
      %v2710 = vadd.f32 %v2653, 1.0
      %v2711 = vadd.f32 %v2655, 1.0
      %v2712 = vadd.f32 %v2657, 1.0
      %v2713 = vadd.f32 %v2659, 1.0
      %v2714 = vadd.f32 %v2661, 1.0
      %v2715 = vadd.f32 %v2663, 1.0
      %v2716 = vadd.f32 %v2665, 1.0
      %v2717 = vadd.f32 %v2667, 1.0
      %v2718 = vadd.f32 %v2669, 1.0
      %v2719 = vadd.f32 %v2671, 1.0
      %v2720 = vadd.f32 %v2673, 1.0
      %v2721 = vadd.f32 %v2675, 1.0
      %v2722 = vadd.f32 %v2677, 1.0
      %v2723 = vadd.f32 %v2679, 1.0
      %v2724 = vadd.f32 %v2681, 1.0
      %v2725 = vadd.f32 %v2683, 1.0
      %v2726 = vadd.f32 %v2685, 1.0
      %v2727 = vadd.f32 %v2687, 1.0
      %v2728 = vadd.f32 %v2689, 1.0
      %v2729 = vadd.f32 %v2691, 1.0
      %v2730 = vadd.f32 %v2693, 1.0
      %v2731 = vadd.f32 %v2695, 1.0
      %v2732 = vrcp.pop %v2696
      %v2733 = vmul.f32 1.0, %v2732
      %v2734 = vrcp.pop %v2697
      %v2735 = vmul.f32 1.0, %v2734
      %v2736 = vrcp.pop %v2698
      %v2737 = vmul.f32 1.0, %v2736
      %v2738 = vrcp.pop %v2699
      %v2739 = vmul.f32 1.0, %v2738
      %v2740 = vrcp.pop %v2700
      %v2741 = vmul.f32 1.0, %v2740
      %v2742 = vrcp.pop %v2701
      %v2743 = vmul.f32 1.0, %v2742
      %v2744 = vrcp.pop %v2702
      %v2745 = vmul.f32 1.0, %v2744
      %v2746 = vrcp.pop %v2703
      %v2747 = vmul.f32 1.0, %v2746
      %v2748 = vrcp.pop %v2704
      %v2749 = vmul.f32 1.0, %v2748
      %v2750 = vrcp.pop %v2705
      %v2751 = vmul.f32 1.0, %v2750
      %v2752 = vrcp.pop %v2706
      %v2753 = vmul.f32 1.0, %v2752
      %v2754 = vrcp.pop %v2707
      %v2755 = vmul.f32 1.0, %v2754
      %v2756 = vrcp.pop %v2708
      %v2757 = vmul.f32 1.0, %v2756
      %v2758 = vrcp.pop %v2709
      %v2759 = vmul.f32 1.0, %v2758
      %v2760 = vrcp.pop %v2710
      %v2761 = vmul.f32 1.0, %v2760
      %v2762 = vrcp.pop %v2711
      %v2763 = vmul.f32 1.0, %v2762
      %v2764 = vrcp.pop %v2712
      %v2765 = vmul.f32 1.0, %v2764
      %v2766 = vrcp.pop %v2713
      %v2767 = vmul.f32 1.0, %v2766
      %v2768 = vrcp.pop %v2714
      %v2769 = vmul.f32 1.0, %v2768
      %v2770 = vrcp.pop %v2715
      %v2771 = vmul.f32 1.0, %v2770
      %v2772 = vrcp.pop %v2716
      %v2773 = vmul.f32 1.0, %v2772
      %v2774 = vrcp.pop %v2717
      %v2775 = vmul.f32 1.0, %v2774
      %v2776 = vrcp.pop %v2718
      %v2777 = vmul.f32 1.0, %v2776
      %v2778 = vrcp.pop %v2719
      %v2779 = vmul.f32 1.0, %v2778
      %v2780 = vrcp.pop %v2720
      %v2781 = vmul.f32 1.0, %v2780
      %v2782 = vrcp.pop %v2721
      %v2783 = vmul.f32 1.0, %v2782
      %v2784 = vrcp.pop %v2722
      %v2785 = vmul.f32 1.0, %v2784
      %v2786 = vrcp.pop %v2723
      %v2787 = vmul.f32 1.0, %v2786
      %v2788 = vrcp.pop %v2724
      %v2789 = vmul.f32 1.0, %v2788
      %v2790 = vrcp.pop %v2725
      %v2791 = vmul.f32 1.0, %v2790
      %v2792 = vrcp.pop %v2726
      %v2793 = vmul.f32 1.0, %v2792
      %v2794 = vrcp.pop %v2727
      %v2795 = vmul.f32 1.0, %v2794
      %v2796 = vrcp.pop %v2728
      %v2797 = vmul.f32 1.0, %v2796
      %v2798 = vrcp.pop %v2729
      %v2799 = vmul.f32 1.0, %v2798
      %v2800 = vrcp.pop %v2730
      %v2801 = vmul.f32 1.0, %v2800
      %v2802 = vrcp.pop %v2731
      %v2803 = vmul.f32 1.0, %v2802
      %v2804 = vld [vmem:[%s306] sm:$0xff]
      %v2805 = vld [vmem:[%s306 + $0x8] sm:$0xff]
      %v2806 = vld [vmem:[%s306 + $0x10] sm:$0xff]
      %v2807 = vld [vmem:[%s306 + $0x18] sm:$0xff]
      %v2808 = vld [vmem:[%s306 + $0x20] sm:$0xff]
      %v2809 = vld [vmem:[%s306 + $0x28] sm:$0xff]
      %v2810 = vld [vmem:[%s306 + $0x30] sm:$0xff]
      %v2811 = vld [vmem:[%s306 + $0x38] sm:$0xff]
      %v2812 = vld [vmem:[%s306 + $0x40] sm:$0xff]
      %v2813 = vld [vmem:[%s306 + $0x48] sm:$0xff]
      %v2814 = vld [vmem:[%s306 + $0x50] sm:$0xff]
      %v2815 = vld [vmem:[%s306 + $0x58] sm:$0xff]
      %v2816 = vld [vmem:[%s306 + $0x60] sm:$0xff]
      %v2817 = vld [vmem:[%s306 + $0x68] sm:$0xff]
      %v2818 = vld [vmem:[%s306 + $0x70] sm:$0xff]
      %v2819 = vld [vmem:[%s306 + $0x78] sm:$0xff]
      %v2820 = vld [vmem:[%s306 + $0x80] sm:$0xff]
      %v2821 = vld [vmem:[%s306 + $0x88] sm:$0xff]
      %v2822 = vld [vmem:[%s306 + $0x90] sm:$0xff]
      %v2823 = vld [vmem:[%s306 + $0x98] sm:$0xff]
      %v2824 = vld [vmem:[%s306 + $0xa0] sm:$0xff]
      %v2825 = vld [vmem:[%s306 + $0xa8] sm:$0xff]
      %v2826 = vld [vmem:[%s306 + $0xb0] sm:$0xff]
      %v2827 = vld [vmem:[%s306 + $0xb8] sm:$0xff]
      %v2828 = vld [vmem:[%s306 + $0xc0] sm:$0xff]
      %v2829 = vld [vmem:[%s306 + $0xc8] sm:$0xff]
      %v2830 = vld [vmem:[%s306 + $0xd0] sm:$0xff]
      %v2831 = vld [vmem:[%s306 + $0xd8] sm:$0xff]
      %v2832 = vld [vmem:[%s306 + $0xe0] sm:$0xff]
      %v2833 = vld [vmem:[%s306 + $0xe8] sm:$0xff]
      %v2834 = vld [vmem:[%s306 + $0xf0] sm:$0xff]
      %v2835 = vld [vmem:[%s306 + $0xf8] sm:$0xff]
      %v2836 = vld [vmem:[%s306 + $0x100] sm:$0xff]
      %v2837 = vld [vmem:[%s306 + $0x108] sm:$0xff]
      %v2838 = vld [vmem:[%s306 + $0x110] sm:$0xff]
      %v2839 = vld [vmem:[%s306 + $0x118] sm:$0xff]
      %2876 = vrot.lane.b32.xlu0 %v2804, 64
      %v2877 = vpop.permute.xlu0 %2876
      %2878 = vrot.lane.b32.xlu0 %v2805, 64
      %v2879 = vpop.permute.xlu0 %2878
      %2880 = vrot.lane.b32.xlu0 %v2806, 64
      %v2881 = vpop.permute.xlu0 %2880
      %2882 = vrot.lane.b32.xlu0 %v2807, 64
      %v2883 = vpop.permute.xlu0 %2882
      %2884 = vrot.lane.b32.xlu0 %v2808, 64
      %v2885 = vpop.permute.xlu0 %2884
      %2886 = vrot.lane.b32.xlu0 %v2809, 64
      %v2887 = vpop.permute.xlu0 %2886
      %2888 = vrot.lane.b32.xlu0 %v2810, 64
      %v2889 = vpop.permute.xlu0 %2888
      %2890 = vrot.lane.b32.xlu0 %v2811, 64
      %v2891 = vpop.permute.xlu0 %2890
      %2892 = vrot.lane.b32.xlu0 %v2812, 64
      %v2893 = vpop.permute.xlu0 %2892
      %2894 = vrot.lane.b32.xlu0 %v2813, 64
      %v2895 = vpop.permute.xlu0 %2894
      %2896 = vrot.lane.b32.xlu0 %v2814, 64
      %v2897 = vpop.permute.xlu0 %2896
      %2898 = vrot.lane.b32.xlu0 %v2815, 64
      %v2899 = vpop.permute.xlu0 %2898
      %2900 = vrot.lane.b32.xlu0 %v2816, 64
      %v2901 = vpop.permute.xlu0 %2900
      %2902 = vrot.lane.b32.xlu0 %v2817, 64
      %v2903 = vpop.permute.xlu0 %2902
      %2904 = vrot.lane.b32.xlu0 %v2818, 64
      %v2905 = vpop.permute.xlu0 %2904
      %2906 = vrot.lane.b32.xlu0 %v2819, 64
      %v2907 = vpop.permute.xlu0 %2906
      %2908 = vrot.lane.b32.xlu0 %v2820, 64
      %v2909 = vpop.permute.xlu0 %2908
      %2910 = vrot.lane.b32.xlu0 %v2821, 64
      %v2911 = vpop.permute.xlu0 %2910
      %2912 = vrot.lane.b32.xlu0 %v2822, 64
      %v2913 = vpop.permute.xlu0 %2912
      %2914 = vrot.lane.b32.xlu0 %v2823, 64
      %v2915 = vpop.permute.xlu0 %2914
      %2916 = vrot.lane.b32.xlu0 %v2824, 64
      %v2917 = vpop.permute.xlu0 %2916
      %2918 = vrot.lane.b32.xlu0 %v2825, 64
      %v2919 = vpop.permute.xlu0 %2918
      %2920 = vrot.lane.b32.xlu0 %v2826, 64
      %v2921 = vpop.permute.xlu0 %2920
      %2922 = vrot.lane.b32.xlu0 %v2827, 64
      %v2923 = vpop.permute.xlu0 %2922
      %2924 = vrot.lane.b32.xlu0 %v2828, 64
      %v2925 = vpop.permute.xlu0 %2924
      %2926 = vrot.lane.b32.xlu0 %v2829, 64
      %v2927 = vpop.permute.xlu0 %2926
      %2928 = vrot.lane.b32.xlu0 %v2830, 64
      %v2929 = vpop.permute.xlu0 %2928
      %2930 = vrot.lane.b32.xlu0 %v2831, 64
      %v2931 = vpop.permute.xlu0 %2930
      %2932 = vrot.lane.b32.xlu0 %v2832, 64
      %v2933 = vpop.permute.xlu0 %2932
      %2934 = vrot.lane.b32.xlu0 %v2833, 64
      %v2935 = vpop.permute.xlu0 %2934
      %2936 = vrot.lane.b32.xlu0 %v2834, 64
      %v2937 = vpop.permute.xlu0 %2936
      %2938 = vrot.lane.b32.xlu0 %v2835, 64
      %v2939 = vpop.permute.xlu0 %2938
      %2940 = vrot.lane.b32.xlu0 %v2836, 64
      %v2941 = vpop.permute.xlu0 %2940
      %2942 = vrot.lane.b32.xlu0 %v2837, 64
      %v2943 = vpop.permute.xlu0 %2942
      %2944 = vrot.lane.b32.xlu0 %v2838, 64
      %v2945 = vpop.permute.xlu0 %2944
      %2946 = vrot.lane.b32.xlu0 %v2839, 64
      %v2947 = vpop.permute.xlu0 %2946
      %v2984 = vadd.f32 %v2480, %v2877
      %v2985 = vadd.f32 %v2481, %v2879
      %v2986 = vadd.f32 %v2482, %v2881
      %v2987 = vadd.f32 %v2483, %v2883
      %v2988 = vadd.f32 %v2484, %v2885
      %v2989 = vadd.f32 %v2485, %v2887
      %v2990 = vadd.f32 %v2486, %v2889
      %v2991 = vadd.f32 %v2487, %v2891
      %v2992 = vadd.f32 %v2488, %v2893
      %v2993 = vadd.f32 %v2489, %v2895
      %v2994 = vadd.f32 %v2490, %v2897
      %v2995 = vadd.f32 %v2491, %v2899
      %v2996 = vadd.f32 %v2492, %v2901
      %v2997 = vadd.f32 %v2493, %v2903
      %v2998 = vadd.f32 %v2494, %v2905
      %v2999 = vadd.f32 %v2495, %v2907
      %v3000 = vadd.f32 %v2496, %v2909
      %v3001 = vadd.f32 %v2497, %v2911
      %v3002 = vadd.f32 %v2498, %v2913
      %v3003 = vadd.f32 %v2499, %v2915
      %v3004 = vadd.f32 %v2500, %v2917
      %v3005 = vadd.f32 %v2501, %v2919
      %v3006 = vadd.f32 %v2502, %v2921
      %v3007 = vadd.f32 %v2503, %v2923
      %v3008 = vadd.f32 %v2504, %v2925
      %v3009 = vadd.f32 %v2505, %v2927
      %v3010 = vadd.f32 %v2506, %v2929
      %v3011 = vadd.f32 %v2507, %v2931
      %v3012 = vadd.f32 %v2508, %v2933
      %v3013 = vadd.f32 %v2509, %v2935
      %v3014 = vadd.f32 %v2510, %v2937
      %v3015 = vadd.f32 %v2511, %v2939
      %v3016 = vadd.f32 %v2512, %v2941
      %v3017 = vadd.f32 %v2513, %v2943
      %v3018 = vadd.f32 %v2514, %v2945
      %v3019 = vadd.f32 %v2515, %v2947
      %v3020 = vld [vmem:[%s296] sm:$0xff]
      %v3021 = vld [vmem:[%s296 + $0x8] sm:$0xff]
      %v3022 = vld [vmem:[%s296 + $0x10] sm:$0xff]
      %v3023 = vld [vmem:[%s296 + $0x18] sm:$0xff]
      %v3024 = vld [vmem:[%s296 + $0x20] sm:$0xff]
      %v3025 = vld [vmem:[%s296 + $0x28] sm:$0xff]
      %v3026 = vld [vmem:[%s296 + $0x30] sm:$0xff]
      %v3027 = vld [vmem:[%s296 + $0x38] sm:$0xff]
      %v3028 = vld [vmem:[%s296 + $0x40] sm:$0xff]
      %v3029 = vld [vmem:[%s296 + $0x48] sm:$0xff]
      %v3030 = vld [vmem:[%s296 + $0x50] sm:$0xff]
      %v3031 = vld [vmem:[%s296 + $0x58] sm:$0xff]
      %v3032 = vld [vmem:[%s296 + $0x60] sm:$0xff]
      %v3033 = vld [vmem:[%s296 + $0x68] sm:$0xff]
      %v3034 = vld [vmem:[%s296 + $0x70] sm:$0xff]
      %v3035 = vld [vmem:[%s296 + $0x78] sm:$0xff]
      %v3036 = vld [vmem:[%s296 + $0x80] sm:$0xff]
      %v3037 = vld [vmem:[%s296 + $0x88] sm:$0xff]
      %v3038 = vld [vmem:[%s296 + $0x90] sm:$0xff]
      %v3039 = vld [vmem:[%s296 + $0x98] sm:$0xff]
      %v3040 = vld [vmem:[%s296 + $0xa0] sm:$0xff]
      %v3041 = vld [vmem:[%s296 + $0xa8] sm:$0xff]
      %v3042 = vld [vmem:[%s296 + $0xb0] sm:$0xff]
      %v3043 = vld [vmem:[%s296 + $0xb8] sm:$0xff]
      %v3044 = vld [vmem:[%s296 + $0xc0] sm:$0xff]
      %v3045 = vld [vmem:[%s296 + $0xc8] sm:$0xff]
      %v3046 = vld [vmem:[%s296 + $0xd0] sm:$0xff]
      %v3047 = vld [vmem:[%s296 + $0xd8] sm:$0xff]
      %v3048 = vld [vmem:[%s296 + $0xe0] sm:$0xff]
      %v3049 = vld [vmem:[%s296 + $0xe8] sm:$0xff]
      %v3050 = vld [vmem:[%s296 + $0xf0] sm:$0xff]
      %v3051 = vld [vmem:[%s296 + $0xf8] sm:$0xff]
      %v3052 = vld [vmem:[%s296 + $0x100] sm:$0xff]
      %v3053 = vld [vmem:[%s296 + $0x108] sm:$0xff]
      %v3054 = vld [vmem:[%s296 + $0x110] sm:$0xff]
      %v3055 = vld [vmem:[%s296 + $0x118] sm:$0xff]
      %vm3056 = vcmask 257024
      %3057 = vst.msk [vmem:[#allocation2] sm:$0xf] %vm3056, 0
      %3058 = vst.msk [vmem:[#allocation2 + $0x4] sm:$0xf] %vm3056, 0
      %vm3059 = vcmask 254976
      %vm3060 = vsmask.f32 1280
      %vm3061 = vmand %vm3059, %vm3060
      %v3062 = vld [vmem:[#allocation2 + $0x8] sm:$0x3]
      %v3063 = vsel %vm3061, 0, %v3062
      %3064 = vst [vmem:[#allocation2 + $0x8] sm:$0x3] %v3063
      %vm3065 = vcmask 257025
      %vm3066 = vsmask.f32 7942
      %vm3067 = vmand %vm3065, %vm3066
      %v3068 = vld [vmem:[#allocation2 + $0x98] sm:$0xe]
      %v3069 = vsel %vm3067, 0, %v3068
      %3070 = vst [vmem:[#allocation2 + $0x98] sm:$0xe] %v3069
      %3071 = vst.msk [vmem:[#allocation2 + $0x9c] sm:$0xf] %vm3056, 0
      %3072 = vst.msk [vmem:[#allocation2 + $0xa0] sm:$0xf] %vm3056, 0
      %3073 = vst.msk [vmem:[#allocation2 + $0xa4] sm:$0xf] %vm3056, 0
      %vm3074 = vcmask 256000
      %3075 = vst.msk [vmem:[#allocation2 + $0xa8] sm:$0x7] %vm3074, 0
      %3112 = vrot.lane.b32.xlu0 %v3020, 32
      %v3113 = vpop.permute.xlu0 %3112
      %3114 = vrot.lane.b32.xlu0 %v3021, 32
      %v3115 = vpop.permute.xlu0 %3114
      %3116 = vrot.lane.b32.xlu0 %v3022, 32
      %v3117 = vpop.permute.xlu0 %3116
      %3118 = vrot.lane.b32.xlu0 %v3023, 32
      %v3119 = vpop.permute.xlu0 %3118
      %3120 = vrot.lane.b32.xlu0 %v3024, 32
      %v3121 = vpop.permute.xlu0 %3120
      %3122 = vrot.lane.b32.xlu0 %v3025, 32
      %v3123 = vpop.permute.xlu0 %3122
      %3124 = vrot.lane.b32.xlu0 %v3026, 32
      %v3125 = vpop.permute.xlu0 %3124
      %3126 = vrot.lane.b32.xlu0 %v3027, 32
      %v3127 = vpop.permute.xlu0 %3126
      %3128 = vrot.lane.b32.xlu0 %v3028, 32
      %v3129 = vpop.permute.xlu0 %3128
      %3130 = vrot.lane.b32.xlu0 %v3029, 32
      %v3131 = vpop.permute.xlu0 %3130
      %3132 = vrot.lane.b32.xlu0 %v3030, 32
      %v3133 = vpop.permute.xlu0 %3132
      %3134 = vrot.lane.b32.xlu0 %v3031, 32
      %v3135 = vpop.permute.xlu0 %3134
      %3136 = vrot.lane.b32.xlu0 %v3032, 32
      %v3137 = vpop.permute.xlu0 %3136
      %3138 = vrot.lane.b32.xlu0 %v3033, 32
      %v3139 = vpop.permute.xlu0 %3138
      %3140 = vrot.lane.b32.xlu0 %v3034, 32
      %v3141 = vpop.permute.xlu0 %3140
      %3142 = vrot.lane.b32.xlu0 %v3035, 32
      %v3143 = vpop.permute.xlu0 %3142
      %3144 = vrot.lane.b32.xlu0 %v3036, 32
      %v3145 = vpop.permute.xlu0 %3144
      %3146 = vrot.lane.b32.xlu0 %v3037, 32
      %v3147 = vpop.permute.xlu0 %3146
      %3148 = vrot.lane.b32.xlu0 %v3038, 32
      %v3149 = vpop.permute.xlu0 %3148
      %3150 = vrot.lane.b32.xlu0 %v3039, 32
      %v3151 = vpop.permute.xlu0 %3150
      %3152 = vrot.lane.b32.xlu0 %v3040, 32
      %v3153 = vpop.permute.xlu0 %3152
      %3154 = vrot.lane.b32.xlu0 %v3041, 32
      %v3155 = vpop.permute.xlu0 %3154
      %3156 = vrot.lane.b32.xlu0 %v3042, 32
      %v3157 = vpop.permute.xlu0 %3156
      %3158 = vrot.lane.b32.xlu0 %v3043, 32
      %v3159 = vpop.permute.xlu0 %3158
      %3160 = vrot.lane.b32.xlu0 %v3044, 32
      %v3161 = vpop.permute.xlu0 %3160
      %3162 = vrot.lane.b32.xlu0 %v3045, 32
      %v3163 = vpop.permute.xlu0 %3162
      %3164 = vrot.lane.b32.xlu0 %v3046, 32
      %v3165 = vpop.permute.xlu0 %3164
      %3166 = vrot.lane.b32.xlu0 %v3047, 32
      %v3167 = vpop.permute.xlu0 %3166
      %3168 = vrot.lane.b32.xlu0 %v3048, 32
      %v3169 = vpop.permute.xlu0 %3168
      %3170 = vrot.lane.b32.xlu0 %v3049, 32
      %v3171 = vpop.permute.xlu0 %3170
      %3172 = vrot.lane.b32.xlu0 %v3050, 32
      %v3173 = vpop.permute.xlu0 %3172
      %3174 = vrot.lane.b32.xlu0 %v3051, 32
      %v3175 = vpop.permute.xlu0 %3174
      %3176 = vrot.lane.b32.xlu0 %v3052, 32
      %v3177 = vpop.permute.xlu0 %3176
      %3178 = vrot.lane.b32.xlu0 %v3053, 32
      %v3179 = vpop.permute.xlu0 %3178
      %3180 = vrot.lane.b32.xlu0 %v3054, 32
      %v3181 = vpop.permute.xlu0 %3180
      %3182 = vrot.lane.b32.xlu0 %v3055, 32
      %v3183 = vpop.permute.xlu0 %3182
      %v3220 = vmul.f32 %v2733, %v3113
      %v3221 = vmul.f32 %v2735, %v3115
      %v3222 = vmul.f32 %v2737, %v3117
      %v3223 = vmul.f32 %v2739, %v3119
      %v3224 = vmul.f32 %v2741, %v3121
      %v3225 = vmul.f32 %v2743, %v3123
      %v3226 = vmul.f32 %v2745, %v3125
      %v3227 = vmul.f32 %v2747, %v3127
      %v3228 = vmul.f32 %v2749, %v3129
      %v3229 = vmul.f32 %v2751, %v3131
      %v3230 = vmul.f32 %v2753, %v3133
      %v3231 = vmul.f32 %v2755, %v3135
      %v3232 = vmul.f32 %v2757, %v3137
      %v3233 = vmul.f32 %v2759, %v3139
      %v3234 = vmul.f32 %v2761, %v3141
      %v3235 = vmul.f32 %v2763, %v3143
      %v3236 = vmul.f32 %v2765, %v3145
      %v3237 = vmul.f32 %v2767, %v3147
      %v3238 = vmul.f32 %v2769, %v3149
      %v3239 = vmul.f32 %v2771, %v3151
      %v3240 = vmul.f32 %v2773, %v3153
      %v3241 = vmul.f32 %v2775, %v3155
      %v3242 = vmul.f32 %v2777, %v3157
      %v3243 = vmul.f32 %v2779, %v3159
      %v3244 = vmul.f32 %v2781, %v3161
      %v3245 = vmul.f32 %v2783, %v3163
      %v3246 = vmul.f32 %v2785, %v3165
      %v3247 = vmul.f32 %v2787, %v3167
      %v3248 = vmul.f32 %v2789, %v3169
      %v3249 = vmul.f32 %v2791, %v3171
      %v3250 = vmul.f32 %v2793, %v3173
      %v3251 = vmul.f32 %v2795, %v3175
      %v3252 = vmul.f32 %v2797, %v3177
      %v3253 = vmul.f32 %v2799, %v3179
      %v3254 = vmul.f32 %v2801, %v3181
      %v3255 = vmul.f32 %v2803, %v3183
      %v3256 = vpack.c.bf16 %v3221, %v3220
      %v3257 = vpack.c.bf16 %v3223, %v3222
      %v3258 = vpack.c.bf16 %v3225, %v3224
      %v3259 = vpack.c.bf16 %v3227, %v3226
      %v3260 = vpack.c.bf16 %v3229, %v3228
      %v3261 = vpack.c.bf16 %v3231, %v3230
      %v3262 = vpack.c.bf16 %v3233, %v3232
      %v3263 = vpack.c.bf16 %v3235, %v3234
      %v3264 = vpack.c.bf16 %v3237, %v3236
      %v3265 = vpack.c.bf16 %v3239, %v3238
      %v3266 = vpack.c.bf16 %v3241, %v3240
      %v3267 = vpack.c.bf16 %v3243, %v3242
      %v3268 = vpack.c.bf16 %v3245, %v3244
      %v3269 = vpack.c.bf16 %v3247, %v3246
      %v3270 = vpack.c.bf16 %v3249, %v3248
      %v3271 = vpack.c.bf16 %v3251, %v3250
      %v3272 = vpack.c.bf16 %v3253, %v3252
      %v3273 = vpack.c.bf16 %v3255, %v3254
      %v3292 = vunpack.c.l.b16 %v3256
      %v3293 = vunpack.c.h.b16 %v3256
      %v3294 = vunpack.c.l.b16 %v3257
      %v3295 = vunpack.c.h.b16 %v3257
      %v3296 = vunpack.c.l.b16 %v3258
      %v3297 = vunpack.c.h.b16 %v3258
      %v3298 = vunpack.c.l.b16 %v3259
      %v3299 = vunpack.c.h.b16 %v3259
      %v3300 = vunpack.c.l.b16 %v3260
      %v3301 = vunpack.c.h.b16 %v3260
      %v3302 = vunpack.c.l.b16 %v3261
      %v3303 = vunpack.c.h.b16 %v3261
      %v3304 = vunpack.c.l.b16 %v3262
      %v3305 = vunpack.c.h.b16 %v3262
      %v3306 = vunpack.c.l.b16 %v3263
      %v3307 = vunpack.c.h.b16 %v3263
      %v3308 = vunpack.c.l.b16 %v3264
      %v3309 = vunpack.c.h.b16 %v3264
      %v3310 = vunpack.c.l.b16 %v3265
      %v3311 = vunpack.c.h.b16 %v3265
      %v3312 = vunpack.c.l.b16 %v3266
      %v3313 = vunpack.c.h.b16 %v3266
      %v3314 = vunpack.c.l.b16 %v3267
      %v3315 = vunpack.c.h.b16 %v3267
      %v3316 = vunpack.c.l.b16 %v3268
      %v3317 = vunpack.c.h.b16 %v3268
      %v3318 = vunpack.c.l.b16 %v3269
      %v3319 = vunpack.c.h.b16 %v3269
      %v3320 = vunpack.c.l.b16 %v3270
      %v3321 = vunpack.c.h.b16 %v3270
      %v3322 = vunpack.c.l.b16 %v3271
      %v3323 = vunpack.c.h.b16 %v3271
      %v3324 = vunpack.c.l.b16 %v3272
      %v3325 = vunpack.c.h.b16 %v3272
      %v3326 = vunpack.c.l.b16 %v3273
      %v3327 = vunpack.c.h.b16 %v3273
      %v3328 = vpack.c.b16 %v3292, %v3292
      %v3329 = vpack.c.b16 %v3293, %v3293
      %v3330 = vpack.c.b16 %v3294, %v3294
      %v3331 = vpack.c.b16 %v3295, %v3295
      %v3332 = vpack.c.b16 %v3296, %v3296
      %v3333 = vpack.c.b16 %v3297, %v3297
      %v3334 = vpack.c.b16 %v3298, %v3298
      %v3335 = vpack.c.b16 %v3299, %v3299
      %v3336 = vpack.c.b16 %v3300, %v3300
      %v3337 = vpack.c.b16 %v3301, %v3301
      %v3338 = vpack.c.b16 %v3302, %v3302
      %v3339 = vpack.c.b16 %v3303, %v3303
      %v3340 = vpack.c.b16 %v3304, %v3304
      %v3341 = vpack.c.b16 %v3305, %v3305
      %v3342 = vpack.c.b16 %v3306, %v3306
      %v3343 = vpack.c.b16 %v3307, %v3307
      %v3344 = vpack.c.b16 %v3308, %v3308
      %v3345 = vpack.c.b16 %v3309, %v3309
      %v3346 = vpack.c.b16 %v3310, %v3310
      %v3347 = vpack.c.b16 %v3311, %v3311
      %v3348 = vpack.c.b16 %v3312, %v3312
      %v3349 = vpack.c.b16 %v3313, %v3313
      %v3350 = vpack.c.b16 %v3314, %v3314
      %v3351 = vpack.c.b16 %v3315, %v3315
      %v3352 = vpack.c.b16 %v3316, %v3316
      %v3353 = vpack.c.b16 %v3317, %v3317
      %v3354 = vpack.c.b16 %v3318, %v3318
      %v3355 = vpack.c.b16 %v3319, %v3319
      %v3356 = vpack.c.b16 %v3320, %v3320
      %v3357 = vpack.c.b16 %v3321, %v3321
      %v3358 = vpack.c.b16 %v3322, %v3322
      %v3359 = vpack.c.b16 %v3323, %v3323
      %v3360 = vpack.c.b16 %v3324, %v3324
      %v3361 = vpack.c.b16 %v3325, %v3325
      %v3362 = vpack.c.b16 %v3326, %v3326
      %v3363 = vpack.c.b16 %v3327, %v3327
      %vm3364 = vsmask.f32 5392
      %vm3365 = vmor %vm3060, %vm3364
      %v3367 = vshrl.u32 %v3328, 16
      %v3369 = vrot.slane %v3367, 6
      %v3370 = vshll.u32 %v3328, 16
      %v3372 = vrot.slane %v3370, 7
      %v3373 = vor.u32 %v3369, %v3372
      %v3374 = vrot.slane %v3373, 4
      %v3376 = vshrl.u32 %v3329, 16
      %v3378 = vrot.slane %v3376, 6
      %v3379 = vshll.u32 %v3329, 16
      %v3381 = vrot.slane %v3379, 7
      %v3382 = vor.u32 %v3378, %v3381
      %v3383 = vsel %vm3365, %v3374, %v3382
      %v3384 = vrot.slane %v3382, 4
      %v3386 = vshrl.u32 %v3330, 16
      %v3388 = vrot.slane %v3386, 6
      %v3389 = vshll.u32 %v3330, 16
      %v3391 = vrot.slane %v3389, 7
      %v3392 = vor.u32 %v3388, %v3391
      %v3393 = vsel %vm3365, %v3384, %v3392
      %v3394 = vrot.slane %v3392, 4
      %v3396 = vshrl.u32 %v3331, 16
      %v3398 = vrot.slane %v3396, 6
      %v3399 = vshll.u32 %v3331, 16
      %v3401 = vrot.slane %v3399, 7
      %v3402 = vor.u32 %v3398, %v3401
      %v3403 = vsel %vm3365, %v3394, %v3402
      %v3404 = vrot.slane %v3402, 4
      %v3406 = vshrl.u32 %v3332, 16
      %v3408 = vrot.slane %v3406, 6
      %v3409 = vshll.u32 %v3332, 16
      %v3411 = vrot.slane %v3409, 7
      %v3412 = vor.u32 %v3408, %v3411
      %v3413 = vsel %vm3365, %v3404, %v3412
      %v3414 = vrot.slane %v3412, 4
      %v3416 = vshrl.u32 %v3333, 16
      %v3418 = vrot.slane %v3416, 6
      %v3419 = vshll.u32 %v3333, 16
      %v3421 = vrot.slane %v3419, 7
      %v3422 = vor.u32 %v3418, %v3421
      %v3423 = vsel %vm3365, %v3414, %v3422
      %v3424 = vrot.slane %v3422, 4
      %v3426 = vshrl.u32 %v3334, 16
      %v3428 = vrot.slane %v3426, 6
      %v3429 = vshll.u32 %v3334, 16
      %v3431 = vrot.slane %v3429, 7
      %v3432 = vor.u32 %v3428, %v3431
      %v3433 = vsel %vm3365, %v3424, %v3432
      %v3434 = vrot.slane %v3432, 4
      %v3436 = vshrl.u32 %v3335, 16
      %v3438 = vrot.slane %v3436, 6
      %v3439 = vshll.u32 %v3335, 16
      %v3441 = vrot.slane %v3439, 7
      %v3442 = vor.u32 %v3438, %v3441
      %v3443 = vsel %vm3365, %v3434, %v3442
      %v3444 = vrot.slane %v3442, 4
      %v3446 = vshrl.u32 %v3336, 16
      %v3448 = vrot.slane %v3446, 6
      %v3449 = vshll.u32 %v3336, 16
      %v3451 = vrot.slane %v3449, 7
      %v3452 = vor.u32 %v3448, %v3451
      %v3453 = vsel %vm3365, %v3444, %v3452
      %v3454 = vrot.slane %v3452, 4
      %v3456 = vshrl.u32 %v3337, 16
      %v3458 = vrot.slane %v3456, 6
      %v3459 = vshll.u32 %v3337, 16
      %v3461 = vrot.slane %v3459, 7
      %v3462 = vor.u32 %v3458, %v3461
      %v3463 = vsel %vm3365, %v3454, %v3462
      %v3464 = vrot.slane %v3462, 4
      %v3466 = vshrl.u32 %v3338, 16
      %v3468 = vrot.slane %v3466, 6
      %v3469 = vshll.u32 %v3338, 16
      %v3471 = vrot.slane %v3469, 7
      %v3472 = vor.u32 %v3468, %v3471
      %v3473 = vsel %vm3365, %v3464, %v3472
      %v3474 = vrot.slane %v3472, 4
      %v3476 = vshrl.u32 %v3339, 16
      %v3478 = vrot.slane %v3476, 6
      %v3479 = vshll.u32 %v3339, 16
      %v3481 = vrot.slane %v3479, 7
      %v3482 = vor.u32 %v3478, %v3481
      %v3483 = vsel %vm3365, %v3474, %v3482
      %v3484 = vrot.slane %v3482, 4
      %v3486 = vshrl.u32 %v3340, 16
      %v3488 = vrot.slane %v3486, 6
      %v3489 = vshll.u32 %v3340, 16
      %v3491 = vrot.slane %v3489, 7
      %v3492 = vor.u32 %v3488, %v3491
      %v3493 = vsel %vm3365, %v3484, %v3492
      %v3494 = vrot.slane %v3492, 4
      %v3496 = vshrl.u32 %v3341, 16
      %v3498 = vrot.slane %v3496, 6
      %v3499 = vshll.u32 %v3341, 16
      %v3501 = vrot.slane %v3499, 7
      %v3502 = vor.u32 %v3498, %v3501
      %v3503 = vsel %vm3365, %v3494, %v3502
      %v3504 = vrot.slane %v3502, 4
      %v3506 = vshrl.u32 %v3342, 16
      %v3508 = vrot.slane %v3506, 6
      %v3509 = vshll.u32 %v3342, 16
      %v3511 = vrot.slane %v3509, 7
      %v3512 = vor.u32 %v3508, %v3511
      %v3513 = vsel %vm3365, %v3504, %v3512
      %v3514 = vrot.slane %v3512, 4
      %v3516 = vshrl.u32 %v3343, 16
      %v3518 = vrot.slane %v3516, 6
      %v3519 = vshll.u32 %v3343, 16
      %v3521 = vrot.slane %v3519, 7
      %v3522 = vor.u32 %v3518, %v3521
      %v3523 = vsel %vm3365, %v3514, %v3522
      %v3524 = vrot.slane %v3522, 4
      %v3526 = vshrl.u32 %v3344, 16
      %v3528 = vrot.slane %v3526, 6
      %v3529 = vshll.u32 %v3344, 16
      %v3531 = vrot.slane %v3529, 7
      %v3532 = vor.u32 %v3528, %v3531
      %v3533 = vsel %vm3365, %v3524, %v3532
      %v3534 = vrot.slane %v3532, 4
      %v3536 = vshrl.u32 %v3345, 16
      %v3538 = vrot.slane %v3536, 6
      %v3539 = vshll.u32 %v3345, 16
      %v3541 = vrot.slane %v3539, 7
      %v3542 = vor.u32 %v3538, %v3541
      %v3543 = vsel %vm3365, %v3534, %v3542
      %v3544 = vrot.slane %v3542, 4
      %v3546 = vshrl.u32 %v3346, 16
      %v3548 = vrot.slane %v3546, 6
      %v3549 = vshll.u32 %v3346, 16
      %v3551 = vrot.slane %v3549, 7
      %v3552 = vor.u32 %v3548, %v3551
      %v3553 = vsel %vm3365, %v3544, %v3552
      %v3554 = vrot.slane %v3552, 4
      %v3556 = vshrl.u32 %v3347, 16
      %v3558 = vrot.slane %v3556, 6
      %v3559 = vshll.u32 %v3347, 16
      %v3561 = vrot.slane %v3559, 7
      %v3562 = vor.u32 %v3558, %v3561
      %v3563 = vsel %vm3365, %v3554, %v3562
      %v3564 = vrot.slane %v3562, 4
      %v3566 = vshrl.u32 %v3348, 16
      %v3568 = vrot.slane %v3566, 6
      %v3569 = vshll.u32 %v3348, 16
      %v3571 = vrot.slane %v3569, 7
      %v3572 = vor.u32 %v3568, %v3571
      %v3573 = vsel %vm3365, %v3564, %v3572
      %v3574 = vrot.slane %v3572, 4
      %v3576 = vshrl.u32 %v3349, 16
      %v3578 = vrot.slane %v3576, 6
      %v3579 = vshll.u32 %v3349, 16
      %v3581 = vrot.slane %v3579, 7
      %v3582 = vor.u32 %v3578, %v3581
      %v3583 = vsel %vm3365, %v3574, %v3582
      %v3584 = vrot.slane %v3582, 4
      %v3586 = vshrl.u32 %v3350, 16
      %v3588 = vrot.slane %v3586, 6
      %v3589 = vshll.u32 %v3350, 16
      %v3591 = vrot.slane %v3589, 7
      %v3592 = vor.u32 %v3588, %v3591
      %v3593 = vsel %vm3365, %v3584, %v3592
      %v3594 = vrot.slane %v3592, 4
      %v3596 = vshrl.u32 %v3351, 16
      %v3598 = vrot.slane %v3596, 6
      %v3599 = vshll.u32 %v3351, 16
      %v3601 = vrot.slane %v3599, 7
      %v3602 = vor.u32 %v3598, %v3601
      %v3603 = vsel %vm3365, %v3594, %v3602
      %v3604 = vrot.slane %v3602, 4
      %v3606 = vshrl.u32 %v3352, 16
      %v3608 = vrot.slane %v3606, 6
      %v3609 = vshll.u32 %v3352, 16
      %v3611 = vrot.slane %v3609, 7
      %v3612 = vor.u32 %v3608, %v3611
      %v3613 = vsel %vm3365, %v3604, %v3612
      %v3614 = vrot.slane %v3612, 4
      %v3616 = vshrl.u32 %v3353, 16
      %v3618 = vrot.slane %v3616, 6
      %v3619 = vshll.u32 %v3353, 16
      %v3621 = vrot.slane %v3619, 7
      %v3622 = vor.u32 %v3618, %v3621
      %v3623 = vsel %vm3365, %v3614, %v3622
      %v3624 = vrot.slane %v3622, 4
      %v3626 = vshrl.u32 %v3354, 16
      %v3628 = vrot.slane %v3626, 6
      %v3629 = vshll.u32 %v3354, 16
      %v3631 = vrot.slane %v3629, 7
      %v3632 = vor.u32 %v3628, %v3631
      %v3633 = vsel %vm3365, %v3624, %v3632
      %v3634 = vrot.slane %v3632, 4
      %v3636 = vshrl.u32 %v3355, 16
      %v3638 = vrot.slane %v3636, 6
      %v3639 = vshll.u32 %v3355, 16
      %v3641 = vrot.slane %v3639, 7
      %v3642 = vor.u32 %v3638, %v3641
      %v3643 = vsel %vm3365, %v3634, %v3642
      %v3644 = vrot.slane %v3642, 4
      %v3646 = vshrl.u32 %v3356, 16
      %v3648 = vrot.slane %v3646, 6
      %v3649 = vshll.u32 %v3356, 16
      %v3651 = vrot.slane %v3649, 7
      %v3652 = vor.u32 %v3648, %v3651
      %v3653 = vsel %vm3365, %v3644, %v3652
      %v3654 = vrot.slane %v3652, 4
      %v3656 = vshrl.u32 %v3357, 16
      %v3658 = vrot.slane %v3656, 6
      %v3659 = vshll.u32 %v3357, 16
      %v3661 = vrot.slane %v3659, 7
      %v3662 = vor.u32 %v3658, %v3661
      %v3663 = vsel %vm3365, %v3654, %v3662
      %v3664 = vrot.slane %v3662, 4
      %v3666 = vshrl.u32 %v3358, 16
      %v3668 = vrot.slane %v3666, 6
      %v3669 = vshll.u32 %v3358, 16
      %v3671 = vrot.slane %v3669, 7
      %v3672 = vor.u32 %v3668, %v3671
      %v3673 = vsel %vm3365, %v3664, %v3672
      %v3674 = vrot.slane %v3672, 4
      %v3676 = vshrl.u32 %v3359, 16
      %v3678 = vrot.slane %v3676, 6
      %v3679 = vshll.u32 %v3359, 16
      %v3681 = vrot.slane %v3679, 7
      %v3682 = vor.u32 %v3678, %v3681
      %v3683 = vsel %vm3365, %v3674, %v3682
      %v3684 = vrot.slane %v3682, 4
      %v3686 = vshrl.u32 %v3360, 16
      %v3688 = vrot.slane %v3686, 6
      %v3689 = vshll.u32 %v3360, 16
      %v3691 = vrot.slane %v3689, 7
      %v3692 = vor.u32 %v3688, %v3691
      %v3693 = vsel %vm3365, %v3684, %v3692
      %v3694 = vrot.slane %v3692, 4
      %v3696 = vshrl.u32 %v3361, 16
      %v3698 = vrot.slane %v3696, 6
      %v3699 = vshll.u32 %v3361, 16
      %v3701 = vrot.slane %v3699, 7
      %v3702 = vor.u32 %v3698, %v3701
      %v3703 = vsel %vm3365, %v3694, %v3702
      %v3704 = vrot.slane %v3702, 4
      %v3706 = vshrl.u32 %v3362, 16
      %v3708 = vrot.slane %v3706, 6
      %v3709 = vshll.u32 %v3362, 16
      %v3711 = vrot.slane %v3709, 7
      %v3712 = vor.u32 %v3708, %v3711
      %v3713 = vsel %vm3365, %v3704, %v3712
      %v3714 = vrot.slane %v3712, 4
      %v3716 = vshrl.u32 %v3363, 16
      %v3718 = vrot.slane %v3716, 6
      %v3719 = vshll.u32 %v3363, 16
      %v3721 = vrot.slane %v3719, 7
      %v3722 = vor.u32 %v3718, %v3721
      %v3723 = vsel %vm3365, %v3714, %v3722
      %v3724 = vrot.slane %v3722, 4
      %3725 = vrot.lane.b32.xlu0 %v3373, 96
      %v3726 = vpop.permute.xlu0 %3725
      %3727 = vrot.lane.b32.xlu0 %v3383, 96
      %v3728 = vpop.permute.xlu0 %3727
      %3729 = vrot.lane.b32.xlu0 %v3393, 96
      %v3730 = vpop.permute.xlu0 %3729
      %3731 = vrot.lane.b32.xlu0 %v3403, 96
      %v3732 = vpop.permute.xlu0 %3731
      %3733 = vrot.lane.b32.xlu0 %v3413, 96
      %v3734 = vpop.permute.xlu0 %3733
      %3735 = vrot.lane.b32.xlu0 %v3423, 96
      %v3736 = vpop.permute.xlu0 %3735
      %3737 = vrot.lane.b32.xlu0 %v3433, 96
      %v3738 = vpop.permute.xlu0 %3737
      %3739 = vrot.lane.b32.xlu0 %v3443, 96
      %v3740 = vpop.permute.xlu0 %3739
      %3741 = vrot.lane.b32.xlu0 %v3453, 96
      %v3742 = vpop.permute.xlu0 %3741
      %3743 = vrot.lane.b32.xlu0 %v3463, 96
      %v3744 = vpop.permute.xlu0 %3743
      %3745 = vrot.lane.b32.xlu0 %v3473, 96
      %v3746 = vpop.permute.xlu0 %3745
      %3747 = vrot.lane.b32.xlu0 %v3483, 96
      %v3748 = vpop.permute.xlu0 %3747
      %3749 = vrot.lane.b32.xlu0 %v3493, 96
      %v3750 = vpop.permute.xlu0 %3749
      %3751 = vrot.lane.b32.xlu0 %v3503, 96
      %v3752 = vpop.permute.xlu0 %3751
      %3753 = vrot.lane.b32.xlu0 %v3513, 96
      %v3754 = vpop.permute.xlu0 %3753
      %3755 = vrot.lane.b32.xlu0 %v3523, 96
      %v3756 = vpop.permute.xlu0 %3755
      %3757 = vrot.lane.b32.xlu0 %v3533, 96
      %v3758 = vpop.permute.xlu0 %3757
      %3759 = vrot.lane.b32.xlu0 %v3543, 96
      %v3760 = vpop.permute.xlu0 %3759
      %3761 = vrot.lane.b32.xlu0 %v3553, 96
      %v3762 = vpop.permute.xlu0 %3761
      %3763 = vrot.lane.b32.xlu0 %v3563, 96
      %v3764 = vpop.permute.xlu0 %3763
      %3765 = vrot.lane.b32.xlu0 %v3573, 96
      %v3766 = vpop.permute.xlu0 %3765
      %3767 = vrot.lane.b32.xlu0 %v3583, 96
      %v3768 = vpop.permute.xlu0 %3767
      %3769 = vrot.lane.b32.xlu0 %v3593, 96
      %v3770 = vpop.permute.xlu0 %3769
      %3771 = vrot.lane.b32.xlu0 %v3603, 96
      %v3772 = vpop.permute.xlu0 %3771
      %3773 = vrot.lane.b32.xlu0 %v3613, 96
      %v3774 = vpop.permute.xlu0 %3773
      %3775 = vrot.lane.b32.xlu0 %v3623, 96
      %v3776 = vpop.permute.xlu0 %3775
      %3777 = vrot.lane.b32.xlu0 %v3633, 96
      %v3778 = vpop.permute.xlu0 %3777
      %3779 = vrot.lane.b32.xlu0 %v3643, 96
      %v3780 = vpop.permute.xlu0 %3779
      %3781 = vrot.lane.b32.xlu0 %v3653, 96
      %v3782 = vpop.permute.xlu0 %3781
      %3783 = vrot.lane.b32.xlu0 %v3663, 96
      %v3784 = vpop.permute.xlu0 %3783
      %3785 = vrot.lane.b32.xlu0 %v3673, 96
      %v3786 = vpop.permute.xlu0 %3785
      %3787 = vrot.lane.b32.xlu0 %v3683, 96
      %v3788 = vpop.permute.xlu0 %3787
      %3789 = vrot.lane.b32.xlu0 %v3693, 96
      %v3790 = vpop.permute.xlu0 %3789
      %3791 = vrot.lane.b32.xlu0 %v3703, 96
      %v3792 = vpop.permute.xlu0 %3791
      %3793 = vrot.lane.b32.xlu0 %v3713, 96
      %v3794 = vpop.permute.xlu0 %3793
      %3795 = vrot.lane.b32.xlu0 %v3723, 96
      %v3796 = vpop.permute.xlu0 %3795
      %3797 = vrot.lane.b32.xlu0 %v3724, 96
      %v3798 = vpop.permute.xlu0 %3797
      %v3836 = vld [vmem:[#allocation2 + $0x8] sm:$0xe]
      %v3837 = vsel %vm3067, %v3726, %v3836
      %3838 = vst [vmem:[#allocation2 + $0x8] sm:$0xe] %v3837
      %3839 = vst.msk [vmem:[#allocation2 + $0xc] sm:$0xf] %vm3056, %v3728
      %3840 = vst.msk [vmem:[#allocation2 + $0x10] sm:$0xf] %vm3056, %v3730
      %3841 = vst.msk [vmem:[#allocation2 + $0x14] sm:$0xf] %vm3056, %v3732
      %3842 = vst.msk [vmem:[#allocation2 + $0x18] sm:$0xf] %vm3056, %v3734
      %3843 = vst.msk [vmem:[#allocation2 + $0x1c] sm:$0xf] %vm3056, %v3736
      %3844 = vst.msk [vmem:[#allocation2 + $0x20] sm:$0xf] %vm3056, %v3738
      %3845 = vst.msk [vmem:[#allocation2 + $0x24] sm:$0xf] %vm3056, %v3740
      %3846 = vst.msk [vmem:[#allocation2 + $0x28] sm:$0xf] %vm3056, %v3742
      %3847 = vst.msk [vmem:[#allocation2 + $0x2c] sm:$0xf] %vm3056, %v3744
      %3848 = vst.msk [vmem:[#allocation2 + $0x30] sm:$0xf] %vm3056, %v3746
      %3849 = vst.msk [vmem:[#allocation2 + $0x34] sm:$0xf] %vm3056, %v3748
      %3850 = vst.msk [vmem:[#allocation2 + $0x38] sm:$0xf] %vm3056, %v3750
      %3851 = vst.msk [vmem:[#allocation2 + $0x3c] sm:$0xf] %vm3056, %v3752
      %3852 = vst.msk [vmem:[#allocation2 + $0x40] sm:$0xf] %vm3056, %v3754
      %3853 = vst.msk [vmem:[#allocation2 + $0x44] sm:$0xf] %vm3056, %v3756
      %3854 = vst.msk [vmem:[#allocation2 + $0x48] sm:$0xf] %vm3056, %v3758
      %3855 = vst.msk [vmem:[#allocation2 + $0x4c] sm:$0xf] %vm3056, %v3760
      %3856 = vst.msk [vmem:[#allocation2 + $0x50] sm:$0xf] %vm3056, %v3762
      %3857 = vst.msk [vmem:[#allocation2 + $0x54] sm:$0xf] %vm3056, %v3764
      %3858 = vst.msk [vmem:[#allocation2 + $0x58] sm:$0xf] %vm3056, %v3766
      %3859 = vst.msk [vmem:[#allocation2 + $0x5c] sm:$0xf] %vm3056, %v3768
      %3860 = vst.msk [vmem:[#allocation2 + $0x60] sm:$0xf] %vm3056, %v3770
      %3861 = vst.msk [vmem:[#allocation2 + $0x64] sm:$0xf] %vm3056, %v3772
      %3862 = vst.msk [vmem:[#allocation2 + $0x68] sm:$0xf] %vm3056, %v3774
      %3863 = vst.msk [vmem:[#allocation2 + $0x6c] sm:$0xf] %vm3056, %v3776
      %3864 = vst.msk [vmem:[#allocation2 + $0x70] sm:$0xf] %vm3056, %v3778
      %3865 = vst.msk [vmem:[#allocation2 + $0x74] sm:$0xf] %vm3056, %v3780
      %3866 = vst.msk [vmem:[#allocation2 + $0x78] sm:$0xf] %vm3056, %v3782
      %3867 = vst.msk [vmem:[#allocation2 + $0x7c] sm:$0xf] %vm3056, %v3784
      %3868 = vst.msk [vmem:[#allocation2 + $0x80] sm:$0xf] %vm3056, %v3786
      %3869 = vst.msk [vmem:[#allocation2 + $0x84] sm:$0xf] %vm3056, %v3788
      %3870 = vst.msk [vmem:[#allocation2 + $0x88] sm:$0xf] %vm3056, %v3790
      %3871 = vst.msk [vmem:[#allocation2 + $0x8c] sm:$0xf] %vm3056, %v3792
      %3872 = vst.msk [vmem:[#allocation2 + $0x90] sm:$0xf] %vm3056, %v3794
      %3873 = vst.msk [vmem:[#allocation2 + $0x94] sm:$0xf] %vm3056, %v3796
      %v3874 = vld [vmem:[#allocation2 + $0x98] sm:$0x3]
      %v3875 = vsel %vm3061, %v3798, %v3874
      %3876 = vst [vmem:[#allocation2 + $0x98] sm:$0x3] %v3875
      %v3877 = vld [vmem:[#allocation2] sm:$0xf]
      %v3878 = vld [vmem:[#allocation2 + $0x4] sm:$0xf]
      %v3879 = vld [vmem:[#allocation2 + $0x8] sm:$0xf]
      %v3880 = vld [vmem:[#allocation2 + $0xc] sm:$0xf]
      %v3881 = vld [vmem:[#allocation2 + $0x10] sm:$0xf]
      %v3882 = vld [vmem:[#allocation2 + $0x14] sm:$0xf]
      %v3883 = vld [vmem:[#allocation2 + $0x18] sm:$0xf]
      %v3884 = vld [vmem:[#allocation2 + $0x1c] sm:$0xf]
      %v3885 = vld [vmem:[#allocation2 + $0x20] sm:$0xf]
      %v3886 = vld [vmem:[#allocation2 + $0x24] sm:$0xf]
      %v3887 = vld [vmem:[#allocation2 + $0x28] sm:$0xf]
      %v3888 = vld [vmem:[#allocation2 + $0x2c] sm:$0xf]
      %v3889 = vld [vmem:[#allocation2 + $0x30] sm:$0xf]
      %v3890 = vld [vmem:[#allocation2 + $0x34] sm:$0xf]
      %v3891 = vld [vmem:[#allocation2 + $0x38] sm:$0xf]
      %v3892 = vld [vmem:[#allocation2 + $0x3c] sm:$0xf]
      %v3893 = vld [vmem:[#allocation2 + $0x40] sm:$0xf]
      %v3894 = vld [vmem:[#allocation2 + $0x44] sm:$0xf]
      %v3895 = vld [vmem:[#allocation2 + $0x48] sm:$0xf]
      %v3896 = vld [vmem:[#allocation2 + $0x4c] sm:$0xf]
      %v3897 = vld [vmem:[#allocation2 + $0x50] sm:$0xf]
      %v3898 = vld [vmem:[#allocation2 + $0x54] sm:$0xf]
      %v3899 = vld [vmem:[#allocation2 + $0x58] sm:$0xf]
      %v3900 = vld [vmem:[#allocation2 + $0x5c] sm:$0xf]
      %v3901 = vld [vmem:[#allocation2 + $0x60] sm:$0xf]
      %v3902 = vld [vmem:[#allocation2 + $0x64] sm:$0xf]
      %v3903 = vld [vmem:[#allocation2 + $0x68] sm:$0xf]
      %v3904 = vld [vmem:[#allocation2 + $0x6c] sm:$0xf]
      %v3905 = vld [vmem:[#allocation2 + $0x70] sm:$0xf]
      %v3906 = vld [vmem:[#allocation2 + $0x74] sm:$0xf]
      %v3907 = vld [vmem:[#allocation2 + $0x78] sm:$0xf]
      %v3908 = vld [vmem:[#allocation2 + $0x7c] sm:$0xf]
      %v3909 = vld [vmem:[#allocation2 + $0x80] sm:$0xf]
      %v3910 = vld [vmem:[#allocation2 + $0x84] sm:$0xf]
      %v3911 = vld [vmem:[#allocation2 + $0x88] sm:$0xf]
      %v3912 = vld [vmem:[#allocation2 + $0x8c] sm:$0xf]
      %v3913 = vld [vmem:[#allocation2 + $0x90] sm:$0x1]
      %v3914 = vld [vmem:[#allocation2] sm:$0xe]
      %v3951 = vunpack.c.l.b16 %v3877
      %v3952 = vunpack.c.l.b16 %v3878
      %v3953 = vunpack.c.l.b16 %v3879
      %v3954 = vunpack.c.l.b16 %v3880
      %v3955 = vunpack.c.l.b16 %v3881
      %v3956 = vunpack.c.l.b16 %v3882
      %v3957 = vunpack.c.l.b16 %v3883
      %v3958 = vunpack.c.l.b16 %v3884
      %v3959 = vunpack.c.l.b16 %v3885
      %v3960 = vunpack.c.l.b16 %v3886
      %v3961 = vunpack.c.l.b16 %v3887
      %v3962 = vunpack.c.l.b16 %v3888
      %v3963 = vunpack.c.l.b16 %v3889
      %v3964 = vunpack.c.l.b16 %v3890
      %v3965 = vunpack.c.l.b16 %v3891
      %v3966 = vunpack.c.l.b16 %v3892
      %v3967 = vunpack.c.l.b16 %v3893
      %v3968 = vunpack.c.l.b16 %v3894
      %v3969 = vunpack.c.l.b16 %v3895
      %v3970 = vunpack.c.l.b16 %v3896
      %v3971 = vunpack.c.l.b16 %v3897
      %v3972 = vunpack.c.l.b16 %v3898
      %v3973 = vunpack.c.l.b16 %v3899
      %v3974 = vunpack.c.l.b16 %v3900
      %v3975 = vunpack.c.l.b16 %v3901
      %v3976 = vunpack.c.l.b16 %v3902
      %v3977 = vunpack.c.l.b16 %v3903
      %v3978 = vunpack.c.l.b16 %v3904
      %v3979 = vunpack.c.l.b16 %v3905
      %v3980 = vunpack.c.l.b16 %v3906
      %v3981 = vunpack.c.l.b16 %v3907
      %v3982 = vunpack.c.l.b16 %v3908
      %v3983 = vunpack.c.l.b16 %v3909
      %v3984 = vunpack.c.l.b16 %v3910
      %v3985 = vunpack.c.l.b16 %v3911
      %v3986 = vunpack.c.l.b16 %v3912
      %v3987 = vpack.c.b16 %v3952, %v3951
      %v3988 = vpack.c.b16 %v3954, %v3953
      %v3989 = vpack.c.b16 %v3956, %v3955
      %v3990 = vpack.c.b16 %v3958, %v3957
      %v3991 = vpack.c.b16 %v3960, %v3959
      %v3992 = vpack.c.b16 %v3962, %v3961
      %v3993 = vpack.c.b16 %v3964, %v3963
      %v3994 = vpack.c.b16 %v3966, %v3965
      %v3995 = vpack.c.b16 %v3968, %v3967
      %v3996 = vpack.c.b16 %v3970, %v3969
      %v3997 = vpack.c.b16 %v3972, %v3971
      %v3998 = vpack.c.b16 %v3974, %v3973
      %v3999 = vpack.c.b16 %v3976, %v3975
      %v4000 = vpack.c.b16 %v3978, %v3977
      %v4001 = vpack.c.b16 %v3980, %v3979
      %v4002 = vpack.c.b16 %v3982, %v3981
      %v4003 = vpack.c.b16 %v3984, %v3983
      %v4004 = vpack.c.b16 %v3986, %v3985
      %v4006 = vunpack.c.l.b16 %v3913
      %v4007 = vpack.c.b16 %v4006, %v4006
      %v4009 = vshrl.u32 %v3987, 16
      %v4011 = vshll.u32 %v3987, 16
      %v4013 = vrot.slane %v4011, 1
      %v4014 = vor.u32 %v4009, %v4013
      %v4016 = vshll.u32 %v3988, 16
      %v4018 = vrot.slane %v4016, 1
      %v4019 = vsel %vm444, %v4014, %v4018
      %v4020 = vshrl.u32 %v3988, 16
      %v4022 = vor.u32 %v4020, %v4018
      %v4024 = vshll.u32 %v3989, 16
      %v4026 = vrot.slane %v4024, 1
      %v4027 = vsel %vm444, %v4022, %v4026
      %v4028 = vshrl.u32 %v3989, 16
      %v4030 = vor.u32 %v4028, %v4026
      %v4032 = vshll.u32 %v3990, 16
      %v4034 = vrot.slane %v4032, 1
      %v4035 = vsel %vm444, %v4030, %v4034
      %v4036 = vshrl.u32 %v3990, 16
      %v4038 = vor.u32 %v4036, %v4034
      %v4040 = vshll.u32 %v3991, 16
      %v4042 = vrot.slane %v4040, 1
      %v4043 = vsel %vm444, %v4038, %v4042
      %v4044 = vshrl.u32 %v3991, 16
      %v4046 = vor.u32 %v4044, %v4042
      %v4048 = vshll.u32 %v3992, 16
      %v4050 = vrot.slane %v4048, 1
      %v4051 = vsel %vm444, %v4046, %v4050
      %v4052 = vshrl.u32 %v3992, 16
      %v4054 = vor.u32 %v4052, %v4050
      %v4056 = vshll.u32 %v3993, 16
      %v4058 = vrot.slane %v4056, 1
      %v4059 = vsel %vm444, %v4054, %v4058
      %v4060 = vshrl.u32 %v3993, 16
      %v4062 = vor.u32 %v4060, %v4058
      %v4064 = vshll.u32 %v3994, 16
      %v4066 = vrot.slane %v4064, 1
      %v4067 = vsel %vm444, %v4062, %v4066
      %v4068 = vshrl.u32 %v3994, 16
      %v4070 = vor.u32 %v4068, %v4066
      %v4072 = vshll.u32 %v3995, 16
      %v4074 = vrot.slane %v4072, 1
      %v4075 = vsel %vm444, %v4070, %v4074
      %v4076 = vshrl.u32 %v3995, 16
      %v4078 = vor.u32 %v4076, %v4074
      %v4080 = vshll.u32 %v3996, 16
      %v4082 = vrot.slane %v4080, 1
      %v4083 = vsel %vm444, %v4078, %v4082
      %v4084 = vshrl.u32 %v3996, 16
      %v4086 = vor.u32 %v4084, %v4082
      %v4088 = vshll.u32 %v3997, 16
      %v4090 = vrot.slane %v4088, 1
      %v4091 = vsel %vm444, %v4086, %v4090
      %v4092 = vshrl.u32 %v3997, 16
      %v4094 = vor.u32 %v4092, %v4090
      %v4096 = vshll.u32 %v3998, 16
      %v4098 = vrot.slane %v4096, 1
      %v4099 = vsel %vm444, %v4094, %v4098
      %v4100 = vshrl.u32 %v3998, 16
      %v4102 = vor.u32 %v4100, %v4098
      %v4104 = vshll.u32 %v3999, 16
      %v4106 = vrot.slane %v4104, 1
      %v4107 = vsel %vm444, %v4102, %v4106
      %v4108 = vshrl.u32 %v3999, 16
      %v4110 = vor.u32 %v4108, %v4106
      %v4112 = vshll.u32 %v4000, 16
      %v4114 = vrot.slane %v4112, 1
      %v4115 = vsel %vm444, %v4110, %v4114
      %v4116 = vshrl.u32 %v4000, 16
      %v4118 = vor.u32 %v4116, %v4114
      %v4120 = vshll.u32 %v4001, 16
      %v4122 = vrot.slane %v4120, 1
      %v4123 = vsel %vm444, %v4118, %v4122
      %v4124 = vshrl.u32 %v4001, 16
      %v4126 = vor.u32 %v4124, %v4122
      %v4128 = vshll.u32 %v4002, 16
      %v4130 = vrot.slane %v4128, 1
      %v4131 = vsel %vm444, %v4126, %v4130
      %v4132 = vshrl.u32 %v4002, 16
      %v4134 = vor.u32 %v4132, %v4130
      %v4136 = vshll.u32 %v4003, 16
      %v4138 = vrot.slane %v4136, 1
      %v4139 = vsel %vm444, %v4134, %v4138
      %v4140 = vshrl.u32 %v4003, 16
      %v4142 = vor.u32 %v4140, %v4138
      %v4144 = vshll.u32 %v4004, 16
      %v4146 = vrot.slane %v4144, 1
      %v4147 = vsel %vm444, %v4142, %v4146
      %v4148 = vshrl.u32 %v4004, 16
      %v4150 = vor.u32 %v4148, %v4146
      %v4152 = vshll.u32 %v4007, 16
      %v4154 = vrot.slane %v4152, 1
      %v4155 = vsel %vm444, %v4150, %v4154
      %4156 = vrot.lane.b32.xlu0 %v4019, 32
      %v4157 = vpop.permute.xlu0 %4156
      %4158 = vrot.lane.b32.xlu0 %v4027, 32
      %v4159 = vpop.permute.xlu0 %4158
      %4160 = vrot.lane.b32.xlu0 %v4035, 32
      %v4161 = vpop.permute.xlu0 %4160
      %4162 = vrot.lane.b32.xlu0 %v4043, 32
      %v4163 = vpop.permute.xlu0 %4162
      %4164 = vrot.lane.b32.xlu0 %v4051, 32
      %v4165 = vpop.permute.xlu0 %4164
      %4166 = vrot.lane.b32.xlu0 %v4059, 32
      %v4167 = vpop.permute.xlu0 %4166
      %4168 = vrot.lane.b32.xlu0 %v4067, 32
      %v4169 = vpop.permute.xlu0 %4168
      %4170 = vrot.lane.b32.xlu0 %v4075, 32
      %v4171 = vpop.permute.xlu0 %4170
      %4172 = vrot.lane.b32.xlu0 %v4083, 32
      %v4173 = vpop.permute.xlu0 %4172
      %4174 = vrot.lane.b32.xlu0 %v4091, 32
      %v4175 = vpop.permute.xlu0 %4174
      %4176 = vrot.lane.b32.xlu0 %v4099, 32
      %v4177 = vpop.permute.xlu0 %4176
      %4178 = vrot.lane.b32.xlu0 %v4107, 32
      %v4179 = vpop.permute.xlu0 %4178
      %4180 = vrot.lane.b32.xlu0 %v4115, 32
      %v4181 = vpop.permute.xlu0 %4180
      %4182 = vrot.lane.b32.xlu0 %v4123, 32
      %v4183 = vpop.permute.xlu0 %4182
      %4184 = vrot.lane.b32.xlu0 %v4131, 32
      %v4185 = vpop.permute.xlu0 %4184
      %4186 = vrot.lane.b32.xlu0 %v4139, 32
      %v4187 = vpop.permute.xlu0 %4186
      %4188 = vrot.lane.b32.xlu0 %v4147, 32
      %v4189 = vpop.permute.xlu0 %4188
      %4190 = vrot.lane.b32.xlu0 %v4155, 32
      %v4191 = vpop.permute.xlu0 %4190
      %v4193 = vunpack.c.l.b16 %v3914
      %v4194 = vpack.c.b16 %v3952, %v4193
      %v4195 = vrot.slane %v4194, 1
      %v4196 = vrot.slane %v3988, 1
      %v4197 = vsel %vm632, %v4195, %v4196
      %v4198 = vrot.slane %v3989, 1
      %v4199 = vsel %vm632, %v4196, %v4198
      %v4200 = vrot.slane %v3990, 1
      %v4201 = vsel %vm632, %v4198, %v4200
      %v4202 = vrot.slane %v3991, 1
      %v4203 = vsel %vm632, %v4200, %v4202
      %v4204 = vrot.slane %v3992, 1
      %v4205 = vsel %vm632, %v4202, %v4204
      %v4206 = vrot.slane %v3993, 1
      %v4207 = vsel %vm632, %v4204, %v4206
      %v4208 = vrot.slane %v3994, 1
      %v4209 = vsel %vm632, %v4206, %v4208
      %v4210 = vrot.slane %v3995, 1
      %v4211 = vsel %vm632, %v4208, %v4210
      %v4212 = vrot.slane %v3996, 1
      %v4213 = vsel %vm632, %v4210, %v4212
      %v4214 = vrot.slane %v3997, 1
      %v4215 = vsel %vm632, %v4212, %v4214
      %v4216 = vrot.slane %v3998, 1
      %v4217 = vsel %vm632, %v4214, %v4216
      %v4218 = vrot.slane %v3999, 1
      %v4219 = vsel %vm632, %v4216, %v4218
      %v4220 = vrot.slane %v4000, 1
      %v4221 = vsel %vm632, %v4218, %v4220
      %v4222 = vrot.slane %v4001, 1
      %v4223 = vsel %vm632, %v4220, %v4222
      %v4224 = vrot.slane %v4002, 1
      %v4225 = vsel %vm632, %v4222, %v4224
      %v4226 = vrot.slane %v4003, 1
      %v4227 = vsel %vm632, %v4224, %v4226
      %v4228 = vrot.slane %v4004, 1
      %v4229 = vsel %vm632, %v4226, %v4228
      %v4230 = vrot.slane %v4007, 1
      %v4231 = vsel %vm632, %v4228, %v4230
      %4232 = vrot.lane.b32.xlu0 %v4197, 64
      %v4233 = vpop.permute.xlu0 %4232
      %4234 = vrot.lane.b32.xlu0 %v4199, 64
      %v4235 = vpop.permute.xlu0 %4234
      %4236 = vrot.lane.b32.xlu0 %v4201, 64
      %v4237 = vpop.permute.xlu0 %4236
      %4238 = vrot.lane.b32.xlu0 %v4203, 64
      %v4239 = vpop.permute.xlu0 %4238
      %4240 = vrot.lane.b32.xlu0 %v4205, 64
      %v4241 = vpop.permute.xlu0 %4240
      %4242 = vrot.lane.b32.xlu0 %v4207, 64
      %v4243 = vpop.permute.xlu0 %4242
      %4244 = vrot.lane.b32.xlu0 %v4209, 64
      %v4245 = vpop.permute.xlu0 %4244
      %4246 = vrot.lane.b32.xlu0 %v4211, 64
      %v4247 = vpop.permute.xlu0 %4246
      %4248 = vrot.lane.b32.xlu0 %v4213, 64
      %v4249 = vpop.permute.xlu0 %4248
      %4250 = vrot.lane.b32.xlu0 %v4215, 64
      %v4251 = vpop.permute.xlu0 %4250
      %4252 = vrot.lane.b32.xlu0 %v4217, 64
      %v4253 = vpop.permute.xlu0 %4252
      %4254 = vrot.lane.b32.xlu0 %v4219, 64
      %v4255 = vpop.permute.xlu0 %4254
      %4256 = vrot.lane.b32.xlu0 %v4221, 64
      %v4257 = vpop.permute.xlu0 %4256
      %4258 = vrot.lane.b32.xlu0 %v4223, 64
      %v4259 = vpop.permute.xlu0 %4258
      %4260 = vrot.lane.b32.xlu0 %v4225, 64
      %v4261 = vpop.permute.xlu0 %4260
      %4262 = vrot.lane.b32.xlu0 %v4227, 64
      %v4263 = vpop.permute.xlu0 %4262
      %4264 = vrot.lane.b32.xlu0 %v4229, 64
      %v4265 = vpop.permute.xlu0 %4264
      %4266 = vrot.lane.b32.xlu0 %v4231, 64
      %v4267 = vpop.permute.xlu0 %4266
      %vm4268 = vcmask 261120
      %v4270 = vsel %vm4268, %v3987, %v4157
      %v4272 = vsel %vm4268, %v3988, %v4159
      %v4274 = vsel %vm4268, %v3989, %v4161
      %v4276 = vsel %vm4268, %v3990, %v4163
      %v4278 = vsel %vm4268, %v3991, %v4165
      %v4280 = vsel %vm4268, %v3992, %v4167
      %v4282 = vsel %vm4268, %v3993, %v4169
      %v4284 = vsel %vm4268, %v3994, %v4171
      %v4286 = vsel %vm4268, %v3995, %v4173
      %v4288 = vsel %vm4268, %v3996, %v4175
      %v4290 = vsel %vm4268, %v3997, %v4177
      %v4292 = vsel %vm4268, %v3998, %v4179
      %v4294 = vsel %vm4268, %v3999, %v4181
      %v4296 = vsel %vm4268, %v4000, %v4183
      %v4298 = vsel %vm4268, %v4001, %v4185
      %v4300 = vsel %vm4268, %v4002, %v4187
      %v4302 = vsel %vm4268, %v4003, %v4189
      %v4304 = vsel %vm4268, %v4004, %v4191
      %vm4305 = vcmask 523264
      %v4307 = vsel %vm4305, %v4270, %v4233
      %v4309 = vsel %vm4305, %v4272, %v4235
      %v4311 = vsel %vm4305, %v4274, %v4237
      %v4313 = vsel %vm4305, %v4276, %v4239
      %v4315 = vsel %vm4305, %v4278, %v4241
      %v4317 = vsel %vm4305, %v4280, %v4243
      %v4319 = vsel %vm4305, %v4282, %v4245
      %v4321 = vsel %vm4305, %v4284, %v4247
      %v4323 = vsel %vm4305, %v4286, %v4249
      %v4325 = vsel %vm4305, %v4288, %v4251
      %v4327 = vsel %vm4305, %v4290, %v4253
      %v4329 = vsel %vm4305, %v4292, %v4255
      %v4331 = vsel %vm4305, %v4294, %v4257
      %v4333 = vsel %vm4305, %v4296, %v4259
      %v4335 = vsel %vm4305, %v4298, %v4261
      %v4337 = vsel %vm4305, %v4300, %v4263
      %v4339 = vsel %vm4305, %v4302, %v4265
      %v4341 = vsel %vm4305, %v4304, %v4267
      %v4342 = vld [vmem:[%s5] sm:$0xf]
      %v4343 = vld [vmem:[%s5 + $0x4] sm:$0xf]
      %v4344 = vld [vmem:[%s5 + $0x8] sm:$0xf]
      %v4345 = vld [vmem:[%s5 + $0xc] sm:$0xf]
      %v4346 = vld [vmem:[%s5 + $0x10] sm:$0xf]
      %v4347 = vld [vmem:[%s5 + $0x14] sm:$0xf]
      %v4348 = vld [vmem:[%s5 + $0x18] sm:$0xf]
      %v4349 = vld [vmem:[%s5 + $0x1c] sm:$0xf]
      %v4350 = vld [vmem:[%s5 + $0x20] sm:$0xf]
      %v4351 = vld [vmem:[%s5 + $0x24] sm:$0xf]
      %v4352 = vld [vmem:[%s5 + $0x28] sm:$0xf]
      %v4353 = vld [vmem:[%s5 + $0x2c] sm:$0xf]
      %v4366 = vunpack.c.l.b16 %v4342
      %v4367 = vunpack.c.l.b16 %v4343
      %v4368 = vunpack.c.l.b16 %v4344
      %v4369 = vunpack.c.l.b16 %v4345
      %v4370 = vunpack.c.l.b16 %v4346
      %v4371 = vunpack.c.l.b16 %v4347
      %v4372 = vunpack.c.l.b16 %v4348
      %v4373 = vunpack.c.l.b16 %v4349
      %v4374 = vunpack.c.l.b16 %v4350
      %v4375 = vunpack.c.l.b16 %v4351
      %v4376 = vunpack.c.l.b16 %v4352
      %v4377 = vunpack.c.l.b16 %v4353
      %v4378 = vpack.c.b16 %v4367, %v4366
      %v4379 = vpack.c.b16 %v4369, %v4368
      %v4380 = vpack.c.b16 %v4371, %v4370
      %v4381 = vpack.c.b16 %v4373, %v4372
      %v4382 = vpack.c.b16 %v4375, %v4374
      %v4383 = vpack.c.b16 %v4377, %v4376
      %v4390 = vsel %vm743, %v4307, 0
      %v4392 = vsel %vm743, %v4309, 0
      %v4394 = vsel %vm743, %v4311, 0
      %v4396 = vsel %vm743, %v4313, 0
      %v4398 = vsel %vm743, %v4315, 0
      %v4400 = vsel %vm743, %v4317, 0
      %v4402 = vsel %vm743, %v4319, 0
      %v4404 = vsel %vm743, %v4321, 0
      %v4406 = vsel %vm743, %v4323, 0
      %v4408 = vsel %vm743, %v4325, 0
      %v4410 = vsel %vm743, %v4327, 0
      %v4412 = vsel %vm743, %v4329, 0
      %v4414 = vsel %vm743, %v4331, 0
      %v4416 = vsel %vm743, %v4333, 0
      %v4418 = vsel %vm743, %v4335, 0
      %v4420 = vsel %vm743, %v4337, 0
      %v4422 = vsel %vm743, %v4339, 0
      %v4424 = vsel %vm743, %v4341, 0
      %4426 = vmatprep.subr.bf16.mxu0 0
      %4427 = vmatpush1.bf16.msra.mxu0 %v4378
      %4428 = vmatprep.subr.bf16.mxu0 0
      %4429 = vmatpush1.bf16.msra.mxu0 %v4379
      %4430 = vmatprep.subr.bf16.mxu0 0
      %4431 = vmatpush1.bf16.msra.mxu0 %v4380
      %4432 = vmatprep.subr.bf16.mxu0 0
      %4433 = vmatpush1.bf16.msra.mxu0 %v4381
      %4434 = vmatprep.subr.bf16.mxu0 0
      %4435 = vmatpush1.bf16.msra.mxu0 %v4382
      %4436 = vmatprep.subr.bf16.mxu0 0
      %4437 = vmatpush1.bf16.msra.mxu0 %v4383
      %4438 = vmatprep.subr.bf16.mxu0 0
      %4439 = vmatpush1.bf16.msra.mxu0 0
      %4440 = vmatprep.subr.bf16.mxu0 0
      %4441 = vmatpush1.bf16.msra.mxu0 0
      %4442 = vmatprep.subr.bf16.mxu0 0
      %4443 = vmatpush1.bf16.msra.mxu0 0
      %4444 = vmatprep.subr.bf16.mxu0 0
      %4445 = vmatpush1.bf16.msra.mxu0 0
      %4446 = vmatprep.subr.bf16.mxu0 0
      %4447 = vmatpush1.bf16.msra.mxu0 0
      %4448 = vmatprep.subr.bf16.mxu0 0
      %4449 = vmatpush1.bf16.msra.mxu0 0
      %4450 = vmatprep.subr.bf16.mxu0 0
      %4451 = vmatpush1.bf16.msra.mxu0 0
      %4452 = vmatprep.subr.bf16.mxu0 0
      %4453 = vmatpush1.bf16.msra.mxu0 0
      %4454 = vmatprep.subr.bf16.mxu0 0
      %4455 = vmatpush1.bf16.msra.mxu0 0
      %4456 = vmatprep.subr.bf16.mxu0 0
      %4457 = vmatpush1.bf16.msra.mxu0 0
      %4458 = vmatprep.mubr.bf16.mxu0 0
      %4459 = vmatmul.mubr.bf16.gmra.mrb[0].mxu0 %v4390
      %v4460 = vpop.f32.mrb[0].mxu0
      %v4461 = vadd.f32 0.0, %v4460
      %v4462 = vpop.f32.mrb[0].mxu0
      %v4463 = vpop.f32.mrb[0].mxu0
      %v4464 = vadd.f32 0.0, %v4463
      %v4465 = vpop.f32.mrb[0].mxu0
      %4466 = vmatprep.mubr.bf16.mxu0 0
      %4467 = vmatmul.mubr.bf16.gmra.mrb[0].mxu0 %v4392
      %v4468 = vpop.f32.mrb[0].mxu0
      %v4469 = vadd.f32 0.0, %v4468
      %v4470 = vpop.f32.mrb[0].mxu0
      %v4471 = vpop.f32.mrb[0].mxu0
      %v4472 = vadd.f32 0.0, %v4471
      %v4473 = vpop.f32.mrb[0].mxu0
      %4474 = vmatprep.mubr.bf16.mxu0 0
      %4475 = vmatmul.mubr.bf16.gmra.mrb[0].mxu0 %v4394
      %v4476 = vpop.f32.mrb[0].mxu0
      %v4477 = vadd.f32 0.0, %v4476
      %v4478 = vpop.f32.mrb[0].mxu0
      %v4479 = vpop.f32.mrb[0].mxu0
      %v4480 = vadd.f32 0.0, %v4479
      %v4481 = vpop.f32.mrb[0].mxu0
      %4482 = vmatprep.mubr.bf16.mxu0 0
      %4483 = vmatmul.mubr.bf16.gmra.mrb[0].mxu0 %v4396
      %v4484 = vpop.f32.mrb[0].mxu0
      %v4485 = vadd.f32 0.0, %v4484
      %v4486 = vpop.f32.mrb[0].mxu0
      %v4487 = vpop.f32.mrb[0].mxu0
      %v4488 = vadd.f32 0.0, %v4487
      %v4489 = vpop.f32.mrb[0].mxu0
      %4490 = vmatprep.mubr.bf16.mxu0 0
      %4491 = vmatmul.mubr.bf16.gmra.mrb[0].mxu0 %v4398
      %v4492 = vpop.f32.mrb[0].mxu0
      %v4493 = vadd.f32 0.0, %v4492
      %v4494 = vpop.f32.mrb[0].mxu0
      %v4495 = vpop.f32.mrb[0].mxu0
      %v4496 = vadd.f32 0.0, %v4495
      %v4497 = vpop.f32.mrb[0].mxu0
      %4498 = vmatprep.mubr.bf16.mxu0 0
      %4499 = vmatmul.mubr.bf16.gmra.mrb[0].mxu0 %v4400
      %v4500 = vpop.f32.mrb[0].mxu0
      %v4501 = vadd.f32 0.0, %v4500
      %v4502 = vpop.f32.mrb[0].mxu0
      %v4503 = vpop.f32.mrb[0].mxu0
      %v4504 = vadd.f32 0.0, %v4503
      %v4505 = vpop.f32.mrb[0].mxu0
      %4506 = vmatprep.mubr.bf16.mxu0 0
      %4507 = vmatmul.mubr.bf16.gmra.mrb[0].mxu0 %v4402
      %v4508 = vpop.f32.mrb[0].mxu0
      %v4509 = vadd.f32 0.0, %v4508
      %v4510 = vpop.f32.mrb[0].mxu0
      %v4511 = vpop.f32.mrb[0].mxu0
      %v4512 = vadd.f32 0.0, %v4511
      %v4513 = vpop.f32.mrb[0].mxu0
      %4514 = vmatprep.mubr.bf16.mxu0 0
      %4515 = vmatmul.mubr.bf16.gmra.mrb[0].mxu0 %v4404
      %v4516 = vpop.f32.mrb[0].mxu0
      %v4517 = vadd.f32 0.0, %v4516
      %v4518 = vpop.f32.mrb[0].mxu0
      %v4519 = vpop.f32.mrb[0].mxu0
      %v4520 = vadd.f32 0.0, %v4519
      %v4521 = vpop.f32.mrb[0].mxu0
      %4522 = vmatprep.mubr.bf16.mxu0 0
      %4523 = vmatmul.mubr.bf16.gmra.mrb[0].mxu0 %v4406
      %v4524 = vpop.f32.mrb[0].mxu0
      %v4525 = vadd.f32 0.0, %v4524
      %v4526 = vpop.f32.mrb[0].mxu0
      %v4527 = vpop.f32.mrb[0].mxu0
      %v4528 = vadd.f32 0.0, %v4527
      %v4529 = vpop.f32.mrb[0].mxu0
      %4530 = vmatprep.mubr.bf16.mxu0 0
      %4531 = vmatmul.mubr.bf16.gmra.mrb[0].mxu0 %v4408
      %v4532 = vpop.f32.mrb[0].mxu0
      %v4533 = vadd.f32 0.0, %v4532
      %v4534 = vpop.f32.mrb[0].mxu0
      %v4535 = vpop.f32.mrb[0].mxu0
      %v4536 = vadd.f32 0.0, %v4535
      %v4537 = vpop.f32.mrb[0].mxu0
      %4538 = vmatprep.mubr.bf16.mxu0 0
      %4539 = vmatmul.mubr.bf16.gmra.mrb[0].mxu0 %v4410
      %v4540 = vpop.f32.mrb[0].mxu0
      %v4541 = vadd.f32 0.0, %v4540
      %v4542 = vpop.f32.mrb[0].mxu0
      %v4543 = vpop.f32.mrb[0].mxu0
      %v4544 = vadd.f32 0.0, %v4543
      %v4545 = vpop.f32.mrb[0].mxu0
      %4546 = vmatprep.mubr.bf16.mxu0 0
      %4547 = vmatmul.mubr.bf16.gmra.mrb[0].mxu0 %v4412
      %v4548 = vpop.f32.mrb[0].mxu0
      %v4549 = vadd.f32 0.0, %v4548
      %v4550 = vpop.f32.mrb[0].mxu0
      %v4551 = vpop.f32.mrb[0].mxu0
      %v4552 = vadd.f32 0.0, %v4551
      %v4553 = vpop.f32.mrb[0].mxu0
      %4554 = vmatprep.mubr.bf16.mxu0 0
      %4555 = vmatmul.mubr.bf16.gmra.mrb[0].mxu0 %v4414
      %v4556 = vpop.f32.mrb[0].mxu0
      %v4557 = vadd.f32 0.0, %v4556
      %v4558 = vpop.f32.mrb[0].mxu0
      %v4559 = vpop.f32.mrb[0].mxu0
      %v4560 = vadd.f32 0.0, %v4559
      %v4561 = vpop.f32.mrb[0].mxu0
      %4562 = vmatprep.mubr.bf16.mxu0 0
      %4563 = vmatmul.mubr.bf16.gmra.mrb[0].mxu0 %v4416
      %v4564 = vpop.f32.mrb[0].mxu0
      %v4565 = vadd.f32 0.0, %v4564
      %v4566 = vpop.f32.mrb[0].mxu0
      %v4567 = vpop.f32.mrb[0].mxu0
      %v4568 = vadd.f32 0.0, %v4567
      %v4569 = vpop.f32.mrb[0].mxu0
      %4570 = vmatprep.mubr.bf16.mxu0 0
      %4571 = vmatmul.mubr.bf16.gmra.mrb[0].mxu0 %v4418
      %v4572 = vpop.f32.mrb[0].mxu0
      %v4573 = vadd.f32 0.0, %v4572
      %v4574 = vpop.f32.mrb[0].mxu0
      %v4575 = vpop.f32.mrb[0].mxu0
      %v4576 = vadd.f32 0.0, %v4575
      %v4577 = vpop.f32.mrb[0].mxu0
      %4578 = vmatprep.mubr.bf16.mxu0 0
      %4579 = vmatmul.mubr.bf16.gmra.mrb[0].mxu0 %v4420
      %v4580 = vpop.f32.mrb[0].mxu0
      %v4581 = vadd.f32 0.0, %v4580
      %v4582 = vpop.f32.mrb[0].mxu0
      %v4583 = vpop.f32.mrb[0].mxu0
      %v4584 = vadd.f32 0.0, %v4583
      %v4585 = vpop.f32.mrb[0].mxu0
      %4586 = vmatprep.mubr.bf16.mxu0 0
      %4587 = vmatmul.mubr.bf16.gmra.mrb[0].mxu0 %v4422
      %v4588 = vpop.f32.mrb[0].mxu0
      %v4589 = vadd.f32 0.0, %v4588
      %v4590 = vpop.f32.mrb[0].mxu0
      %v4591 = vpop.f32.mrb[0].mxu0
      %v4592 = vadd.f32 0.0, %v4591
      %v4593 = vpop.f32.mrb[0].mxu0
      %4594 = vmatprep.mubr.bf16.mxu0 0
      %4595 = vmatmul.mubr.bf16.gmra.mrb[0].mxu0 %v4424
      %v4596 = vpop.f32.mrb[0].mxu0
      %v4597 = vadd.f32 0.0, %v4596
      %v4598 = vpop.f32.mrb[0].mxu0
      %v4599 = vpop.f32.mrb[0].mxu0
      %v4600 = vadd.f32 0.0, %v4599
      %v4601 = vpop.f32.mrb[0].mxu0
      %4602 = vdwg.mxu0
      %4639 = vrot.lane.b32.xlu0 %v4461, 64
      %v4640 = vpop.permute.xlu0 %4639
      %4641 = vrot.lane.b32.xlu0 %v4464, 64
      %v4642 = vpop.permute.xlu0 %4641
      %4643 = vrot.lane.b32.xlu0 %v4469, 64
      %v4644 = vpop.permute.xlu0 %4643
      %4645 = vrot.lane.b32.xlu0 %v4472, 64
      %v4646 = vpop.permute.xlu0 %4645
      %4647 = vrot.lane.b32.xlu0 %v4477, 64
      %v4648 = vpop.permute.xlu0 %4647
      %4649 = vrot.lane.b32.xlu0 %v4480, 64
      %v4650 = vpop.permute.xlu0 %4649
      %4651 = vrot.lane.b32.xlu0 %v4485, 64
      %v4652 = vpop.permute.xlu0 %4651
      %4653 = vrot.lane.b32.xlu0 %v4488, 64
      %v4654 = vpop.permute.xlu0 %4653
      %4655 = vrot.lane.b32.xlu0 %v4493, 64
      %v4656 = vpop.permute.xlu0 %4655
      %4657 = vrot.lane.b32.xlu0 %v4496, 64
      %v4658 = vpop.permute.xlu0 %4657
      %4659 = vrot.lane.b32.xlu0 %v4501, 64
      %v4660 = vpop.permute.xlu0 %4659
      %4661 = vrot.lane.b32.xlu0 %v4504, 64
      %v4662 = vpop.permute.xlu0 %4661
      %4663 = vrot.lane.b32.xlu0 %v4509, 64
      %v4664 = vpop.permute.xlu0 %4663
      %4665 = vrot.lane.b32.xlu0 %v4512, 64
      %v4666 = vpop.permute.xlu0 %4665
      %4667 = vrot.lane.b32.xlu0 %v4517, 64
      %v4668 = vpop.permute.xlu0 %4667
      %4669 = vrot.lane.b32.xlu0 %v4520, 64
      %v4670 = vpop.permute.xlu0 %4669
      %4671 = vrot.lane.b32.xlu0 %v4525, 64
      %v4672 = vpop.permute.xlu0 %4671
      %4673 = vrot.lane.b32.xlu0 %v4528, 64
      %v4674 = vpop.permute.xlu0 %4673
      %4675 = vrot.lane.b32.xlu0 %v4533, 64
      %v4676 = vpop.permute.xlu0 %4675
      %4677 = vrot.lane.b32.xlu0 %v4536, 64
      %v4678 = vpop.permute.xlu0 %4677
      %4679 = vrot.lane.b32.xlu0 %v4541, 64
      %v4680 = vpop.permute.xlu0 %4679
      %4681 = vrot.lane.b32.xlu0 %v4544, 64
      %v4682 = vpop.permute.xlu0 %4681
      %4683 = vrot.lane.b32.xlu0 %v4549, 64
      %v4684 = vpop.permute.xlu0 %4683
      %4685 = vrot.lane.b32.xlu0 %v4552, 64
      %v4686 = vpop.permute.xlu0 %4685
      %4687 = vrot.lane.b32.xlu0 %v4557, 64
      %v4688 = vpop.permute.xlu0 %4687
      %4689 = vrot.lane.b32.xlu0 %v4560, 64
      %v4690 = vpop.permute.xlu0 %4689
      %4691 = vrot.lane.b32.xlu0 %v4565, 64
      %v4692 = vpop.permute.xlu0 %4691
      %4693 = vrot.lane.b32.xlu0 %v4568, 64
      %v4694 = vpop.permute.xlu0 %4693
      %4695 = vrot.lane.b32.xlu0 %v4573, 64
      %v4696 = vpop.permute.xlu0 %4695
      %4697 = vrot.lane.b32.xlu0 %v4576, 64
      %v4698 = vpop.permute.xlu0 %4697
      %4699 = vrot.lane.b32.xlu0 %v4581, 64
      %v4700 = vpop.permute.xlu0 %4699
      %4701 = vrot.lane.b32.xlu0 %v4584, 64
      %v4702 = vpop.permute.xlu0 %4701
      %4703 = vrot.lane.b32.xlu0 %v4589, 64
      %v4704 = vpop.permute.xlu0 %4703
      %4705 = vrot.lane.b32.xlu0 %v4592, 64
      %v4706 = vpop.permute.xlu0 %4705
      %4707 = vrot.lane.b32.xlu0 %v4597, 64
      %v4708 = vpop.permute.xlu0 %4707
      %4709 = vrot.lane.b32.xlu0 %v4600, 64
      %v4710 = vpop.permute.xlu0 %4709
      %v4747 = vadd.f32 %v2984, %v4640
      %v4748 = vadd.f32 %v2985, %v4642
      %v4749 = vadd.f32 %v2986, %v4644
      %v4750 = vadd.f32 %v2987, %v4646
      %v4751 = vadd.f32 %v2988, %v4648
      %v4752 = vadd.f32 %v2989, %v4650
      %v4753 = vadd.f32 %v2990, %v4652
      %v4754 = vadd.f32 %v2991, %v4654
      %v4755 = vadd.f32 %v2992, %v4656
      %v4756 = vadd.f32 %v2993, %v4658
      %v4757 = vadd.f32 %v2994, %v4660
      %v4758 = vadd.f32 %v2995, %v4662
      %v4759 = vadd.f32 %v2996, %v4664
      %v4760 = vadd.f32 %v2997, %v4666
      %v4761 = vadd.f32 %v2998, %v4668
      %v4762 = vadd.f32 %v2999, %v4670
      %v4763 = vadd.f32 %v3000, %v4672
      %v4764 = vadd.f32 %v3001, %v4674
      %v4765 = vadd.f32 %v3002, %v4676
      %v4766 = vadd.f32 %v3003, %v4678
      %v4767 = vadd.f32 %v3004, %v4680
      %v4768 = vadd.f32 %v3005, %v4682
      %v4769 = vadd.f32 %v3006, %v4684
      %v4770 = vadd.f32 %v3007, %v4686
      %v4771 = vadd.f32 %v3008, %v4688
      %v4772 = vadd.f32 %v3009, %v4690
      %v4773 = vadd.f32 %v3010, %v4692
      %v4774 = vadd.f32 %v3011, %v4694
      %v4775 = vadd.f32 %v3012, %v4696
      %v4776 = vadd.f32 %v3013, %v4698
      %v4777 = vadd.f32 %v3014, %v4700
      %v4778 = vadd.f32 %v3015, %v4702
      %v4779 = vadd.f32 %v3016, %v4704
      %v4780 = vadd.f32 %v3017, %v4706
      %v4781 = vadd.f32 %v3018, %v4708
      %v4782 = vadd.f32 %v3019, %v4710
      %v4783 = vld [vmem:[#allocation2 + $0x8] sm:$0xe]
      %v4784 = vld [vmem:[#allocation2 + $0xc] sm:$0xf]
      %v4785 = vld [vmem:[#allocation2 + $0x10] sm:$0xf]
      %v4786 = vld [vmem:[#allocation2 + $0x14] sm:$0xf]
      %v4787 = vld [vmem:[#allocation2 + $0x18] sm:$0xf]
      %v4788 = vld [vmem:[#allocation2 + $0x1c] sm:$0xf]
      %v4789 = vld [vmem:[#allocation2 + $0x20] sm:$0xf]
      %v4790 = vld [vmem:[#allocation2 + $0x24] sm:$0xf]
      %v4791 = vld [vmem:[#allocation2 + $0x28] sm:$0xf]
      %v4792 = vld [vmem:[#allocation2 + $0x2c] sm:$0xf]
      %v4793 = vld [vmem:[#allocation2 + $0x30] sm:$0xf]
      %v4794 = vld [vmem:[#allocation2 + $0x34] sm:$0xf]
      %v4795 = vld [vmem:[#allocation2 + $0x38] sm:$0xf]
      %v4796 = vld [vmem:[#allocation2 + $0x3c] sm:$0xf]
      %v4797 = vld [vmem:[#allocation2 + $0x40] sm:$0xf]
      %v4798 = vld [vmem:[#allocation2 + $0x44] sm:$0xf]
      %v4799 = vld [vmem:[#allocation2 + $0x48] sm:$0xf]
      %v4800 = vld [vmem:[#allocation2 + $0x4c] sm:$0xf]
      %v4801 = vld [vmem:[#allocation2 + $0x50] sm:$0xf]
      %v4802 = vld [vmem:[#allocation2 + $0x54] sm:$0xf]
      %v4803 = vld [vmem:[#allocation2 + $0x58] sm:$0xf]
      %v4804 = vld [vmem:[#allocation2 + $0x5c] sm:$0xf]
      %v4805 = vld [vmem:[#allocation2 + $0x60] sm:$0xf]
      %v4806 = vld [vmem:[#allocation2 + $0x64] sm:$0xf]
      %v4807 = vld [vmem:[#allocation2 + $0x68] sm:$0xf]
      %v4808 = vld [vmem:[#allocation2 + $0x6c] sm:$0xf]
      %v4809 = vld [vmem:[#allocation2 + $0x70] sm:$0xf]
      %v4810 = vld [vmem:[#allocation2 + $0x74] sm:$0xf]
      %v4811 = vld [vmem:[#allocation2 + $0x78] sm:$0xf]
      %v4812 = vld [vmem:[#allocation2 + $0x7c] sm:$0xf]
      %v4813 = vld [vmem:[#allocation2 + $0x80] sm:$0xf]
      %v4814 = vld [vmem:[#allocation2 + $0x84] sm:$0xf]
      %v4815 = vld [vmem:[#allocation2 + $0x88] sm:$0xf]
      %v4816 = vld [vmem:[#allocation2 + $0x8c] sm:$0xf]
      %v4817 = vld [vmem:[#allocation2 + $0x90] sm:$0xf]
      %v4818 = vld [vmem:[#allocation2 + $0x94] sm:$0xf]
      %v4819 = vld [vmem:[#allocation2 + $0x98] sm:$0x1]
      %v4820 = vld [vmem:[#allocation2 + $0x98] sm:$0x3]
      %v4821 = vld [vmem:[#allocation2 + $0x8] sm:$0xc]
      %v4859 = vunpack.c.l.b16 %v4783
      %v4860 = vunpack.c.l.b16 %v4784
      %v4861 = vunpack.c.l.b16 %v4785
      %v4862 = vunpack.c.l.b16 %v4786
      %v4863 = vunpack.c.l.b16 %v4787
      %v4864 = vunpack.c.l.b16 %v4788
      %v4865 = vunpack.c.l.b16 %v4789
      %v4866 = vunpack.c.l.b16 %v4790
      %v4867 = vunpack.c.l.b16 %v4791
      %v4868 = vunpack.c.l.b16 %v4792
      %v4869 = vunpack.c.l.b16 %v4793
      %v4870 = vunpack.c.l.b16 %v4794
      %v4871 = vunpack.c.l.b16 %v4795
      %v4872 = vunpack.c.l.b16 %v4796
      %v4873 = vunpack.c.l.b16 %v4797
      %v4874 = vunpack.c.l.b16 %v4798
      %v4875 = vunpack.c.l.b16 %v4799
      %v4876 = vunpack.c.l.b16 %v4800
      %v4877 = vunpack.c.l.b16 %v4801
      %v4878 = vunpack.c.l.b16 %v4802
      %v4879 = vunpack.c.l.b16 %v4803
      %v4880 = vunpack.c.l.b16 %v4804
      %v4881 = vunpack.c.l.b16 %v4805
      %v4882 = vunpack.c.l.b16 %v4806
      %v4883 = vunpack.c.l.b16 %v4807
      %v4884 = vunpack.c.l.b16 %v4808
      %v4885 = vunpack.c.l.b16 %v4809
      %v4886 = vunpack.c.l.b16 %v4810
      %v4887 = vunpack.c.l.b16 %v4811
      %v4888 = vunpack.c.l.b16 %v4812
      %v4889 = vunpack.c.l.b16 %v4813
      %v4890 = vunpack.c.l.b16 %v4814
      %v4891 = vunpack.c.l.b16 %v4815
      %v4892 = vunpack.c.l.b16 %v4816
      %v4893 = vunpack.c.l.b16 %v4817
      %v4894 = vunpack.c.l.b16 %v4818
      %v4895 = vunpack.c.l.b16 %v4819
      %v4896 = vpack.c.b16 %v4860, %v4859
      %v4897 = vpack.c.b16 %v4862, %v4861
      %v4898 = vpack.c.b16 %v4864, %v4863
      %v4899 = vpack.c.b16 %v4866, %v4865
      %v4900 = vpack.c.b16 %v4868, %v4867
      %v4901 = vpack.c.b16 %v4870, %v4869
      %v4902 = vpack.c.b16 %v4872, %v4871
      %v4903 = vpack.c.b16 %v4874, %v4873
      %v4904 = vpack.c.b16 %v4876, %v4875
      %v4905 = vpack.c.b16 %v4878, %v4877
      %v4906 = vpack.c.b16 %v4880, %v4879
      %v4907 = vpack.c.b16 %v4882, %v4881
      %v4908 = vpack.c.b16 %v4884, %v4883
      %v4909 = vpack.c.b16 %v4886, %v4885
      %v4910 = vpack.c.b16 %v4888, %v4887
      %v4911 = vpack.c.b16 %v4890, %v4889
      %v4912 = vpack.c.b16 %v4892, %v4891
      %v4913 = vpack.c.b16 %v4894, %v4893
      %v4914 = vpack.c.b16 %v4895, %v4895
      %v4916 = vunpack.c.l.b16 %v4820
      %v4917 = vpack.c.b16 %v4916, %v4916
      %v4919 = vshrl.u32 %v4896, 16
      %v4921 = vshll.u32 %v4896, 16
      %v4923 = vrot.slane %v4921, 1
      %v4924 = vor.u32 %v4919, %v4923
      %v4926 = vshll.u32 %v4897, 16
      %v4928 = vrot.slane %v4926, 1
      %v4929 = vsel %vm444, %v4924, %v4928
      %v4930 = vshrl.u32 %v4897, 16
      %v4932 = vor.u32 %v4930, %v4928
      %v4934 = vshll.u32 %v4898, 16
      %v4936 = vrot.slane %v4934, 1
      %v4937 = vsel %vm444, %v4932, %v4936
      %v4938 = vshrl.u32 %v4898, 16
      %v4940 = vor.u32 %v4938, %v4936
      %v4942 = vshll.u32 %v4899, 16
      %v4944 = vrot.slane %v4942, 1
      %v4945 = vsel %vm444, %v4940, %v4944
      %v4946 = vshrl.u32 %v4899, 16
      %v4948 = vor.u32 %v4946, %v4944
      %v4950 = vshll.u32 %v4900, 16
      %v4952 = vrot.slane %v4950, 1
      %v4953 = vsel %vm444, %v4948, %v4952
      %v4954 = vshrl.u32 %v4900, 16
      %v4956 = vor.u32 %v4954, %v4952
      %v4958 = vshll.u32 %v4901, 16
      %v4960 = vrot.slane %v4958, 1
      %v4961 = vsel %vm444, %v4956, %v4960
      %v4962 = vshrl.u32 %v4901, 16
      %v4964 = vor.u32 %v4962, %v4960
      %v4966 = vshll.u32 %v4902, 16
      %v4968 = vrot.slane %v4966, 1
      %v4969 = vsel %vm444, %v4964, %v4968
      %v4970 = vshrl.u32 %v4902, 16
      %v4972 = vor.u32 %v4970, %v4968
      %v4974 = vshll.u32 %v4903, 16
      %v4976 = vrot.slane %v4974, 1
      %v4977 = vsel %vm444, %v4972, %v4976
      %v4978 = vshrl.u32 %v4903, 16
      %v4980 = vor.u32 %v4978, %v4976
      %v4982 = vshll.u32 %v4904, 16
      %v4984 = vrot.slane %v4982, 1
      %v4985 = vsel %vm444, %v4980, %v4984
      %v4986 = vshrl.u32 %v4904, 16
      %v4988 = vor.u32 %v4986, %v4984
      %v4990 = vshll.u32 %v4905, 16
      %v4992 = vrot.slane %v4990, 1
      %v4993 = vsel %vm444, %v4988, %v4992
      %v4994 = vshrl.u32 %v4905, 16
      %v4996 = vor.u32 %v4994, %v4992
      %v4998 = vshll.u32 %v4906, 16
      %v5000 = vrot.slane %v4998, 1
      %v5001 = vsel %vm444, %v4996, %v5000
      %v5002 = vshrl.u32 %v4906, 16
      %v5004 = vor.u32 %v5002, %v5000
      %v5006 = vshll.u32 %v4907, 16
      %v5008 = vrot.slane %v5006, 1
      %v5009 = vsel %vm444, %v5004, %v5008
      %v5010 = vshrl.u32 %v4907, 16
      %v5012 = vor.u32 %v5010, %v5008
      %v5014 = vshll.u32 %v4908, 16
      %v5016 = vrot.slane %v5014, 1
      %v5017 = vsel %vm444, %v5012, %v5016
      %v5018 = vshrl.u32 %v4908, 16
      %v5020 = vor.u32 %v5018, %v5016
      %v5022 = vshll.u32 %v4909, 16
      %v5024 = vrot.slane %v5022, 1
      %v5025 = vsel %vm444, %v5020, %v5024
      %v5026 = vshrl.u32 %v4909, 16
      %v5028 = vor.u32 %v5026, %v5024
      %v5030 = vshll.u32 %v4910, 16
      %v5032 = vrot.slane %v5030, 1
      %v5033 = vsel %vm444, %v5028, %v5032
      %v5034 = vshrl.u32 %v4910, 16
      %v5036 = vor.u32 %v5034, %v5032
      %v5038 = vshll.u32 %v4911, 16
      %v5040 = vrot.slane %v5038, 1
      %v5041 = vsel %vm444, %v5036, %v5040
      %v5042 = vshrl.u32 %v4911, 16
      %v5044 = vor.u32 %v5042, %v5040
      %v5046 = vshll.u32 %v4912, 16
      %v5048 = vrot.slane %v5046, 1
      %v5049 = vsel %vm444, %v5044, %v5048
      %v5050 = vshrl.u32 %v4912, 16
      %v5052 = vor.u32 %v5050, %v5048
      %v5054 = vshll.u32 %v4913, 16
      %v5056 = vrot.slane %v5054, 1
      %v5057 = vsel %vm444, %v5052, %v5056
      %v5058 = vshrl.u32 %v4913, 16
      %v5060 = vor.u32 %v5058, %v5056
      %v5062 = vshll.u32 %v4917, 16
      %v5064 = vrot.slane %v5062, 1
      %v5065 = vsel %vm444, %v5060, %v5064
      %v5066 = vshrl.u32 %v4917, 16
      %v5068 = vor.u32 %v5066, %v5064
      %5069 = vrot.lane.b32.xlu0 %v4929, 32
      %v5070 = vpop.permute.xlu0 %5069
      %5071 = vrot.lane.b32.xlu0 %v4937, 32
      %v5072 = vpop.permute.xlu0 %5071
      %5073 = vrot.lane.b32.xlu0 %v4945, 32
      %v5074 = vpop.permute.xlu0 %5073
      %5075 = vrot.lane.b32.xlu0 %v4953, 32
      %v5076 = vpop.permute.xlu0 %5075
      %5077 = vrot.lane.b32.xlu0 %v4961, 32
      %v5078 = vpop.permute.xlu0 %5077
      %5079 = vrot.lane.b32.xlu0 %v4969, 32
      %v5080 = vpop.permute.xlu0 %5079
      %5081 = vrot.lane.b32.xlu0 %v4977, 32
      %v5082 = vpop.permute.xlu0 %5081
      %5083 = vrot.lane.b32.xlu0 %v4985, 32
      %v5084 = vpop.permute.xlu0 %5083
      %5085 = vrot.lane.b32.xlu0 %v4993, 32
      %v5086 = vpop.permute.xlu0 %5085
      %5087 = vrot.lane.b32.xlu0 %v5001, 32
      %v5088 = vpop.permute.xlu0 %5087
      %5089 = vrot.lane.b32.xlu0 %v5009, 32
      %v5090 = vpop.permute.xlu0 %5089
      %5091 = vrot.lane.b32.xlu0 %v5017, 32
      %v5092 = vpop.permute.xlu0 %5091
      %5093 = vrot.lane.b32.xlu0 %v5025, 32
      %v5094 = vpop.permute.xlu0 %5093
      %5095 = vrot.lane.b32.xlu0 %v5033, 32
      %v5096 = vpop.permute.xlu0 %5095
      %5097 = vrot.lane.b32.xlu0 %v5041, 32
      %v5098 = vpop.permute.xlu0 %5097
      %5099 = vrot.lane.b32.xlu0 %v5049, 32
      %v5100 = vpop.permute.xlu0 %5099
      %5101 = vrot.lane.b32.xlu0 %v5057, 32
      %v5102 = vpop.permute.xlu0 %5101
      %5103 = vrot.lane.b32.xlu0 %v5065, 32
      %v5104 = vpop.permute.xlu0 %5103
      %5105 = vrot.lane.b32.xlu0 %v5068, 32
      %v5106 = vpop.permute.xlu0 %5105
      %v5108 = vunpack.c.l.b16 %v4821
      %v5109 = vpack.c.b16 %v4860, %v5108
      %v5110 = vrot.slane %v5109, 1
      %v5111 = vrot.slane %v4897, 1
      %v5112 = vsel %vm632, %v5110, %v5111
      %v5113 = vrot.slane %v4898, 1
      %v5114 = vsel %vm632, %v5111, %v5113
      %v5115 = vrot.slane %v4899, 1
      %v5116 = vsel %vm632, %v5113, %v5115
      %v5117 = vrot.slane %v4900, 1
      %v5118 = vsel %vm632, %v5115, %v5117
      %v5119 = vrot.slane %v4901, 1
      %v5120 = vsel %vm632, %v5117, %v5119
      %v5121 = vrot.slane %v4902, 1
      %v5122 = vsel %vm632, %v5119, %v5121
      %v5123 = vrot.slane %v4903, 1
      %v5124 = vsel %vm632, %v5121, %v5123
      %v5125 = vrot.slane %v4904, 1
      %v5126 = vsel %vm632, %v5123, %v5125
      %v5127 = vrot.slane %v4905, 1
      %v5128 = vsel %vm632, %v5125, %v5127
      %v5129 = vrot.slane %v4906, 1
      %v5130 = vsel %vm632, %v5127, %v5129
      %v5131 = vrot.slane %v4907, 1
      %v5132 = vsel %vm632, %v5129, %v5131
      %v5133 = vrot.slane %v4908, 1
      %v5134 = vsel %vm632, %v5131, %v5133
      %v5135 = vrot.slane %v4909, 1
      %v5136 = vsel %vm632, %v5133, %v5135
      %v5137 = vrot.slane %v4910, 1
      %v5138 = vsel %vm632, %v5135, %v5137
      %v5139 = vrot.slane %v4911, 1
      %v5140 = vsel %vm632, %v5137, %v5139
      %v5141 = vrot.slane %v4912, 1
      %v5142 = vsel %vm632, %v5139, %v5141
      %v5143 = vrot.slane %v4913, 1
      %v5144 = vsel %vm632, %v5141, %v5143
      %v5145 = vrot.slane %v4917, 1
      %v5146 = vsel %vm632, %v5143, %v5145
      %5147 = vrot.lane.b32.xlu0 %v5112, 64
      %v5148 = vpop.permute.xlu0 %5147
      %5149 = vrot.lane.b32.xlu0 %v5114, 64
      %v5150 = vpop.permute.xlu0 %5149
      %5151 = vrot.lane.b32.xlu0 %v5116, 64
      %v5152 = vpop.permute.xlu0 %5151
      %5153 = vrot.lane.b32.xlu0 %v5118, 64
      %v5154 = vpop.permute.xlu0 %5153
      %5155 = vrot.lane.b32.xlu0 %v5120, 64
      %v5156 = vpop.permute.xlu0 %5155
      %5157 = vrot.lane.b32.xlu0 %v5122, 64
      %v5158 = vpop.permute.xlu0 %5157
      %5159 = vrot.lane.b32.xlu0 %v5124, 64
      %v5160 = vpop.permute.xlu0 %5159
      %5161 = vrot.lane.b32.xlu0 %v5126, 64
      %v5162 = vpop.permute.xlu0 %5161
      %5163 = vrot.lane.b32.xlu0 %v5128, 64
      %v5164 = vpop.permute.xlu0 %5163
      %5165 = vrot.lane.b32.xlu0 %v5130, 64
      %v5166 = vpop.permute.xlu0 %5165
      %5167 = vrot.lane.b32.xlu0 %v5132, 64
      %v5168 = vpop.permute.xlu0 %5167
      %5169 = vrot.lane.b32.xlu0 %v5134, 64
      %v5170 = vpop.permute.xlu0 %5169
      %5171 = vrot.lane.b32.xlu0 %v5136, 64
      %v5172 = vpop.permute.xlu0 %5171
      %5173 = vrot.lane.b32.xlu0 %v5138, 64
      %v5174 = vpop.permute.xlu0 %5173
      %5175 = vrot.lane.b32.xlu0 %v5140, 64
      %v5176 = vpop.permute.xlu0 %5175
      %5177 = vrot.lane.b32.xlu0 %v5142, 64
      %v5178 = vpop.permute.xlu0 %5177
      %5179 = vrot.lane.b32.xlu0 %v5144, 64
      %v5180 = vpop.permute.xlu0 %5179
      %5181 = vrot.lane.b32.xlu0 %v5146, 64
      %v5182 = vpop.permute.xlu0 %5181
      %5183 = vrot.lane.b32.xlu0 %v5145, 64
      %v5184 = vpop.permute.xlu0 %5183
      %v5186 = vsel %vm4268, %v4896, %v5070
      %v5188 = vsel %vm4268, %v4897, %v5072
      %v5190 = vsel %vm4268, %v4898, %v5074
      %v5192 = vsel %vm4268, %v4899, %v5076
      %v5194 = vsel %vm4268, %v4900, %v5078
      %v5196 = vsel %vm4268, %v4901, %v5080
      %v5198 = vsel %vm4268, %v4902, %v5082
      %v5200 = vsel %vm4268, %v4903, %v5084
      %v5202 = vsel %vm4268, %v4904, %v5086
      %v5204 = vsel %vm4268, %v4905, %v5088
      %v5206 = vsel %vm4268, %v4906, %v5090
      %v5208 = vsel %vm4268, %v4907, %v5092
      %v5210 = vsel %vm4268, %v4908, %v5094
      %v5212 = vsel %vm4268, %v4909, %v5096
      %v5214 = vsel %vm4268, %v4910, %v5098
      %v5216 = vsel %vm4268, %v4911, %v5100
      %v5218 = vsel %vm4268, %v4912, %v5102
      %v5220 = vsel %vm4268, %v4913, %v5104
      %v5223 = vsel %vm4268, %v4914, %v5106
      %v5225 = vsel %vm4305, %v5186, %v5148
      %v5227 = vsel %vm4305, %v5188, %v5150
      %v5229 = vsel %vm4305, %v5190, %v5152
      %v5231 = vsel %vm4305, %v5192, %v5154
      %v5233 = vsel %vm4305, %v5194, %v5156
      %v5235 = vsel %vm4305, %v5196, %v5158
      %v5237 = vsel %vm4305, %v5198, %v5160
      %v5239 = vsel %vm4305, %v5200, %v5162
      %v5241 = vsel %vm4305, %v5202, %v5164
      %v5243 = vsel %vm4305, %v5204, %v5166
      %v5245 = vsel %vm4305, %v5206, %v5168
      %v5247 = vsel %vm4305, %v5208, %v5170
      %v5249 = vsel %vm4305, %v5210, %v5172
      %v5251 = vsel %vm4305, %v5212, %v5174
      %v5253 = vsel %vm4305, %v5214, %v5176
      %v5255 = vsel %vm4305, %v5216, %v5178
      %v5257 = vsel %vm4305, %v5218, %v5180
      %v5259 = vsel %vm4305, %v5220, %v5182
      %v5261 = vsel %vm4305, %v5223, %v5184
      %s5262 = scalar_lea.vmem %s5, 48
      %v5263 = vld [vmem:[%s5262] sm:$0xf]
      %v5264 = vld [vmem:[%s5262 + $0x4] sm:$0xf]
      %v5265 = vld [vmem:[%s5262 + $0x8] sm:$0xf]
      %v5266 = vld [vmem:[%s5262 + $0xc] sm:$0xf]
      %v5267 = vld [vmem:[%s5262 + $0x10] sm:$0xf]
      %v5268 = vld [vmem:[%s5262 + $0x14] sm:$0xf]
      %v5269 = vld [vmem:[%s5262 + $0x18] sm:$0xf]
      %v5270 = vld [vmem:[%s5262 + $0x1c] sm:$0xf]
      %v5271 = vld [vmem:[%s5262 + $0x20] sm:$0xf]
      %v5272 = vld [vmem:[%s5262 + $0x24] sm:$0xf]
      %v5273 = vld [vmem:[%s5262 + $0x28] sm:$0xf]
      %v5274 = vld [vmem:[%s5262 + $0x2c] sm:$0xf]
      %v5294 = vrot.slane %v5225, 1
      %v5295 = vrot.slane %v5227, 1
      %v5296 = vsel %vm632, %v5294, %v5295
      %v5297 = vrot.slane %v5229, 1
      %v5298 = vsel %vm632, %v5295, %v5297
      %v5299 = vrot.slane %v5231, 1
      %v5300 = vsel %vm632, %v5297, %v5299
      %v5301 = vrot.slane %v5233, 1
      %v5302 = vsel %vm632, %v5299, %v5301
      %v5303 = vrot.slane %v5235, 1
      %v5304 = vsel %vm632, %v5301, %v5303
      %v5305 = vrot.slane %v5237, 1
      %v5306 = vsel %vm632, %v5303, %v5305
      %v5307 = vrot.slane %v5239, 1
      %v5308 = vsel %vm632, %v5305, %v5307
      %v5309 = vrot.slane %v5241, 1
      %v5310 = vsel %vm632, %v5307, %v5309
      %v5311 = vrot.slane %v5243, 1
      %v5312 = vsel %vm632, %v5309, %v5311
      %v5313 = vrot.slane %v5245, 1
      %v5314 = vsel %vm632, %v5311, %v5313
      %v5315 = vrot.slane %v5247, 1
      %v5316 = vsel %vm632, %v5313, %v5315
      %v5317 = vrot.slane %v5249, 1
      %v5318 = vsel %vm632, %v5315, %v5317
      %v5319 = vrot.slane %v5251, 1
      %v5320 = vsel %vm632, %v5317, %v5319
      %v5321 = vrot.slane %v5253, 1
      %v5322 = vsel %vm632, %v5319, %v5321
      %v5323 = vrot.slane %v5255, 1
      %v5324 = vsel %vm632, %v5321, %v5323
      %v5325 = vrot.slane %v5257, 1
      %v5326 = vsel %vm632, %v5323, %v5325
      %v5327 = vrot.slane %v5259, 1
      %v5328 = vsel %vm632, %v5325, %v5327
      %v5329 = vrot.slane %v5261, 1
      %v5330 = vsel %vm632, %v5327, %v5329
      %v5343 = vunpack.c.l.b16 %v5263
      %v5344 = vunpack.c.l.b16 %v5264
      %v5345 = vunpack.c.l.b16 %v5265
      %v5346 = vunpack.c.l.b16 %v5266
      %v5347 = vunpack.c.l.b16 %v5267
      %v5348 = vunpack.c.l.b16 %v5268
      %v5349 = vunpack.c.l.b16 %v5269
      %v5350 = vunpack.c.l.b16 %v5270
      %v5351 = vunpack.c.l.b16 %v5271
      %v5352 = vunpack.c.l.b16 %v5272
      %v5353 = vunpack.c.l.b16 %v5273
      %v5354 = vunpack.c.l.b16 %v5274
      %v5355 = vpack.c.b16 %v5344, %v5343
      %v5356 = vpack.c.b16 %v5346, %v5345
      %v5357 = vpack.c.b16 %v5348, %v5347
      %v5358 = vpack.c.b16 %v5350, %v5349
      %v5359 = vpack.c.b16 %v5352, %v5351
      %v5360 = vpack.c.b16 %v5354, %v5353
      %v5368 = vsel %vm743, %v5296, 0
      %v5371 = vsel %vm743, %v5298, 0
      %v5374 = vsel %vm743, %v5300, 0
      %v5377 = vsel %vm743, %v5302, 0
      %v5380 = vsel %vm743, %v5304, 0
      %v5383 = vsel %vm743, %v5306, 0
      %v5386 = vsel %vm743, %v5308, 0
      %v5389 = vsel %vm743, %v5310, 0
      %v5392 = vsel %vm743, %v5312, 0
      %v5395 = vsel %vm743, %v5314, 0
      %v5398 = vsel %vm743, %v5316, 0
      %v5401 = vsel %vm743, %v5318, 0
      %v5404 = vsel %vm743, %v5320, 0
      %v5407 = vsel %vm743, %v5322, 0
      %v5410 = vsel %vm743, %v5324, 0
      %v5413 = vsel %vm743, %v5326, 0
      %v5416 = vsel %vm743, %v5328, 0
      %v5419 = vsel %vm743, %v5330, 0
      %5421 = vmatprep.subr.bf16.mxu0 0
      %5422 = vmatpush1.bf16.msra.mxu0 %v5355
      %5423 = vmatprep.subr.bf16.mxu0 0
      %5424 = vmatpush1.bf16.msra.mxu0 %v5356
      %5425 = vmatprep.subr.bf16.mxu0 0
      %5426 = vmatpush1.bf16.msra.mxu0 %v5357
      %5427 = vmatprep.subr.bf16.mxu0 0
      %5428 = vmatpush1.bf16.msra.mxu0 %v5358
      %5429 = vmatprep.subr.bf16.mxu0 0
      %5430 = vmatpush1.bf16.msra.mxu0 %v5359
      %5431 = vmatprep.subr.bf16.mxu0 0
      %5432 = vmatpush1.bf16.msra.mxu0 %v5360
      %5433 = vmatprep.subr.bf16.mxu0 0
      %5434 = vmatpush1.bf16.msra.mxu0 0
      %5435 = vmatprep.subr.bf16.mxu0 0
      %5436 = vmatpush1.bf16.msra.mxu0 0
      %5437 = vmatprep.subr.bf16.mxu0 0
      %5438 = vmatpush1.bf16.msra.mxu0 0
      %5439 = vmatprep.subr.bf16.mxu0 0
      %5440 = vmatpush1.bf16.msra.mxu0 0
      %5441 = vmatprep.subr.bf16.mxu0 0
      %5442 = vmatpush1.bf16.msra.mxu0 0
      %5443 = vmatprep.subr.bf16.mxu0 0
      %5444 = vmatpush1.bf16.msra.mxu0 0
      %5445 = vmatprep.subr.bf16.mxu0 0
      %5446 = vmatpush1.bf16.msra.mxu0 0
      %5447 = vmatprep.subr.bf16.mxu0 0
      %5448 = vmatpush1.bf16.msra.mxu0 0
      %5449 = vmatprep.subr.bf16.mxu0 0
      %5450 = vmatpush1.bf16.msra.mxu0 0
      %5451 = vmatprep.subr.bf16.mxu0 0
      %5452 = vmatpush1.bf16.msra.mxu0 0
      %5453 = vmatprep.mubr.bf16.mxu0 0
      %5454 = vmatmul.mubr.bf16.gmra.mrb[0].mxu0 %v5368
      %v5455 = vpop.f32.mrb[0].mxu0
      %v5456 = vadd.f32 0.0, %v5455
      %v5457 = vpop.f32.mrb[0].mxu0
      %v5458 = vpop.f32.mrb[0].mxu0
      %v5459 = vadd.f32 0.0, %v5458
      %v5460 = vpop.f32.mrb[0].mxu0
      %5461 = vmatprep.mubr.bf16.mxu0 0
      %5462 = vmatmul.mubr.bf16.gmra.mrb[0].mxu0 %v5371
      %v5463 = vpop.f32.mrb[0].mxu0
      %v5464 = vadd.f32 0.0, %v5463
      %v5465 = vpop.f32.mrb[0].mxu0
      %v5466 = vpop.f32.mrb[0].mxu0
      %v5467 = vadd.f32 0.0, %v5466
      %v5468 = vpop.f32.mrb[0].mxu0
      %5469 = vmatprep.mubr.bf16.mxu0 0
      %5470 = vmatmul.mubr.bf16.gmra.mrb[0].mxu0 %v5374
      %v5471 = vpop.f32.mrb[0].mxu0
      %v5472 = vadd.f32 0.0, %v5471
      %v5473 = vpop.f32.mrb[0].mxu0
      %v5474 = vpop.f32.mrb[0].mxu0
      %v5475 = vadd.f32 0.0, %v5474
      %v5476 = vpop.f32.mrb[0].mxu0
      %5477 = vmatprep.mubr.bf16.mxu0 0
      %5478 = vmatmul.mubr.bf16.gmra.mrb[0].mxu0 %v5377
      %v5479 = vpop.f32.mrb[0].mxu0
      %v5480 = vadd.f32 0.0, %v5479
      %v5481 = vpop.f32.mrb[0].mxu0
      %v5482 = vpop.f32.mrb[0].mxu0
      %v5483 = vadd.f32 0.0, %v5482
      %v5484 = vpop.f32.mrb[0].mxu0
      %5485 = vmatprep.mubr.bf16.mxu0 0
      %5486 = vmatmul.mubr.bf16.gmra.mrb[0].mxu0 %v5380
      %v5487 = vpop.f32.mrb[0].mxu0
      %v5488 = vadd.f32 0.0, %v5487
      %v5489 = vpop.f32.mrb[0].mxu0
      %v5490 = vpop.f32.mrb[0].mxu0
      %v5491 = vadd.f32 0.0, %v5490
      %v5492 = vpop.f32.mrb[0].mxu0
      %5493 = vmatprep.mubr.bf16.mxu0 0
      %5494 = vmatmul.mubr.bf16.gmra.mrb[0].mxu0 %v5383
      %v5495 = vpop.f32.mrb[0].mxu0
      %v5496 = vadd.f32 0.0, %v5495
      %v5497 = vpop.f32.mrb[0].mxu0
      %v5498 = vpop.f32.mrb[0].mxu0
      %v5499 = vadd.f32 0.0, %v5498
      %v5500 = vpop.f32.mrb[0].mxu0
      %5501 = vmatprep.mubr.bf16.mxu0 0
      %5502 = vmatmul.mubr.bf16.gmra.mrb[0].mxu0 %v5386
      %v5503 = vpop.f32.mrb[0].mxu0
      %v5504 = vadd.f32 0.0, %v5503
      %v5505 = vpop.f32.mrb[0].mxu0
      %v5506 = vpop.f32.mrb[0].mxu0
      %v5507 = vadd.f32 0.0, %v5506
      %v5508 = vpop.f32.mrb[0].mxu0
      %5509 = vmatprep.mubr.bf16.mxu0 0
      %5510 = vmatmul.mubr.bf16.gmra.mrb[0].mxu0 %v5389
      %v5511 = vpop.f32.mrb[0].mxu0
      %v5512 = vadd.f32 0.0, %v5511
      %v5513 = vpop.f32.mrb[0].mxu0
      %v5514 = vpop.f32.mrb[0].mxu0
      %v5515 = vadd.f32 0.0, %v5514
      %v5516 = vpop.f32.mrb[0].mxu0
      %5517 = vmatprep.mubr.bf16.mxu0 0
      %5518 = vmatmul.mubr.bf16.gmra.mrb[0].mxu0 %v5392
      %v5519 = vpop.f32.mrb[0].mxu0
      %v5520 = vadd.f32 0.0, %v5519
      %v5521 = vpop.f32.mrb[0].mxu0
      %v5522 = vpop.f32.mrb[0].mxu0
      %v5523 = vadd.f32 0.0, %v5522
      %v5524 = vpop.f32.mrb[0].mxu0
      %5525 = vmatprep.mubr.bf16.mxu0 0
      %5526 = vmatmul.mubr.bf16.gmra.mrb[0].mxu0 %v5395
      %v5527 = vpop.f32.mrb[0].mxu0
      %v5528 = vadd.f32 0.0, %v5527
      %v5529 = vpop.f32.mrb[0].mxu0
      %v5530 = vpop.f32.mrb[0].mxu0
      %v5531 = vadd.f32 0.0, %v5530
      %v5532 = vpop.f32.mrb[0].mxu0
      %5533 = vmatprep.mubr.bf16.mxu0 0
      %5534 = vmatmul.mubr.bf16.gmra.mrb[0].mxu0 %v5398
      %v5535 = vpop.f32.mrb[0].mxu0
      %v5536 = vadd.f32 0.0, %v5535
      %v5537 = vpop.f32.mrb[0].mxu0
      %v5538 = vpop.f32.mrb[0].mxu0
      %v5539 = vadd.f32 0.0, %v5538
      %v5540 = vpop.f32.mrb[0].mxu0
      %5541 = vmatprep.mubr.bf16.mxu0 0
      %5542 = vmatmul.mubr.bf16.gmra.mrb[0].mxu0 %v5401
      %v5543 = vpop.f32.mrb[0].mxu0
      %v5544 = vadd.f32 0.0, %v5543
      %v5545 = vpop.f32.mrb[0].mxu0
      %v5546 = vpop.f32.mrb[0].mxu0
      %v5547 = vadd.f32 0.0, %v5546
      %v5548 = vpop.f32.mrb[0].mxu0
      %5549 = vmatprep.mubr.bf16.mxu0 0
      %5550 = vmatmul.mubr.bf16.gmra.mrb[0].mxu0 %v5404
      %v5551 = vpop.f32.mrb[0].mxu0
      %v5552 = vadd.f32 0.0, %v5551
      %v5553 = vpop.f32.mrb[0].mxu0
      %v5554 = vpop.f32.mrb[0].mxu0
      %v5555 = vadd.f32 0.0, %v5554
      %v5556 = vpop.f32.mrb[0].mxu0
      %5557 = vmatprep.mubr.bf16.mxu0 0
      %5558 = vmatmul.mubr.bf16.gmra.mrb[0].mxu0 %v5407
      %v5559 = vpop.f32.mrb[0].mxu0
      %v5560 = vadd.f32 0.0, %v5559
      %v5561 = vpop.f32.mrb[0].mxu0
      %v5562 = vpop.f32.mrb[0].mxu0
      %v5563 = vadd.f32 0.0, %v5562
      %v5564 = vpop.f32.mrb[0].mxu0
      %5565 = vmatprep.mubr.bf16.mxu0 0
      %5566 = vmatmul.mubr.bf16.gmra.mrb[0].mxu0 %v5410
      %v5567 = vpop.f32.mrb[0].mxu0
      %v5568 = vadd.f32 0.0, %v5567
      %v5569 = vpop.f32.mrb[0].mxu0
      %v5570 = vpop.f32.mrb[0].mxu0
      %v5571 = vadd.f32 0.0, %v5570
      %v5572 = vpop.f32.mrb[0].mxu0
      %5573 = vmatprep.mubr.bf16.mxu0 0
      %5574 = vmatmul.mubr.bf16.gmra.mrb[0].mxu0 %v5413
      %v5575 = vpop.f32.mrb[0].mxu0
      %v5576 = vadd.f32 0.0, %v5575
      %v5577 = vpop.f32.mrb[0].mxu0
      %v5578 = vpop.f32.mrb[0].mxu0
      %v5579 = vadd.f32 0.0, %v5578
      %v5580 = vpop.f32.mrb[0].mxu0
      %5581 = vmatprep.mubr.bf16.mxu0 0
      %5582 = vmatmul.mubr.bf16.gmra.mrb[0].mxu0 %v5416
      %v5583 = vpop.f32.mrb[0].mxu0
      %v5584 = vadd.f32 0.0, %v5583
      %v5585 = vpop.f32.mrb[0].mxu0
      %v5586 = vpop.f32.mrb[0].mxu0
      %v5587 = vadd.f32 0.0, %v5586
      %v5588 = vpop.f32.mrb[0].mxu0
      %5589 = vmatprep.mubr.bf16.mxu0 0
      %5590 = vmatmul.mubr.bf16.gmra.mrb[0].mxu0 %v5419
      %v5591 = vpop.f32.mrb[0].mxu0
      %v5592 = vadd.f32 0.0, %v5591
      %v5593 = vpop.f32.mrb[0].mxu0
      %v5594 = vpop.f32.mrb[0].mxu0
      %v5595 = vadd.f32 0.0, %v5594
      %v5596 = vpop.f32.mrb[0].mxu0
      %5597 = vdwg.mxu0
      %5634 = vrot.lane.b32.xlu0 %v5456, 64
      %v5635 = vpop.permute.xlu0 %5634
      %5636 = vrot.lane.b32.xlu0 %v5459, 64
      %v5637 = vpop.permute.xlu0 %5636
      %5638 = vrot.lane.b32.xlu0 %v5464, 64
      %v5639 = vpop.permute.xlu0 %5638
      %5640 = vrot.lane.b32.xlu0 %v5467, 64
      %v5641 = vpop.permute.xlu0 %5640
      %5642 = vrot.lane.b32.xlu0 %v5472, 64
      %v5643 = vpop.permute.xlu0 %5642
      %5644 = vrot.lane.b32.xlu0 %v5475, 64
      %v5645 = vpop.permute.xlu0 %5644
      %5646 = vrot.lane.b32.xlu0 %v5480, 64
      %v5647 = vpop.permute.xlu0 %5646
      %5648 = vrot.lane.b32.xlu0 %v5483, 64
      %v5649 = vpop.permute.xlu0 %5648
      %5650 = vrot.lane.b32.xlu0 %v5488, 64
      %v5651 = vpop.permute.xlu0 %5650
      %5652 = vrot.lane.b32.xlu0 %v5491, 64
      %v5653 = vpop.permute.xlu0 %5652
      %5654 = vrot.lane.b32.xlu0 %v5496, 64
      %v5655 = vpop.permute.xlu0 %5654
      %5656 = vrot.lane.b32.xlu0 %v5499, 64
      %v5657 = vpop.permute.xlu0 %5656
      %5658 = vrot.lane.b32.xlu0 %v5504, 64
      %v5659 = vpop.permute.xlu0 %5658
      %5660 = vrot.lane.b32.xlu0 %v5507, 64
      %v5661 = vpop.permute.xlu0 %5660
      %5662 = vrot.lane.b32.xlu0 %v5512, 64
      %v5663 = vpop.permute.xlu0 %5662
      %5664 = vrot.lane.b32.xlu0 %v5515, 64
      %v5665 = vpop.permute.xlu0 %5664
      %5666 = vrot.lane.b32.xlu0 %v5520, 64
      %v5667 = vpop.permute.xlu0 %5666
      %5668 = vrot.lane.b32.xlu0 %v5523, 64
      %v5669 = vpop.permute.xlu0 %5668
      %5670 = vrot.lane.b32.xlu0 %v5528, 64
      %v5671 = vpop.permute.xlu0 %5670
      %5672 = vrot.lane.b32.xlu0 %v5531, 64
      %v5673 = vpop.permute.xlu0 %5672
      %5674 = vrot.lane.b32.xlu0 %v5536, 64
      %v5675 = vpop.permute.xlu0 %5674
      %5676 = vrot.lane.b32.xlu0 %v5539, 64
      %v5677 = vpop.permute.xlu0 %5676
      %5678 = vrot.lane.b32.xlu0 %v5544, 64
      %v5679 = vpop.permute.xlu0 %5678
      %5680 = vrot.lane.b32.xlu0 %v5547, 64
      %v5681 = vpop.permute.xlu0 %5680
      %5682 = vrot.lane.b32.xlu0 %v5552, 64
      %v5683 = vpop.permute.xlu0 %5682
      %5684 = vrot.lane.b32.xlu0 %v5555, 64
      %v5685 = vpop.permute.xlu0 %5684
      %5686 = vrot.lane.b32.xlu0 %v5560, 64
      %v5687 = vpop.permute.xlu0 %5686
      %5688 = vrot.lane.b32.xlu0 %v5563, 64
      %v5689 = vpop.permute.xlu0 %5688
      %5690 = vrot.lane.b32.xlu0 %v5568, 64
      %v5691 = vpop.permute.xlu0 %5690
      %5692 = vrot.lane.b32.xlu0 %v5571, 64
      %v5693 = vpop.permute.xlu0 %5692
      %5694 = vrot.lane.b32.xlu0 %v5576, 64
      %v5695 = vpop.permute.xlu0 %5694
      %5696 = vrot.lane.b32.xlu0 %v5579, 64
      %v5697 = vpop.permute.xlu0 %5696
      %5698 = vrot.lane.b32.xlu0 %v5584, 64
      %v5699 = vpop.permute.xlu0 %5698
      %5700 = vrot.lane.b32.xlu0 %v5587, 64
      %v5701 = vpop.permute.xlu0 %5700
      %5702 = vrot.lane.b32.xlu0 %v5592, 64
      %v5703 = vpop.permute.xlu0 %5702
      %5704 = vrot.lane.b32.xlu0 %v5595, 64
      %v5705 = vpop.permute.xlu0 %5704
      %v5742 = vadd.f32 %v4747, %v5635
      %v5743 = vadd.f32 %v4748, %v5637
      %v5744 = vadd.f32 %v4749, %v5639
      %v5745 = vadd.f32 %v4750, %v5641
      %v5746 = vadd.f32 %v4751, %v5643
      %v5747 = vadd.f32 %v4752, %v5645
      %v5748 = vadd.f32 %v4753, %v5647
      %v5749 = vadd.f32 %v4754, %v5649
      %v5750 = vadd.f32 %v4755, %v5651
      %v5751 = vadd.f32 %v4756, %v5653
      %v5752 = vadd.f32 %v4757, %v5655
      %v5753 = vadd.f32 %v4758, %v5657
      %v5754 = vadd.f32 %v4759, %v5659
      %v5755 = vadd.f32 %v4760, %v5661
      %v5756 = vadd.f32 %v4761, %v5663
      %v5757 = vadd.f32 %v4762, %v5665
      %v5758 = vadd.f32 %v4763, %v5667
      %v5759 = vadd.f32 %v4764, %v5669
      %v5760 = vadd.f32 %v4765, %v5671
      %v5761 = vadd.f32 %v4766, %v5673
      %v5762 = vadd.f32 %v4767, %v5675
      %v5763 = vadd.f32 %v4768, %v5677
      %v5764 = vadd.f32 %v4769, %v5679
      %v5765 = vadd.f32 %v4770, %v5681
      %v5766 = vadd.f32 %v4771, %v5683
      %v5767 = vadd.f32 %v4772, %v5685
      %v5768 = vadd.f32 %v4773, %v5687
      %v5769 = vadd.f32 %v4774, %v5689
      %v5770 = vadd.f32 %v4775, %v5691
      %v5771 = vadd.f32 %v4776, %v5693
      %v5772 = vadd.f32 %v4777, %v5695
      %v5773 = vadd.f32 %v4778, %v5697
      %v5774 = vadd.f32 %v4779, %v5699
      %v5775 = vadd.f32 %v4780, %v5701
      %v5776 = vadd.f32 %v4781, %v5703
      %v5777 = vadd.f32 %v4782, %v5705
      %v5778 = vld [vmem:[#allocation2 + $0x10] sm:$0xc]
      %v5779 = vld [vmem:[#allocation2 + $0x14] sm:$0xf]
      %v5780 = vld [vmem:[#allocation2 + $0x18] sm:$0xf]
      %v5781 = vld [vmem:[#allocation2 + $0x1c] sm:$0xf]
      %v5782 = vld [vmem:[#allocation2 + $0x20] sm:$0xf]
      %v5783 = vld [vmem:[#allocation2 + $0x24] sm:$0xf]
      %v5784 = vld [vmem:[#allocation2 + $0x28] sm:$0xf]
      %v5785 = vld [vmem:[#allocation2 + $0x2c] sm:$0xf]
      %v5786 = vld [vmem:[#allocation2 + $0x30] sm:$0xf]
      %v5787 = vld [vmem:[#allocation2 + $0x34] sm:$0xf]
      %v5788 = vld [vmem:[#allocation2 + $0x38] sm:$0xf]
      %v5789 = vld [vmem:[#allocation2 + $0x3c] sm:$0xf]
      %v5790 = vld [vmem:[#allocation2 + $0x40] sm:$0xf]
      %v5791 = vld [vmem:[#allocation2 + $0x44] sm:$0xf]
      %v5792 = vld [vmem:[#allocation2 + $0x48] sm:$0xf]
      %v5793 = vld [vmem:[#allocation2 + $0x4c] sm:$0xf]
      %v5794 = vld [vmem:[#allocation2 + $0x50] sm:$0xf]
      %v5795 = vld [vmem:[#allocation2 + $0x54] sm:$0xf]
      %v5796 = vld [vmem:[#allocation2 + $0x58] sm:$0xf]
      %v5797 = vld [vmem:[#allocation2 + $0x5c] sm:$0xf]
      %v5798 = vld [vmem:[#allocation2 + $0x60] sm:$0xf]
      %v5799 = vld [vmem:[#allocation2 + $0x64] sm:$0xf]
      %v5800 = vld [vmem:[#allocation2 + $0x68] sm:$0xf]
      %v5801 = vld [vmem:[#allocation2 + $0x6c] sm:$0xf]
      %v5802 = vld [vmem:[#allocation2 + $0x70] sm:$0xf]
      %v5803 = vld [vmem:[#allocation2 + $0x74] sm:$0xf]
      %v5804 = vld [vmem:[#allocation2 + $0x78] sm:$0xf]
      %v5805 = vld [vmem:[#allocation2 + $0x7c] sm:$0xf]
      %v5806 = vld [vmem:[#allocation2 + $0x80] sm:$0xf]
      %v5807 = vld [vmem:[#allocation2 + $0x84] sm:$0xf]
      %v5808 = vld [vmem:[#allocation2 + $0x88] sm:$0xf]
      %v5809 = vld [vmem:[#allocation2 + $0x8c] sm:$0xf]
      %v5810 = vld [vmem:[#allocation2 + $0x90] sm:$0xf]
      %v5811 = vld [vmem:[#allocation2 + $0x94] sm:$0xf]
      %v5812 = vld [vmem:[#allocation2 + $0x98] sm:$0xf]
      %v5813 = vld [vmem:[#allocation2 + $0x9c] sm:$0xf]
      %v5814 = vld [vmem:[#allocation2 + $0xa0] sm:$0x3]
      %v5815 = vld [vmem:[#allocation2 + $0xa0] sm:$0x7]
      %v5816 = vld [vmem:[#allocation2 + $0x10] sm:$0x8]
      %v5854 = vunpack.c.l.b16 %v5778
      %v5855 = vunpack.c.l.b16 %v5779
      %v5856 = vunpack.c.l.b16 %v5780
      %v5857 = vunpack.c.l.b16 %v5781
      %v5858 = vunpack.c.l.b16 %v5782
      %v5859 = vunpack.c.l.b16 %v5783
      %v5860 = vunpack.c.l.b16 %v5784
      %v5861 = vunpack.c.l.b16 %v5785
      %v5862 = vunpack.c.l.b16 %v5786
      %v5863 = vunpack.c.l.b16 %v5787
      %v5864 = vunpack.c.l.b16 %v5788
      %v5865 = vunpack.c.l.b16 %v5789
      %v5866 = vunpack.c.l.b16 %v5790
      %v5867 = vunpack.c.l.b16 %v5791
      %v5868 = vunpack.c.l.b16 %v5792
      %v5869 = vunpack.c.l.b16 %v5793
      %v5870 = vunpack.c.l.b16 %v5794
      %v5871 = vunpack.c.l.b16 %v5795
      %v5872 = vunpack.c.l.b16 %v5796
      %v5873 = vunpack.c.l.b16 %v5797
      %v5874 = vunpack.c.l.b16 %v5798
      %v5875 = vunpack.c.l.b16 %v5799
      %v5876 = vunpack.c.l.b16 %v5800
      %v5877 = vunpack.c.l.b16 %v5801
      %v5878 = vunpack.c.l.b16 %v5802
      %v5879 = vunpack.c.l.b16 %v5803
      %v5880 = vunpack.c.l.b16 %v5804
      %v5881 = vunpack.c.l.b16 %v5805
      %v5882 = vunpack.c.l.b16 %v5806
      %v5883 = vunpack.c.l.b16 %v5807
      %v5884 = vunpack.c.l.b16 %v5808
      %v5885 = vunpack.c.l.b16 %v5809
      %v5886 = vunpack.c.l.b16 %v5810
      %v5887 = vunpack.c.l.b16 %v5811
      %v5888 = vunpack.c.l.b16 %v5812
      %v5889 = vunpack.c.l.b16 %v5813
      %v5890 = vunpack.c.l.b16 %v5814
      %v5891 = vpack.c.b16 %v5855, %v5854
      %v5892 = vpack.c.b16 %v5857, %v5856
      %v5893 = vpack.c.b16 %v5859, %v5858
      %v5894 = vpack.c.b16 %v5861, %v5860
      %v5895 = vpack.c.b16 %v5863, %v5862
      %v5896 = vpack.c.b16 %v5865, %v5864
      %v5897 = vpack.c.b16 %v5867, %v5866
      %v5898 = vpack.c.b16 %v5869, %v5868
      %v5899 = vpack.c.b16 %v5871, %v5870
      %v5900 = vpack.c.b16 %v5873, %v5872
      %v5901 = vpack.c.b16 %v5875, %v5874
      %v5902 = vpack.c.b16 %v5877, %v5876
      %v5903 = vpack.c.b16 %v5879, %v5878
      %v5904 = vpack.c.b16 %v5881, %v5880
      %v5905 = vpack.c.b16 %v5883, %v5882
      %v5906 = vpack.c.b16 %v5885, %v5884
      %v5907 = vpack.c.b16 %v5887, %v5886
      %v5908 = vpack.c.b16 %v5889, %v5888
      %v5909 = vpack.c.b16 %v5890, %v5890
      %v5911 = vunpack.c.l.b16 %v5815
      %v5912 = vpack.c.b16 %v5911, %v5911
      %v5914 = vshrl.u32 %v5891, 16
      %v5916 = vshll.u32 %v5891, 16
      %v5918 = vrot.slane %v5916, 1
      %v5919 = vor.u32 %v5914, %v5918
      %v5921 = vshll.u32 %v5892, 16
      %v5923 = vrot.slane %v5921, 1
      %v5924 = vsel %vm444, %v5919, %v5923
      %v5925 = vshrl.u32 %v5892, 16
      %v5927 = vor.u32 %v5925, %v5923
      %v5929 = vshll.u32 %v5893, 16
      %v5931 = vrot.slane %v5929, 1
      %v5932 = vsel %vm444, %v5927, %v5931
      %v5933 = vshrl.u32 %v5893, 16
      %v5935 = vor.u32 %v5933, %v5931
      %v5937 = vshll.u32 %v5894, 16
      %v5939 = vrot.slane %v5937, 1
      %v5940 = vsel %vm444, %v5935, %v5939
      %v5941 = vshrl.u32 %v5894, 16
      %v5943 = vor.u32 %v5941, %v5939
      %v5945 = vshll.u32 %v5895, 16
      %v5947 = vrot.slane %v5945, 1
      %v5948 = vsel %vm444, %v5943, %v5947
      %v5949 = vshrl.u32 %v5895, 16
      %v5951 = vor.u32 %v5949, %v5947
      %v5953 = vshll.u32 %v5896, 16
      %v5955 = vrot.slane %v5953, 1
      %v5956 = vsel %vm444, %v5951, %v5955
      %v5957 = vshrl.u32 %v5896, 16
      %v5959 = vor.u32 %v5957, %v5955
      %v5961 = vshll.u32 %v5897, 16
      %v5963 = vrot.slane %v5961, 1
      %v5964 = vsel %vm444, %v5959, %v5963
      %v5965 = vshrl.u32 %v5897, 16
      %v5967 = vor.u32 %v5965, %v5963
      %v5969 = vshll.u32 %v5898, 16
      %v5971 = vrot.slane %v5969, 1
      %v5972 = vsel %vm444, %v5967, %v5971
      %v5973 = vshrl.u32 %v5898, 16
      %v5975 = vor.u32 %v5973, %v5971
      %v5977 = vshll.u32 %v5899, 16
      %v5979 = vrot.slane %v5977, 1
      %v5980 = vsel %vm444, %v5975, %v5979
      %v5981 = vshrl.u32 %v5899, 16
      %v5983 = vor.u32 %v5981, %v5979
      %v5985 = vshll.u32 %v5900, 16
      %v5987 = vrot.slane %v5985, 1
      %v5988 = vsel %vm444, %v5983, %v5987
      %v5989 = vshrl.u32 %v5900, 16
      %v5991 = vor.u32 %v5989, %v5987
      %v5993 = vshll.u32 %v5901, 16
      %v5995 = vrot.slane %v5993, 1
      %v5996 = vsel %vm444, %v5991, %v5995
      %v5997 = vshrl.u32 %v5901, 16
      %v5999 = vor.u32 %v5997, %v5995
      %v6001 = vshll.u32 %v5902, 16
      %v6003 = vrot.slane %v6001, 1
      %v6004 = vsel %vm444, %v5999, %v6003
      %v6005 = vshrl.u32 %v5902, 16
      %v6007 = vor.u32 %v6005, %v6003
      %v6009 = vshll.u32 %v5903, 16
      %v6011 = vrot.slane %v6009, 1
      %v6012 = vsel %vm444, %v6007, %v6011
      %v6013 = vshrl.u32 %v5903, 16
      %v6015 = vor.u32 %v6013, %v6011
      %v6017 = vshll.u32 %v5904, 16
      %v6019 = vrot.slane %v6017, 1
      %v6020 = vsel %vm444, %v6015, %v6019
      %v6021 = vshrl.u32 %v5904, 16
      %v6023 = vor.u32 %v6021, %v6019
      %v6025 = vshll.u32 %v5905, 16
      %v6027 = vrot.slane %v6025, 1
      %v6028 = vsel %vm444, %v6023, %v6027
      %v6029 = vshrl.u32 %v5905, 16
      %v6031 = vor.u32 %v6029, %v6027
      %v6033 = vshll.u32 %v5906, 16
      %v6035 = vrot.slane %v6033, 1
      %v6036 = vsel %vm444, %v6031, %v6035
      %v6037 = vshrl.u32 %v5906, 16
      %v6039 = vor.u32 %v6037, %v6035
      %v6041 = vshll.u32 %v5907, 16
      %v6043 = vrot.slane %v6041, 1
      %v6044 = vsel %vm444, %v6039, %v6043
      %v6045 = vshrl.u32 %v5907, 16
      %v6047 = vor.u32 %v6045, %v6043
      %v6049 = vshll.u32 %v5908, 16
      %v6051 = vrot.slane %v6049, 1
      %v6052 = vsel %vm444, %v6047, %v6051
      %v6053 = vshrl.u32 %v5908, 16
      %v6055 = vor.u32 %v6053, %v6051
      %v6057 = vshll.u32 %v5912, 16
      %v6059 = vrot.slane %v6057, 1
      %v6060 = vsel %vm444, %v6055, %v6059
      %v6061 = vshrl.u32 %v5912, 16
      %v6063 = vor.u32 %v6061, %v6059
      %6064 = vrot.lane.b32.xlu0 %v5924, 32
      %v6065 = vpop.permute.xlu0 %6064
      %6066 = vrot.lane.b32.xlu0 %v5932, 32
      %v6067 = vpop.permute.xlu0 %6066
      %6068 = vrot.lane.b32.xlu0 %v5940, 32
      %v6069 = vpop.permute.xlu0 %6068
      %6070 = vrot.lane.b32.xlu0 %v5948, 32
      %v6071 = vpop.permute.xlu0 %6070
      %6072 = vrot.lane.b32.xlu0 %v5956, 32
      %v6073 = vpop.permute.xlu0 %6072
      %6074 = vrot.lane.b32.xlu0 %v5964, 32
      %v6075 = vpop.permute.xlu0 %6074
      %6076 = vrot.lane.b32.xlu0 %v5972, 32
      %v6077 = vpop.permute.xlu0 %6076
      %6078 = vrot.lane.b32.xlu0 %v5980, 32
      %v6079 = vpop.permute.xlu0 %6078
      %6080 = vrot.lane.b32.xlu0 %v5988, 32
      %v6081 = vpop.permute.xlu0 %6080
      %6082 = vrot.lane.b32.xlu0 %v5996, 32
      %v6083 = vpop.permute.xlu0 %6082
      %6084 = vrot.lane.b32.xlu0 %v6004, 32
      %v6085 = vpop.permute.xlu0 %6084
      %6086 = vrot.lane.b32.xlu0 %v6012, 32
      %v6087 = vpop.permute.xlu0 %6086
      %6088 = vrot.lane.b32.xlu0 %v6020, 32
      %v6089 = vpop.permute.xlu0 %6088
      %6090 = vrot.lane.b32.xlu0 %v6028, 32
      %v6091 = vpop.permute.xlu0 %6090
      %6092 = vrot.lane.b32.xlu0 %v6036, 32
      %v6093 = vpop.permute.xlu0 %6092
      %6094 = vrot.lane.b32.xlu0 %v6044, 32
      %v6095 = vpop.permute.xlu0 %6094
      %6096 = vrot.lane.b32.xlu0 %v6052, 32
      %v6097 = vpop.permute.xlu0 %6096
      %6098 = vrot.lane.b32.xlu0 %v6060, 32
      %v6099 = vpop.permute.xlu0 %6098
      %6100 = vrot.lane.b32.xlu0 %v6063, 32
      %v6101 = vpop.permute.xlu0 %6100
      %v6103 = vunpack.c.l.b16 %v5816
      %v6104 = vpack.c.b16 %v5855, %v6103
      %v6105 = vrot.slane %v6104, 1
      %v6106 = vrot.slane %v5892, 1
      %v6107 = vsel %vm632, %v6105, %v6106
      %v6108 = vrot.slane %v5893, 1
      %v6109 = vsel %vm632, %v6106, %v6108
      %v6110 = vrot.slane %v5894, 1
      %v6111 = vsel %vm632, %v6108, %v6110
      %v6112 = vrot.slane %v5895, 1
      %v6113 = vsel %vm632, %v6110, %v6112
      %v6114 = vrot.slane %v5896, 1
      %v6115 = vsel %vm632, %v6112, %v6114
      %v6116 = vrot.slane %v5897, 1
      %v6117 = vsel %vm632, %v6114, %v6116
      %v6118 = vrot.slane %v5898, 1
      %v6119 = vsel %vm632, %v6116, %v6118
      %v6120 = vrot.slane %v5899, 1
      %v6121 = vsel %vm632, %v6118, %v6120
      %v6122 = vrot.slane %v5900, 1
      %v6123 = vsel %vm632, %v6120, %v6122
      %v6124 = vrot.slane %v5901, 1
      %v6125 = vsel %vm632, %v6122, %v6124
      %v6126 = vrot.slane %v5902, 1
      %v6127 = vsel %vm632, %v6124, %v6126
      %v6128 = vrot.slane %v5903, 1
      %v6129 = vsel %vm632, %v6126, %v6128
      %v6130 = vrot.slane %v5904, 1
      %v6131 = vsel %vm632, %v6128, %v6130
      %v6132 = vrot.slane %v5905, 1
      %v6133 = vsel %vm632, %v6130, %v6132
      %v6134 = vrot.slane %v5906, 1
      %v6135 = vsel %vm632, %v6132, %v6134
      %v6136 = vrot.slane %v5907, 1
      %v6137 = vsel %vm632, %v6134, %v6136
      %v6138 = vrot.slane %v5908, 1
      %v6139 = vsel %vm632, %v6136, %v6138
      %v6140 = vrot.slane %v5912, 1
      %v6141 = vsel %vm632, %v6138, %v6140
      %6142 = vrot.lane.b32.xlu0 %v6107, 64
      %v6143 = vpop.permute.xlu0 %6142
      %6144 = vrot.lane.b32.xlu0 %v6109, 64
      %v6145 = vpop.permute.xlu0 %6144
      %6146 = vrot.lane.b32.xlu0 %v6111, 64
      %v6147 = vpop.permute.xlu0 %6146
      %6148 = vrot.lane.b32.xlu0 %v6113, 64
      %v6149 = vpop.permute.xlu0 %6148
      %6150 = vrot.lane.b32.xlu0 %v6115, 64
      %v6151 = vpop.permute.xlu0 %6150
      %6152 = vrot.lane.b32.xlu0 %v6117, 64
      %v6153 = vpop.permute.xlu0 %6152
      %6154 = vrot.lane.b32.xlu0 %v6119, 64
      %v6155 = vpop.permute.xlu0 %6154
      %6156 = vrot.lane.b32.xlu0 %v6121, 64
      %v6157 = vpop.permute.xlu0 %6156
      %6158 = vrot.lane.b32.xlu0 %v6123, 64
      %v6159 = vpop.permute.xlu0 %6158
      %6160 = vrot.lane.b32.xlu0 %v6125, 64
      %v6161 = vpop.permute.xlu0 %6160
      %6162 = vrot.lane.b32.xlu0 %v6127, 64
      %v6163 = vpop.permute.xlu0 %6162
      %6164 = vrot.lane.b32.xlu0 %v6129, 64
      %v6165 = vpop.permute.xlu0 %6164
      %6166 = vrot.lane.b32.xlu0 %v6131, 64
      %v6167 = vpop.permute.xlu0 %6166
      %6168 = vrot.lane.b32.xlu0 %v6133, 64
      %v6169 = vpop.permute.xlu0 %6168
      %6170 = vrot.lane.b32.xlu0 %v6135, 64
      %v6171 = vpop.permute.xlu0 %6170
      %6172 = vrot.lane.b32.xlu0 %v6137, 64
      %v6173 = vpop.permute.xlu0 %6172
      %6174 = vrot.lane.b32.xlu0 %v6139, 64
      %v6175 = vpop.permute.xlu0 %6174
      %6176 = vrot.lane.b32.xlu0 %v6141, 64
      %v6177 = vpop.permute.xlu0 %6176
      %6178 = vrot.lane.b32.xlu0 %v6140, 64
      %v6179 = vpop.permute.xlu0 %6178
      %v6181 = vsel %vm4268, %v5891, %v6065
      %v6183 = vsel %vm4268, %v5892, %v6067
      %v6185 = vsel %vm4268, %v5893, %v6069
      %v6187 = vsel %vm4268, %v5894, %v6071
      %v6189 = vsel %vm4268, %v5895, %v6073
      %v6191 = vsel %vm4268, %v5896, %v6075
      %v6193 = vsel %vm4268, %v5897, %v6077
      %v6195 = vsel %vm4268, %v5898, %v6079
      %v6197 = vsel %vm4268, %v5899, %v6081
      %v6199 = vsel %vm4268, %v5900, %v6083
      %v6201 = vsel %vm4268, %v5901, %v6085
      %v6203 = vsel %vm4268, %v5902, %v6087
      %v6205 = vsel %vm4268, %v5903, %v6089
      %v6207 = vsel %vm4268, %v5904, %v6091
      %v6209 = vsel %vm4268, %v5905, %v6093
      %v6211 = vsel %vm4268, %v5906, %v6095
      %v6213 = vsel %vm4268, %v5907, %v6097
      %v6215 = vsel %vm4268, %v5908, %v6099
      %v6218 = vsel %vm4268, %v5909, %v6101
      %v6220 = vsel %vm4305, %v6181, %v6143
      %v6222 = vsel %vm4305, %v6183, %v6145
      %v6224 = vsel %vm4305, %v6185, %v6147
      %v6226 = vsel %vm4305, %v6187, %v6149
      %v6228 = vsel %vm4305, %v6189, %v6151
      %v6230 = vsel %vm4305, %v6191, %v6153
      %v6232 = vsel %vm4305, %v6193, %v6155
      %v6234 = vsel %vm4305, %v6195, %v6157
      %v6236 = vsel %vm4305, %v6197, %v6159
      %v6238 = vsel %vm4305, %v6199, %v6161
      %v6240 = vsel %vm4305, %v6201, %v6163
      %v6242 = vsel %vm4305, %v6203, %v6165
      %v6244 = vsel %vm4305, %v6205, %v6167
      %v6246 = vsel %vm4305, %v6207, %v6169
      %v6248 = vsel %vm4305, %v6209, %v6171
      %v6250 = vsel %vm4305, %v6211, %v6173
      %v6252 = vsel %vm4305, %v6213, %v6175
      %v6254 = vsel %vm4305, %v6215, %v6177
      %v6256 = vsel %vm4305, %v6218, %v6179
      %s6257 = scalar_lea.vmem %s5, 96
      %v6258 = vld [vmem:[%s6257] sm:$0xf]
      %v6259 = vld [vmem:[%s6257 + $0x4] sm:$0xf]
      %v6260 = vld [vmem:[%s6257 + $0x8] sm:$0xf]
      %v6261 = vld [vmem:[%s6257 + $0xc] sm:$0xf]
      %v6262 = vld [vmem:[%s6257 + $0x10] sm:$0xf]
      %v6263 = vld [vmem:[%s6257 + $0x14] sm:$0xf]
      %v6264 = vld [vmem:[%s6257 + $0x18] sm:$0xf]
      %v6265 = vld [vmem:[%s6257 + $0x1c] sm:$0xf]
      %v6266 = vld [vmem:[%s6257 + $0x20] sm:$0xf]
      %v6267 = vld [vmem:[%s6257 + $0x24] sm:$0xf]
      %v6268 = vld [vmem:[%s6257 + $0x28] sm:$0xf]
      %v6269 = vld [vmem:[%s6257 + $0x2c] sm:$0xf]
      %v6289 = vrot.slane %v6220, 2
      %v6290 = vrot.slane %v6222, 2
      %v6291 = vsel %vm2102, %v6289, %v6290
      %v6292 = vrot.slane %v6224, 2
      %v6293 = vsel %vm2102, %v6290, %v6292
      %v6294 = vrot.slane %v6226, 2
      %v6295 = vsel %vm2102, %v6292, %v6294
      %v6296 = vrot.slane %v6228, 2
      %v6297 = vsel %vm2102, %v6294, %v6296
      %v6298 = vrot.slane %v6230, 2
      %v6299 = vsel %vm2102, %v6296, %v6298
      %v6300 = vrot.slane %v6232, 2
      %v6301 = vsel %vm2102, %v6298, %v6300
      %v6302 = vrot.slane %v6234, 2
      %v6303 = vsel %vm2102, %v6300, %v6302
      %v6304 = vrot.slane %v6236, 2
      %v6305 = vsel %vm2102, %v6302, %v6304
      %v6306 = vrot.slane %v6238, 2
      %v6307 = vsel %vm2102, %v6304, %v6306
      %v6308 = vrot.slane %v6240, 2
      %v6309 = vsel %vm2102, %v6306, %v6308
      %v6310 = vrot.slane %v6242, 2
      %v6311 = vsel %vm2102, %v6308, %v6310
      %v6312 = vrot.slane %v6244, 2
      %v6313 = vsel %vm2102, %v6310, %v6312
      %v6314 = vrot.slane %v6246, 2
      %v6315 = vsel %vm2102, %v6312, %v6314
      %v6316 = vrot.slane %v6248, 2
      %v6317 = vsel %vm2102, %v6314, %v6316
      %v6318 = vrot.slane %v6250, 2
      %v6319 = vsel %vm2102, %v6316, %v6318
      %v6320 = vrot.slane %v6252, 2
      %v6321 = vsel %vm2102, %v6318, %v6320
      %v6322 = vrot.slane %v6254, 2
      %v6323 = vsel %vm2102, %v6320, %v6322
      %v6324 = vrot.slane %v6256, 2
      %v6325 = vsel %vm2102, %v6322, %v6324
      %v6338 = vunpack.c.l.b16 %v6258
      %v6339 = vunpack.c.l.b16 %v6259
      %v6340 = vunpack.c.l.b16 %v6260
      %v6341 = vunpack.c.l.b16 %v6261
      %v6342 = vunpack.c.l.b16 %v6262
      %v6343 = vunpack.c.l.b16 %v6263
      %v6344 = vunpack.c.l.b16 %v6264
      %v6345 = vunpack.c.l.b16 %v6265
      %v6346 = vunpack.c.l.b16 %v6266
      %v6347 = vunpack.c.l.b16 %v6267
      %v6348 = vunpack.c.l.b16 %v6268
      %v6349 = vunpack.c.l.b16 %v6269
      %v6350 = vpack.c.b16 %v6339, %v6338
      %v6351 = vpack.c.b16 %v6341, %v6340
      %v6352 = vpack.c.b16 %v6343, %v6342
      %v6353 = vpack.c.b16 %v6345, %v6344
      %v6354 = vpack.c.b16 %v6347, %v6346
      %v6355 = vpack.c.b16 %v6349, %v6348
      %v6363 = vsel %vm743, %v6291, 0
      %v6366 = vsel %vm743, %v6293, 0
      %v6369 = vsel %vm743, %v6295, 0
      %v6372 = vsel %vm743, %v6297, 0
      %v6375 = vsel %vm743, %v6299, 0
      %v6378 = vsel %vm743, %v6301, 0
      %v6381 = vsel %vm743, %v6303, 0
      %v6384 = vsel %vm743, %v6305, 0
      %v6387 = vsel %vm743, %v6307, 0
      %v6390 = vsel %vm743, %v6309, 0
      %v6393 = vsel %vm743, %v6311, 0
      %v6396 = vsel %vm743, %v6313, 0
      %v6399 = vsel %vm743, %v6315, 0
      %v6402 = vsel %vm743, %v6317, 0
      %v6405 = vsel %vm743, %v6319, 0
      %v6408 = vsel %vm743, %v6321, 0
      %v6411 = vsel %vm743, %v6323, 0
      %v6414 = vsel %vm743, %v6325, 0
      %6416 = vmatprep.subr.bf16.mxu0 0
      %6417 = vmatpush1.bf16.msra.mxu0 %v6350
      %6418 = vmatprep.subr.bf16.mxu0 0
      %6419 = vmatpush1.bf16.msra.mxu0 %v6351
      %6420 = vmatprep.subr.bf16.mxu0 0
      %6421 = vmatpush1.bf16.msra.mxu0 %v6352
      %6422 = vmatprep.subr.bf16.mxu0 0
      %6423 = vmatpush1.bf16.msra.mxu0 %v6353
      %6424 = vmatprep.subr.bf16.mxu0 0
      %6425 = vmatpush1.bf16.msra.mxu0 %v6354
      %6426 = vmatprep.subr.bf16.mxu0 0
      %6427 = vmatpush1.bf16.msra.mxu0 %v6355
      %6428 = vmatprep.subr.bf16.mxu0 0
      %6429 = vmatpush1.bf16.msra.mxu0 0
      %6430 = vmatprep.subr.bf16.mxu0 0
      %6431 = vmatpush1.bf16.msra.mxu0 0
      %6432 = vmatprep.subr.bf16.mxu0 0
      %6433 = vmatpush1.bf16.msra.mxu0 0
      %6434 = vmatprep.subr.bf16.mxu0 0
      %6435 = vmatpush1.bf16.msra.mxu0 0
      %6436 = vmatprep.subr.bf16.mxu0 0
      %6437 = vmatpush1.bf16.msra.mxu0 0
      %6438 = vmatprep.subr.bf16.mxu0 0
      %6439 = vmatpush1.bf16.msra.mxu0 0
      %6440 = vmatprep.subr.bf16.mxu0 0
      %6441 = vmatpush1.bf16.msra.mxu0 0
      %6442 = vmatprep.subr.bf16.mxu0 0
      %6443 = vmatpush1.bf16.msra.mxu0 0
      %6444 = vmatprep.subr.bf16.mxu0 0
      %6445 = vmatpush1.bf16.msra.mxu0 0
      %6446 = vmatprep.subr.bf16.mxu0 0
      %6447 = vmatpush1.bf16.msra.mxu0 0
      %6448 = vmatprep.mubr.bf16.mxu0 0
      %6449 = vmatmul.mubr.bf16.gmra.mrb[0].mxu0 %v6363
      %v6450 = vpop.f32.mrb[0].mxu0
      %v6451 = vadd.f32 0.0, %v6450
      %v6452 = vpop.f32.mrb[0].mxu0
      %v6453 = vpop.f32.mrb[0].mxu0
      %v6454 = vadd.f32 0.0, %v6453
      %v6455 = vpop.f32.mrb[0].mxu0
      %6456 = vmatprep.mubr.bf16.mxu0 0
      %6457 = vmatmul.mubr.bf16.gmra.mrb[0].mxu0 %v6366
      %v6458 = vpop.f32.mrb[0].mxu0
      %v6459 = vadd.f32 0.0, %v6458
      %v6460 = vpop.f32.mrb[0].mxu0
      %v6461 = vpop.f32.mrb[0].mxu0
      %v6462 = vadd.f32 0.0, %v6461
      %v6463 = vpop.f32.mrb[0].mxu0
      %6464 = vmatprep.mubr.bf16.mxu0 0
      %6465 = vmatmul.mubr.bf16.gmra.mrb[0].mxu0 %v6369
      %v6466 = vpop.f32.mrb[0].mxu0
      %v6467 = vadd.f32 0.0, %v6466
      %v6468 = vpop.f32.mrb[0].mxu0
      %v6469 = vpop.f32.mrb[0].mxu0
      %v6470 = vadd.f32 0.0, %v6469
      %v6471 = vpop.f32.mrb[0].mxu0
      %6472 = vmatprep.mubr.bf16.mxu0 0
      %6473 = vmatmul.mubr.bf16.gmra.mrb[0].mxu0 %v6372
      %v6474 = vpop.f32.mrb[0].mxu0
      %v6475 = vadd.f32 0.0, %v6474
      %v6476 = vpop.f32.mrb[0].mxu0
      %v6477 = vpop.f32.mrb[0].mxu0
      %v6478 = vadd.f32 0.0, %v6477
      %v6479 = vpop.f32.mrb[0].mxu0
      %6480 = vmatprep.mubr.bf16.mxu0 0
      %6481 = vmatmul.mubr.bf16.gmra.mrb[0].mxu0 %v6375
      %v6482 = vpop.f32.mrb[0].mxu0
      %v6483 = vadd.f32 0.0, %v6482
      %v6484 = vpop.f32.mrb[0].mxu0
      %v6485 = vpop.f32.mrb[0].mxu0
      %v6486 = vadd.f32 0.0, %v6485
      %v6487 = vpop.f32.mrb[0].mxu0
      %6488 = vmatprep.mubr.bf16.mxu0 0
      %6489 = vmatmul.mubr.bf16.gmra.mrb[0].mxu0 %v6378
      %v6490 = vpop.f32.mrb[0].mxu0
      %v6491 = vadd.f32 0.0, %v6490
      %v6492 = vpop.f32.mrb[0].mxu0
      %v6493 = vpop.f32.mrb[0].mxu0
      %v6494 = vadd.f32 0.0, %v6493
      %v6495 = vpop.f32.mrb[0].mxu0
      %6496 = vmatprep.mubr.bf16.mxu0 0
      %6497 = vmatmul.mubr.bf16.gmra.mrb[0].mxu0 %v6381
      %v6498 = vpop.f32.mrb[0].mxu0
      %v6499 = vadd.f32 0.0, %v6498
      %v6500 = vpop.f32.mrb[0].mxu0
      %v6501 = vpop.f32.mrb[0].mxu0
      %v6502 = vadd.f32 0.0, %v6501
      %v6503 = vpop.f32.mrb[0].mxu0
      %6504 = vmatprep.mubr.bf16.mxu0 0
      %6505 = vmatmul.mubr.bf16.gmra.mrb[0].mxu0 %v6384
      %v6506 = vpop.f32.mrb[0].mxu0
      %v6507 = vadd.f32 0.0, %v6506
      %v6508 = vpop.f32.mrb[0].mxu0
      %v6509 = vpop.f32.mrb[0].mxu0
      %v6510 = vadd.f32 0.0, %v6509
      %v6511 = vpop.f32.mrb[0].mxu0
      %6512 = vmatprep.mubr.bf16.mxu0 0
      %6513 = vmatmul.mubr.bf16.gmra.mrb[0].mxu0 %v6387
      %v6514 = vpop.f32.mrb[0].mxu0
      %v6515 = vadd.f32 0.0, %v6514
      %v6516 = vpop.f32.mrb[0].mxu0
      %v6517 = vpop.f32.mrb[0].mxu0
      %v6518 = vadd.f32 0.0, %v6517
      %v6519 = vpop.f32.mrb[0].mxu0
      %6520 = vmatprep.mubr.bf16.mxu0 0
      %6521 = vmatmul.mubr.bf16.gmra.mrb[0].mxu0 %v6390
      %v6522 = vpop.f32.mrb[0].mxu0
      %v6523 = vadd.f32 0.0, %v6522
      %v6524 = vpop.f32.mrb[0].mxu0
      %v6525 = vpop.f32.mrb[0].mxu0
      %v6526 = vadd.f32 0.0, %v6525
      %v6527 = vpop.f32.mrb[0].mxu0
      %6528 = vmatprep.mubr.bf16.mxu0 0
      %6529 = vmatmul.mubr.bf16.gmra.mrb[0].mxu0 %v6393
      %v6530 = vpop.f32.mrb[0].mxu0
      %v6531 = vadd.f32 0.0, %v6530
      %v6532 = vpop.f32.mrb[0].mxu0
      %v6533 = vpop.f32.mrb[0].mxu0
      %v6534 = vadd.f32 0.0, %v6533
      %v6535 = vpop.f32.mrb[0].mxu0
      %6536 = vmatprep.mubr.bf16.mxu0 0
      %6537 = vmatmul.mubr.bf16.gmra.mrb[0].mxu0 %v6396
      %v6538 = vpop.f32.mrb[0].mxu0
      %v6539 = vadd.f32 0.0, %v6538
      %v6540 = vpop.f32.mrb[0].mxu0
      %v6541 = vpop.f32.mrb[0].mxu0
      %v6542 = vadd.f32 0.0, %v6541
      %v6543 = vpop.f32.mrb[0].mxu0
      %6544 = vmatprep.mubr.bf16.mxu0 0
      %6545 = vmatmul.mubr.bf16.gmra.mrb[0].mxu0 %v6399
      %v6546 = vpop.f32.mrb[0].mxu0
      %v6547 = vadd.f32 0.0, %v6546
      %v6548 = vpop.f32.mrb[0].mxu0
      %v6549 = vpop.f32.mrb[0].mxu0
      %v6550 = vadd.f32 0.0, %v6549
      %v6551 = vpop.f32.mrb[0].mxu0
      %6552 = vmatprep.mubr.bf16.mxu0 0
      %6553 = vmatmul.mubr.bf16.gmra.mrb[0].mxu0 %v6402
      %v6554 = vpop.f32.mrb[0].mxu0
      %v6555 = vadd.f32 0.0, %v6554
      %v6556 = vpop.f32.mrb[0].mxu0
      %v6557 = vpop.f32.mrb[0].mxu0
      %v6558 = vadd.f32 0.0, %v6557
      %v6559 = vpop.f32.mrb[0].mxu0
      %6560 = vmatprep.mubr.bf16.mxu0 0
      %6561 = vmatmul.mubr.bf16.gmra.mrb[0].mxu0 %v6405
      %v6562 = vpop.f32.mrb[0].mxu0
      %v6563 = vadd.f32 0.0, %v6562
      %v6564 = vpop.f32.mrb[0].mxu0
      %v6565 = vpop.f32.mrb[0].mxu0
      %v6566 = vadd.f32 0.0, %v6565
      %v6567 = vpop.f32.mrb[0].mxu0
      %6568 = vmatprep.mubr.bf16.mxu0 0
      %6569 = vmatmul.mubr.bf16.gmra.mrb[0].mxu0 %v6408
      %v6570 = vpop.f32.mrb[0].mxu0
      %v6571 = vadd.f32 0.0, %v6570
      %v6572 = vpop.f32.mrb[0].mxu0
      %v6573 = vpop.f32.mrb[0].mxu0
      %v6574 = vadd.f32 0.0, %v6573
      %v6575 = vpop.f32.mrb[0].mxu0
      %6576 = vmatprep.mubr.bf16.mxu0 0
      %6577 = vmatmul.mubr.bf16.gmra.mrb[0].mxu0 %v6411
      %v6578 = vpop.f32.mrb[0].mxu0
      %v6579 = vadd.f32 0.0, %v6578
      %v6580 = vpop.f32.mrb[0].mxu0
      %v6581 = vpop.f32.mrb[0].mxu0
      %v6582 = vadd.f32 0.0, %v6581
      %v6583 = vpop.f32.mrb[0].mxu0
      %6584 = vmatprep.mubr.bf16.mxu0 0
      %6585 = vmatmul.mubr.bf16.gmra.mrb[0].mxu0 %v6414
      %v6586 = vpop.f32.mrb[0].mxu0
      %v6587 = vadd.f32 0.0, %v6586
      %v6588 = vpop.f32.mrb[0].mxu0
      %v6589 = vpop.f32.mrb[0].mxu0
      %v6590 = vadd.f32 0.0, %v6589
      %v6591 = vpop.f32.mrb[0].mxu0
      %6592 = vdwg.mxu0
      %6629 = vrot.lane.b32.xlu0 %v6451, 64
      %v6630 = vpop.permute.xlu0 %6629
      %6631 = vrot.lane.b32.xlu0 %v6454, 64
      %v6632 = vpop.permute.xlu0 %6631
      %6633 = vrot.lane.b32.xlu0 %v6459, 64
      %v6634 = vpop.permute.xlu0 %6633
      %6635 = vrot.lane.b32.xlu0 %v6462, 64
      %v6636 = vpop.permute.xlu0 %6635
      %6637 = vrot.lane.b32.xlu0 %v6467, 64
      %v6638 = vpop.permute.xlu0 %6637
      %6639 = vrot.lane.b32.xlu0 %v6470, 64
      %v6640 = vpop.permute.xlu0 %6639
      %6641 = vrot.lane.b32.xlu0 %v6475, 64
      %v6642 = vpop.permute.xlu0 %6641
      %6643 = vrot.lane.b32.xlu0 %v6478, 64
      %v6644 = vpop.permute.xlu0 %6643
      %6645 = vrot.lane.b32.xlu0 %v6483, 64
      %v6646 = vpop.permute.xlu0 %6645
      %6647 = vrot.lane.b32.xlu0 %v6486, 64
      %v6648 = vpop.permute.xlu0 %6647
      %6649 = vrot.lane.b32.xlu0 %v6491, 64
      %v6650 = vpop.permute.xlu0 %6649
      %6651 = vrot.lane.b32.xlu0 %v6494, 64
      %v6652 = vpop.permute.xlu0 %6651
      %6653 = vrot.lane.b32.xlu0 %v6499, 64
      %v6654 = vpop.permute.xlu0 %6653
      %6655 = vrot.lane.b32.xlu0 %v6502, 64
      %v6656 = vpop.permute.xlu0 %6655
      %6657 = vrot.lane.b32.xlu0 %v6507, 64
      %v6658 = vpop.permute.xlu0 %6657
      %6659 = vrot.lane.b32.xlu0 %v6510, 64
      %v6660 = vpop.permute.xlu0 %6659
      %6661 = vrot.lane.b32.xlu0 %v6515, 64
      %v6662 = vpop.permute.xlu0 %6661
      %6663 = vrot.lane.b32.xlu0 %v6518, 64
      %v6664 = vpop.permute.xlu0 %6663
      %6665 = vrot.lane.b32.xlu0 %v6523, 64
      %v6666 = vpop.permute.xlu0 %6665
      %6667 = vrot.lane.b32.xlu0 %v6526, 64
      %v6668 = vpop.permute.xlu0 %6667
      %6669 = vrot.lane.b32.xlu0 %v6531, 64
      %v6670 = vpop.permute.xlu0 %6669
      %6671 = vrot.lane.b32.xlu0 %v6534, 64
      %v6672 = vpop.permute.xlu0 %6671
      %6673 = vrot.lane.b32.xlu0 %v6539, 64
      %v6674 = vpop.permute.xlu0 %6673
      %6675 = vrot.lane.b32.xlu0 %v6542, 64
      %v6676 = vpop.permute.xlu0 %6675
      %6677 = vrot.lane.b32.xlu0 %v6547, 64
      %v6678 = vpop.permute.xlu0 %6677
      %6679 = vrot.lane.b32.xlu0 %v6550, 64
      %v6680 = vpop.permute.xlu0 %6679
      %6681 = vrot.lane.b32.xlu0 %v6555, 64
      %v6682 = vpop.permute.xlu0 %6681
      %6683 = vrot.lane.b32.xlu0 %v6558, 64
      %v6684 = vpop.permute.xlu0 %6683
      %6685 = vrot.lane.b32.xlu0 %v6563, 64
      %v6686 = vpop.permute.xlu0 %6685
      %6687 = vrot.lane.b32.xlu0 %v6566, 64
      %v6688 = vpop.permute.xlu0 %6687
      %6689 = vrot.lane.b32.xlu0 %v6571, 64
      %v6690 = vpop.permute.xlu0 %6689
      %6691 = vrot.lane.b32.xlu0 %v6574, 64
      %v6692 = vpop.permute.xlu0 %6691
      %6693 = vrot.lane.b32.xlu0 %v6579, 64
      %v6694 = vpop.permute.xlu0 %6693
      %6695 = vrot.lane.b32.xlu0 %v6582, 64
      %v6696 = vpop.permute.xlu0 %6695
      %6697 = vrot.lane.b32.xlu0 %v6587, 64
      %v6698 = vpop.permute.xlu0 %6697
      %6699 = vrot.lane.b32.xlu0 %v6590, 64
      %v6700 = vpop.permute.xlu0 %6699
      %v6737 = vadd.f32 %v5742, %v6630
      %v6738 = vadd.f32 %v5743, %v6632
      %v6739 = vadd.f32 %v5744, %v6634
      %v6740 = vadd.f32 %v5745, %v6636
      %v6741 = vadd.f32 %v5746, %v6638
      %v6742 = vadd.f32 %v5747, %v6640
      %v6743 = vadd.f32 %v5748, %v6642
      %v6744 = vadd.f32 %v5749, %v6644
      %v6745 = vadd.f32 %v5750, %v6646
      %v6746 = vadd.f32 %v5751, %v6648
      %v6747 = vadd.f32 %v5752, %v6650
      %v6748 = vadd.f32 %v5753, %v6652
      %v6749 = vadd.f32 %v5754, %v6654
      %v6750 = vadd.f32 %v5755, %v6656
      %v6751 = vadd.f32 %v5756, %v6658
      %v6752 = vadd.f32 %v5757, %v6660
      %v6753 = vadd.f32 %v5758, %v6662
      %v6754 = vadd.f32 %v5759, %v6664
      %v6755 = vadd.f32 %v5760, %v6666
      %v6756 = vadd.f32 %v5761, %v6668
      %v6757 = vadd.f32 %v5762, %v6670
      %v6758 = vadd.f32 %v5763, %v6672
      %v6759 = vadd.f32 %v5764, %v6674
      %v6760 = vadd.f32 %v5765, %v6676
      %v6761 = vadd.f32 %v5766, %v6678
      %v6762 = vadd.f32 %v5767, %v6680
      %v6763 = vadd.f32 %v5768, %v6682
      %v6764 = vadd.f32 %v5769, %v6684
      %v6765 = vadd.f32 %v5770, %v6686
      %v6766 = vadd.f32 %v5771, %v6688
      %v6767 = vadd.f32 %v5772, %v6690
      %v6768 = vadd.f32 %v5773, %v6692
      %v6769 = vadd.f32 %v5774, %v6694
      %v6770 = vadd.f32 %v5775, %v6696
      %v6771 = vadd.f32 %v5776, %v6698
      %v6772 = vadd.f32 %v5777, %v6700
      %v6773 = vtanh.pop %v6737
      %v6774 = vtanh.pop %v6738
      %v6775 = vtanh.pop %v6739
      %v6776 = vtanh.pop %v6740
      %v6777 = vtanh.pop %v6741
      %v6778 = vtanh.pop %v6742
      %v6779 = vtanh.pop %v6743
      %v6780 = vtanh.pop %v6744
      %v6781 = vtanh.pop %v6745
      %v6782 = vtanh.pop %v6746
      %v6783 = vtanh.pop %v6747
      %v6784 = vtanh.pop %v6748
      %v6785 = vtanh.pop %v6749
      %v6786 = vtanh.pop %v6750
      %v6787 = vtanh.pop %v6751
      %v6788 = vtanh.pop %v6752
      %v6789 = vtanh.pop %v6753
      %v6790 = vtanh.pop %v6754
      %v6791 = vtanh.pop %v6755
      %v6792 = vtanh.pop %v6756
      %v6793 = vtanh.pop %v6757
      %v6794 = vtanh.pop %v6758
      %v6795 = vtanh.pop %v6759
      %v6796 = vtanh.pop %v6760
      %v6797 = vtanh.pop %v6761
      %v6798 = vtanh.pop %v6762
      %v6799 = vtanh.pop %v6763
      %v6800 = vtanh.pop %v6764
      %v6801 = vtanh.pop %v6765
      %v6802 = vtanh.pop %v6766
      %v6803 = vtanh.pop %v6767
      %v6804 = vtanh.pop %v6768
      %v6805 = vtanh.pop %v6769
      %v6806 = vtanh.pop %v6770
      %v6807 = vtanh.pop %v6771
      %v6808 = vtanh.pop %v6772
      %6809 = vrot.lane.b32.xlu0 %v3020, 64
      %v6810 = vpop.permute.xlu0 %6809
      %6811 = vrot.lane.b32.xlu0 %v3021, 64
      %v6812 = vpop.permute.xlu0 %6811
      %6813 = vrot.lane.b32.xlu0 %v3022, 64
      %v6814 = vpop.permute.xlu0 %6813
      %6815 = vrot.lane.b32.xlu0 %v3023, 64
      %v6816 = vpop.permute.xlu0 %6815
      %6817 = vrot.lane.b32.xlu0 %v3024, 64
      %v6818 = vpop.permute.xlu0 %6817
      %6819 = vrot.lane.b32.xlu0 %v3025, 64
      %v6820 = vpop.permute.xlu0 %6819
      %6821 = vrot.lane.b32.xlu0 %v3026, 64
      %v6822 = vpop.permute.xlu0 %6821
      %6823 = vrot.lane.b32.xlu0 %v3027, 64
      %v6824 = vpop.permute.xlu0 %6823
      %6825 = vrot.lane.b32.xlu0 %v3028, 64
      %v6826 = vpop.permute.xlu0 %6825
      %6827 = vrot.lane.b32.xlu0 %v3029, 64
      %v6828 = vpop.permute.xlu0 %6827
      %6829 = vrot.lane.b32.xlu0 %v3030, 64
      %v6830 = vpop.permute.xlu0 %6829
      %6831 = vrot.lane.b32.xlu0 %v3031, 64
      %v6832 = vpop.permute.xlu0 %6831
      %6833 = vrot.lane.b32.xlu0 %v3032, 64
      %v6834 = vpop.permute.xlu0 %6833
      %6835 = vrot.lane.b32.xlu0 %v3033, 64
      %v6836 = vpop.permute.xlu0 %6835
      %6837 = vrot.lane.b32.xlu0 %v3034, 64
      %v6838 = vpop.permute.xlu0 %6837
      %6839 = vrot.lane.b32.xlu0 %v3035, 64
      %v6840 = vpop.permute.xlu0 %6839
      %6841 = vrot.lane.b32.xlu0 %v3036, 64
      %v6842 = vpop.permute.xlu0 %6841
      %6843 = vrot.lane.b32.xlu0 %v3037, 64
      %v6844 = vpop.permute.xlu0 %6843
      %6845 = vrot.lane.b32.xlu0 %v3038, 64
      %v6846 = vpop.permute.xlu0 %6845
      %6847 = vrot.lane.b32.xlu0 %v3039, 64
      %v6848 = vpop.permute.xlu0 %6847
      %6849 = vrot.lane.b32.xlu0 %v3040, 64
      %v6850 = vpop.permute.xlu0 %6849
      %6851 = vrot.lane.b32.xlu0 %v3041, 64
      %v6852 = vpop.permute.xlu0 %6851
      %6853 = vrot.lane.b32.xlu0 %v3042, 64
      %v6854 = vpop.permute.xlu0 %6853
      %6855 = vrot.lane.b32.xlu0 %v3043, 64
      %v6856 = vpop.permute.xlu0 %6855
      %6857 = vrot.lane.b32.xlu0 %v3044, 64
      %v6858 = vpop.permute.xlu0 %6857
      %6859 = vrot.lane.b32.xlu0 %v3045, 64
      %v6860 = vpop.permute.xlu0 %6859
      %6861 = vrot.lane.b32.xlu0 %v3046, 64
      %v6862 = vpop.permute.xlu0 %6861
      %6863 = vrot.lane.b32.xlu0 %v3047, 64
      %v6864 = vpop.permute.xlu0 %6863
      %6865 = vrot.lane.b32.xlu0 %v3048, 64
      %v6866 = vpop.permute.xlu0 %6865
      %6867 = vrot.lane.b32.xlu0 %v3049, 64
      %v6868 = vpop.permute.xlu0 %6867
      %6869 = vrot.lane.b32.xlu0 %v3050, 64
      %v6870 = vpop.permute.xlu0 %6869
      %6871 = vrot.lane.b32.xlu0 %v3051, 64
      %v6872 = vpop.permute.xlu0 %6871
      %6873 = vrot.lane.b32.xlu0 %v3052, 64
      %v6874 = vpop.permute.xlu0 %6873
      %6875 = vrot.lane.b32.xlu0 %v3053, 64
      %v6876 = vpop.permute.xlu0 %6875
      %6877 = vrot.lane.b32.xlu0 %v3054, 64
      %v6878 = vpop.permute.xlu0 %6877
      %6879 = vrot.lane.b32.xlu0 %v3055, 64
      %v6880 = vpop.permute.xlu0 %6879
      %v6917 = vsub.f32 %v6773, %v6810
      %v6918 = vsub.f32 %v6774, %v6812
      %v6919 = vsub.f32 %v6775, %v6814
      %v6920 = vsub.f32 %v6776, %v6816
      %v6921 = vsub.f32 %v6777, %v6818
      %v6922 = vsub.f32 %v6778, %v6820
      %v6923 = vsub.f32 %v6779, %v6822
      %v6924 = vsub.f32 %v6780, %v6824
      %v6925 = vsub.f32 %v6781, %v6826
      %v6926 = vsub.f32 %v6782, %v6828
      %v6927 = vsub.f32 %v6783, %v6830
      %v6928 = vsub.f32 %v6784, %v6832
      %v6929 = vsub.f32 %v6785, %v6834
      %v6930 = vsub.f32 %v6786, %v6836
      %v6931 = vsub.f32 %v6787, %v6838
      %v6932 = vsub.f32 %v6788, %v6840
      %v6933 = vsub.f32 %v6789, %v6842
      %v6934 = vsub.f32 %v6790, %v6844
      %v6935 = vsub.f32 %v6791, %v6846
      %v6936 = vsub.f32 %v6792, %v6848
      %v6937 = vsub.f32 %v6793, %v6850
      %v6938 = vsub.f32 %v6794, %v6852
      %v6939 = vsub.f32 %v6795, %v6854
      %v6940 = vsub.f32 %v6796, %v6856
      %v6941 = vsub.f32 %v6797, %v6858
      %v6942 = vsub.f32 %v6798, %v6860
      %v6943 = vsub.f32 %v6799, %v6862
      %v6944 = vsub.f32 %v6800, %v6864
      %v6945 = vsub.f32 %v6801, %v6866
      %v6946 = vsub.f32 %v6802, %v6868
      %v6947 = vsub.f32 %v6803, %v6870
      %v6948 = vsub.f32 %v6804, %v6872
      %v6949 = vsub.f32 %v6805, %v6874
      %v6950 = vsub.f32 %v6806, %v6876
      %v6951 = vsub.f32 %v6807, %v6878
      %v6952 = vsub.f32 %v6808, %v6880
      %6989 = vrot.lane.b32.xlu0 %v6917, 64
      %v6990 = vpop.permute.xlu0 %6989
      %6991 = vrot.lane.b32.xlu0 %v6918, 64
      %v6992 = vpop.permute.xlu0 %6991
      %6993 = vrot.lane.b32.xlu0 %v6919, 64
      %v6994 = vpop.permute.xlu0 %6993
      %6995 = vrot.lane.b32.xlu0 %v6920, 64
      %v6996 = vpop.permute.xlu0 %6995
      %6997 = vrot.lane.b32.xlu0 %v6921, 64
      %v6998 = vpop.permute.xlu0 %6997
      %6999 = vrot.lane.b32.xlu0 %v6922, 64
      %v7000 = vpop.permute.xlu0 %6999
      %7001 = vrot.lane.b32.xlu0 %v6923, 64
      %v7002 = vpop.permute.xlu0 %7001
      %7003 = vrot.lane.b32.xlu0 %v6924, 64
      %v7004 = vpop.permute.xlu0 %7003
      %7005 = vrot.lane.b32.xlu0 %v6925, 64
      %v7006 = vpop.permute.xlu0 %7005
      %7007 = vrot.lane.b32.xlu0 %v6926, 64
      %v7008 = vpop.permute.xlu0 %7007
      %7009 = vrot.lane.b32.xlu0 %v6927, 64
      %v7010 = vpop.permute.xlu0 %7009
      %7011 = vrot.lane.b32.xlu0 %v6928, 64
      %v7012 = vpop.permute.xlu0 %7011
      %7013 = vrot.lane.b32.xlu0 %v6929, 64
      %v7014 = vpop.permute.xlu0 %7013
      %7015 = vrot.lane.b32.xlu0 %v6930, 64
      %v7016 = vpop.permute.xlu0 %7015
      %7017 = vrot.lane.b32.xlu0 %v6931, 64
      %v7018 = vpop.permute.xlu0 %7017
      %7019 = vrot.lane.b32.xlu0 %v6932, 64
      %v7020 = vpop.permute.xlu0 %7019
      %7021 = vrot.lane.b32.xlu0 %v6933, 64
      %v7022 = vpop.permute.xlu0 %7021
      %7023 = vrot.lane.b32.xlu0 %v6934, 64
      %v7024 = vpop.permute.xlu0 %7023
      %7025 = vrot.lane.b32.xlu0 %v6935, 64
      %v7026 = vpop.permute.xlu0 %7025
      %7027 = vrot.lane.b32.xlu0 %v6936, 64
      %v7028 = vpop.permute.xlu0 %7027
      %7029 = vrot.lane.b32.xlu0 %v6937, 64
      %v7030 = vpop.permute.xlu0 %7029
      %7031 = vrot.lane.b32.xlu0 %v6938, 64
      %v7032 = vpop.permute.xlu0 %7031
      %7033 = vrot.lane.b32.xlu0 %v6939, 64
      %v7034 = vpop.permute.xlu0 %7033
      %7035 = vrot.lane.b32.xlu0 %v6940, 64
      %v7036 = vpop.permute.xlu0 %7035
      %7037 = vrot.lane.b32.xlu0 %v6941, 64
      %v7038 = vpop.permute.xlu0 %7037
      %7039 = vrot.lane.b32.xlu0 %v6942, 64
      %v7040 = vpop.permute.xlu0 %7039
      %7041 = vrot.lane.b32.xlu0 %v6943, 64
      %v7042 = vpop.permute.xlu0 %7041
      %7043 = vrot.lane.b32.xlu0 %v6944, 64
      %v7044 = vpop.permute.xlu0 %7043
      %7045 = vrot.lane.b32.xlu0 %v6945, 64
      %v7046 = vpop.permute.xlu0 %7045
      %7047 = vrot.lane.b32.xlu0 %v6946, 64
      %v7048 = vpop.permute.xlu0 %7047
      %7049 = vrot.lane.b32.xlu0 %v6947, 64
      %v7050 = vpop.permute.xlu0 %7049
      %7051 = vrot.lane.b32.xlu0 %v6948, 64
      %v7052 = vpop.permute.xlu0 %7051
      %7053 = vrot.lane.b32.xlu0 %v6949, 64
      %v7054 = vpop.permute.xlu0 %7053
      %7055 = vrot.lane.b32.xlu0 %v6950, 64
      %v7056 = vpop.permute.xlu0 %7055
      %7057 = vrot.lane.b32.xlu0 %v6951, 64
      %v7058 = vpop.permute.xlu0 %7057
      %7059 = vrot.lane.b32.xlu0 %v6952, 64
      %v7060 = vpop.permute.xlu0 %7059
      %v7097 = vmul.f32 %v2733, %v6990
      %v7098 = vmul.f32 %v2735, %v6992
      %v7099 = vmul.f32 %v2737, %v6994
      %v7100 = vmul.f32 %v2739, %v6996
      %v7101 = vmul.f32 %v2741, %v6998
      %v7102 = vmul.f32 %v2743, %v7000
      %v7103 = vmul.f32 %v2745, %v7002
      %v7104 = vmul.f32 %v2747, %v7004
      %v7105 = vmul.f32 %v2749, %v7006
      %v7106 = vmul.f32 %v2751, %v7008
      %v7107 = vmul.f32 %v2753, %v7010
      %v7108 = vmul.f32 %v2755, %v7012
      %v7109 = vmul.f32 %v2757, %v7014
      %v7110 = vmul.f32 %v2759, %v7016
      %v7111 = vmul.f32 %v2761, %v7018
      %v7112 = vmul.f32 %v2763, %v7020
      %v7113 = vmul.f32 %v2765, %v7022
      %v7114 = vmul.f32 %v2767, %v7024
      %v7115 = vmul.f32 %v2769, %v7026
      %v7116 = vmul.f32 %v2771, %v7028
      %v7117 = vmul.f32 %v2773, %v7030
      %v7118 = vmul.f32 %v2775, %v7032
      %v7119 = vmul.f32 %v2777, %v7034
      %v7120 = vmul.f32 %v2779, %v7036
      %v7121 = vmul.f32 %v2781, %v7038
      %v7122 = vmul.f32 %v2783, %v7040
      %v7123 = vmul.f32 %v2785, %v7042
      %v7124 = vmul.f32 %v2787, %v7044
      %v7125 = vmul.f32 %v2789, %v7046
      %v7126 = vmul.f32 %v2791, %v7048
      %v7127 = vmul.f32 %v2793, %v7050
      %v7128 = vmul.f32 %v2795, %v7052
      %v7129 = vmul.f32 %v2797, %v7054
      %v7130 = vmul.f32 %v2799, %v7056
      %v7131 = vmul.f32 %v2801, %v7058
      %v7132 = vmul.f32 %v2803, %v7060
      %v7133 = vadd.f32 %v3020, %v7097
      %v7134 = vadd.f32 %v3021, %v7098
      %v7135 = vadd.f32 %v3022, %v7099
      %v7136 = vadd.f32 %v3023, %v7100
      %v7137 = vadd.f32 %v3024, %v7101
      %v7138 = vadd.f32 %v3025, %v7102
      %v7139 = vadd.f32 %v3026, %v7103
      %v7140 = vadd.f32 %v3027, %v7104
      %v7141 = vadd.f32 %v3028, %v7105
      %v7142 = vadd.f32 %v3029, %v7106
      %v7143 = vadd.f32 %v3030, %v7107
      %v7144 = vadd.f32 %v3031, %v7108
      %v7145 = vadd.f32 %v3032, %v7109
      %v7146 = vadd.f32 %v3033, %v7110
      %v7147 = vadd.f32 %v3034, %v7111
      %v7148 = vadd.f32 %v3035, %v7112
      %v7149 = vadd.f32 %v3036, %v7113
      %v7150 = vadd.f32 %v3037, %v7114
      %v7151 = vadd.f32 %v3038, %v7115
      %v7152 = vadd.f32 %v3039, %v7116
      %v7153 = vadd.f32 %v3040, %v7117
      %v7154 = vadd.f32 %v3041, %v7118
      %v7155 = vadd.f32 %v3042, %v7119
      %v7156 = vadd.f32 %v3043, %v7120
      %v7157 = vadd.f32 %v3044, %v7121
      %v7158 = vadd.f32 %v3045, %v7122
      %v7159 = vadd.f32 %v3046, %v7123
      %v7160 = vadd.f32 %v3047, %v7124
      %v7161 = vadd.f32 %v3048, %v7125
      %v7162 = vadd.f32 %v3049, %v7126
      %v7163 = vadd.f32 %v3050, %v7127
      %v7164 = vadd.f32 %v3051, %v7128
      %v7165 = vadd.f32 %v3052, %v7129
      %v7166 = vadd.f32 %v3053, %v7130
      %v7167 = vadd.f32 %v3054, %v7131
      %v7168 = vadd.f32 %v3055, %v7132
      %7169 = vst.msk [vmem:[%s311] sm:$0xff] %vm4268, %v7133
      %7170 = vst.msk [vmem:[%s311 + $0x8] sm:$0xff] %vm4268, %v7134
      %7171 = vst.msk [vmem:[%s311 + $0x10] sm:$0xff] %vm4268, %v7135
      %7172 = vst.msk [vmem:[%s311 + $0x18] sm:$0xff] %vm4268, %v7136
      %7173 = vst.msk [vmem:[%s311 + $0x20] sm:$0xff] %vm4268, %v7137
      %7174 = vst.msk [vmem:[%s311 + $0x28] sm:$0xff] %vm4268, %v7138
      %7175 = vst.msk [vmem:[%s311 + $0x30] sm:$0xff] %vm4268, %v7139
      %7176 = vst.msk [vmem:[%s311 + $0x38] sm:$0xff] %vm4268, %v7140
      %7177 = vst.msk [vmem:[%s311 + $0x40] sm:$0xff] %vm4268, %v7141
      %7178 = vst.msk [vmem:[%s311 + $0x48] sm:$0xff] %vm4268, %v7142
      %7179 = vst.msk [vmem:[%s311 + $0x50] sm:$0xff] %vm4268, %v7143
      %7180 = vst.msk [vmem:[%s311 + $0x58] sm:$0xff] %vm4268, %v7144
      %7181 = vst.msk [vmem:[%s311 + $0x60] sm:$0xff] %vm4268, %v7145
      %7182 = vst.msk [vmem:[%s311 + $0x68] sm:$0xff] %vm4268, %v7146
      %7183 = vst.msk [vmem:[%s311 + $0x70] sm:$0xff] %vm4268, %v7147
      %7184 = vst.msk [vmem:[%s311 + $0x78] sm:$0xff] %vm4268, %v7148
      %7185 = vst.msk [vmem:[%s311 + $0x80] sm:$0xff] %vm4268, %v7149
      %7186 = vst.msk [vmem:[%s311 + $0x88] sm:$0xff] %vm4268, %v7150
      %7187 = vst.msk [vmem:[%s311 + $0x90] sm:$0xff] %vm4268, %v7151
      %7188 = vst.msk [vmem:[%s311 + $0x98] sm:$0xff] %vm4268, %v7152
      %7189 = vst.msk [vmem:[%s311 + $0xa0] sm:$0xff] %vm4268, %v7153
      %7190 = vst.msk [vmem:[%s311 + $0xa8] sm:$0xff] %vm4268, %v7154
      %7191 = vst.msk [vmem:[%s311 + $0xb0] sm:$0xff] %vm4268, %v7155
      %7192 = vst.msk [vmem:[%s311 + $0xb8] sm:$0xff] %vm4268, %v7156
      %7193 = vst.msk [vmem:[%s311 + $0xc0] sm:$0xff] %vm4268, %v7157
      %7194 = vst.msk [vmem:[%s311 + $0xc8] sm:$0xff] %vm4268, %v7158
      %7195 = vst.msk [vmem:[%s311 + $0xd0] sm:$0xff] %vm4268, %v7159
      %7196 = vst.msk [vmem:[%s311 + $0xd8] sm:$0xff] %vm4268, %v7160
      %7197 = vst.msk [vmem:[%s311 + $0xe0] sm:$0xff] %vm4268, %v7161
      %7198 = vst.msk [vmem:[%s311 + $0xe8] sm:$0xff] %vm4268, %v7162
      %7199 = vst.msk [vmem:[%s311 + $0xf0] sm:$0xff] %vm4268, %v7163
      %7200 = vst.msk [vmem:[%s311 + $0xf8] sm:$0xff] %vm4268, %v7164
      %7201 = vst.msk [vmem:[%s311 + $0x100] sm:$0xff] %vm4268, %v7165
      %7202 = vst.msk [vmem:[%s311 + $0x108] sm:$0xff] %vm4268, %v7166
      %7203 = vst.msk [vmem:[%s311 + $0x110] sm:$0xff] %vm4268, %v7167
      %7204 = vst.msk [vmem:[%s311 + $0x118] sm:$0xff] %vm4268, %v7168
      %p7205 = scmp.lt.s32.totalorder %s17, 1
      %s7206 = scalar_select %p7205, %s17, 1
      %s7207 = smul.addr %s7206, 36
      %s7208 = smul.addr %s7207, 8
      %s7209 = scalar_lea.vmem %s6, %s7208
      // Predicated region
      $region45: #{tpu_custom_call.1} parent=43 // pred_check
        %p7210 = pneg %p181
      $region46: #{tpu_custom_call.1} parent=43 // pred_check_branch
        %7212 = sbr.rel (%p7210) target = $region48
      $region47: #{tpu_custom_call.1} parent=43 // pred_region
        _
      $region48: #{tpu_custom_call.1} parent=43 // pred_fallthru
        _
    $region44: #{tpu_custom_call.1} parent=5 // pred_fallthru
      _
    %p7213 = scmp.le.s32.totalorder 2, %s12
    // Predicated region
    $region49: #{tpu_custom_call.1} parent=5 // pred_check
      %p7214 = pneg %p7213
    $region50: #{tpu_custom_call.1} parent=5 // pred_check_branch
      %7216 = sbr.rel (%p7214) target = $region52
    $region51: #{tpu_custom_call.1} parent=5 // pred_region
      %s7217 = ssub.s32 %s12, 2
      // Predicated region
      $region53: #{tpu_custom_call.1} parent=51 // pred_check
        %p7218 = pneg %p187
      $region54: #{tpu_custom_call.1} parent=51 // pred_check_branch
        %7220 = sbr.rel (%p7218) target = $region56
      $region55: #{tpu_custom_call.1} parent=51 // pred_region
        %p7221 = scmp.lt.s32.totalorder %s18, 1
        %s7222 = scalar_select %p7221, %s18, 1
        %s7223 = smul.addr %s7222, 36
        %s7224 = smul.addr %s7223, 8
        %s7225 = scalar_lea.vmem %s6, %s7224
      $region56: #{tpu_custom_call.1} parent=51 // pred_fallthru
        _
    $region52: #{tpu_custom_call.1} parent=5 // pred_fallthru
      _
  $region6: #{tpu_custom_call.1} parent=0 // loop_footer
    %s16 = sadd.s32 1, %s12
  $region7: #{tpu_custom_call.1} parent=0 // loop_footer_branch
    %11 = sbr.rel target = $region3
  $region8: #{tpu_custom_call.1} parent=0 // loop_exit
    _

</llo_original>
